<compile_context>
chip_gen: v7x
topology: tpu7x:2x2x1
jax: 0.10.0
libtpu: 0.0.40
codegen_flags: <defaults>
</compile_context>

<pallas_src>
import jax
import jax.numpy as jnp
from jax.experimental import pallas as pl
from jax.experimental.pallas import tpu as pltpu

EPS = 1e-5
NUM_CORES = 2                       # leading "parallel" grid axis (sharded across TCs on v7x)
VMEM_LIMIT_BYTES = 32 * 1024 * 1024
VMEM_BUDGET_BYTES = 24 * 1024 * 1024


# ----------------------------- helpers ---------------------------------------

def _round_up(x, m):
    return (x + m - 1) // m * m


def _pad2(a, rows, cols, dtype):
    out = jnp.zeros((rows, cols), dtype)
    return out.at[: a.shape[0], : a.shape[1]].set(a.astype(dtype))


def _choose_tile_n(n, in_p, hid_p, out_p, budget_bytes=VMEM_BUDGET_BYTES):
    """Largest per-core row tile (<=1024, multiple of 16) whose working set fits."""
    per_core = pl.cdiv(max(n, 1), NUM_CORES)
    tile = min(1024, _round_up(per_core, 16))

    def need(t):
        # double-buffered row tiles per pass (bf16 in/out, f32 final out)
        p1 = 2 * t * 2 * (in_p + hid_p)
        p2 = 2 * t * 2 * (hid_p + out_p)
        p3 = 2 * t * (2 * out_p + 4 * out_p)
        weights = 2 * (in_p * hid_p + hid_p * out_p)     # resident bf16 weights
        small = 4 * 16 * (hid_p + out_p)                 # stats / scale / shift
        return max(p1, p2, p3) + weights + small

    while tile > 16 and need(tile) > budget_bytes:
        tile = max(16, (tile // 2) // 16 * 16)
    return tile


def _fold_bn(s, q, gamma, beta, n, eps):
    """Per-core sum / sum-of-squares -> fused (scale, shift): BN(h) == h*scale + shift.

    Note: E[h^2] - mean^2 in f32 can lose precision for very large N / large means;
    fine for inference-style forward here (see TODO at bottom re: training use).
    """
    s = jnp.sum(s, axis=0)           # (NUM_CORES, 1, D) -> (1, D)
    q = jnp.sum(q, axis=0)
    mean = s / n
    var = jnp.maximum(q / n - mean * mean, 0.0)   # biased variance (BN training mode)
    inv = jax.lax.rsqrt(var + eps)
    scale = gamma * inv
    shift = beta - mean * scale
    return scale, shift


# ----------------------------- kernels ----------------------------------------

def _linear_stats_kernel(x_ref, w_ref, h_ref, sum_ref, ssq_ref):
    """h1 = x @ W1 ; accumulate per-core, per-feature sum / sum-of-squares.

    Padded x rows are exactly zero and there is no bias, so padded rows contribute
    nothing to the statistics -> no row mask needed in this pass.
    """
    @pl.when(pl.program_id(1) == 0)
    def _():
        sum_ref[...] = jnp.zeros_like(sum_ref)
        ssq_ref[...] = jnp.zeros_like(ssq_ref)

    h = jnp.dot(x_ref[...], w_ref[...], preferred_element_type=jnp.float32)
    h_ref[...] = h.astype(jnp.bfloat16)
    sum_ref[...] += jnp.sum(h, axis=0, keepdims=True)[None]
    ssq_ref[...] += jnp.sum(h * h, axis=0, keepdims=True)[None]


def _bn_relu_linear_stats_kernel(n_valid, tile_n, tiles_per_core):
    """a = ReLU(h1*scale1 + shift1); h2 = a @ W2; accumulate stats of h2.

    Row mask only runs on tiles that contain padded rows.
    """
    def kernel(h_ref, scale_ref, shift_ref, w_ref, o_ref, sum_ref, ssq_ref):
        c = pl.program_id(0)
        t = pl.program_id(1)

        @pl.when(t == 0)
        def _():
            sum_ref[...] = jnp.zeros_like(sum_ref)
            ssq_ref[...] = jnp.zeros_like(ssq_ref)

        a = jnp.maximum(
            h_ref[...].astype(jnp.float32) * scale_ref[...] + shift_ref[...], 0.0)
        h2 = jnp.dot(a.astype(jnp.bfloat16), w_ref[...],
                     preferred_element_type=jnp.float32)
        o_ref[...] = h2.astype(jnp.bfloat16)

        tile_start = (c * tiles_per_core + t) * tile_n
        has_pad = tile_start + tile_n > n_valid

        @pl.when(jnp.logical_not(has_pad))
        def _():
            sum_ref[...] += jnp.sum(h2, axis=0, keepdims=True)[None]
            ssq_ref[...] += jnp.sum(h2 * h2, axis=0, keepdims=True)[None]

        @pl.when(has_pad)
        def _():
            rows = tile_start + jax.lax.broadcasted_iota(jnp.int32, (tile_n, 1), 0)
            hm = jnp.where(rows < n_valid, h2, 0.0)
            sum_ref[...] += jnp.sum(hm, axis=0, keepdims=True)[None]
            ssq_ref[...] += jnp.sum(hm * hm, axis=0, keepdims=True)[None]

    return kernel


def _bn_relu_kernel(h_ref, scale_ref, shift_ref, o_ref):
    """Final normalize + ReLU (pure streaming, embarrassingly parallel over tiles)."""
    o_ref[...] = jnp.maximum(
        h_ref[...].astype(jnp.float32) * scale_ref[...] + shift_ref[...], 0.0)


# ----------------------------- wrapper ----------------------------------------

def prepare_params(params):
    """Pad weights / BN params once (hoisted out of the per-call path).

    Padded gamma/beta columns are 0, which keeps padded feature columns exactly
    zero through BN+ReLU. Biases b1/b2 are intentionally dropped: a bias added
    immediately before training-mode BatchNorm cancels in the mean subtraction.
    """
    in_dim, hid_dim = params["w1"].shape
    out_dim = params["w2"].shape[1]
    IN, HID, OUT = (_round_up(in_dim, 128), _round_up(hid_dim, 128),
                    _round_up(out_dim, 128))
    return {
        "w1": _pad2(params["w1"], IN, HID, jnp.bfloat16),
        "g1": _pad2(params["g1"], 1, HID, jnp.float32),
        "beta1": _pad2(params["beta1"], 1, HID, jnp.float32),
        "w2": _pad2(params["w2"], HID, OUT, jnp.bfloat16),
        "g2": _pad2(params["g2"], 1, OUT, jnp.float32),
        "beta2": _pad2(params["beta2"], 1, OUT, jnp.float32),
    }


def apply_node_func(x, pp, eps=EPS):
    """x: (N, in_dim) f32 node features; pp: prepare_params(...) output.

    Returns the padded (n_pad, OUT) f32 slab (caller slices [:N, :out_dim] if needed,
    avoiding an extra HBM pass inside the hot path).
    """
    N, in_dim = x.shape
    IN, HID = pp["w1"].shape
    OUT = pp["w2"].shape[1]

    tile_n = _choose_tile_n(N, IN, HID, OUT)
    tiles_per_core = pl.cdiv(max(N, 1), NUM_CORES * tile_n)
    n_pad = NUM_CORES * tiles_per_core * tile_n
    grid2 = (NUM_CORES, tiles_per_core)

    x_p = jnp.zeros((n_pad, IN), jnp.bfloat16).at[:N, :in_dim].set(
        x.astype(jnp.bfloat16))

    def row_spec(d):
        return pl.BlockSpec((tile_n, d), lambda c, t: (c * tiles_per_core + t, 0))

    def bcast_spec(d):
        return pl.BlockSpec((1, d), lambda c, t: (0, 0))

    def full_spec(a):
        return pl.BlockSpec(a.shape, lambda c, t: (0, 0))

    def core_stat_spec(d):
        return pl.BlockSpec((1, 1, d), lambda c, t: (c, 0, 0))

    params_stats = pltpu.CompilerParams(
        dimension_semantics=("parallel", "arbitrary"),
        vmem_limit_bytes=VMEM_LIMIT_BYTES)

    # ---- Pass 1: h1 = x @ W1, plus per-core BN1 statistics --------------------
    h1, s1, q1 = pl.pallas_call(
        _linear_stats_kernel,
        grid=grid2,
        in_specs=[row_spec(IN), full_spec(pp["w1"])],
        out_specs=(row_spec(HID), core_stat_spec(HID), core_stat_spec(HID)),
        out_shape=(jax.ShapeDtypeStruct((n_pad, HID), jnp.bfloat16),
                   jax.ShapeDtypeStruct((NUM_CORES, 1, HID), jnp.float32),
                   jax.ShapeDtypeStruct((NUM_CORES, 1, HID), jnp.float32)),
        compiler_params=params_stats,
    )(x_p, pp["w1"])

    scale1, shift1 = _fold_bn(s1, q1, pp["g1"], pp["beta1"], N, eps)

    # ---- Pass 2: BN1+ReLU, h2 = a @ W2, plus per-core BN2 statistics ----------
    h2, s2, q2 = pl.pallas_call(
        _bn_relu_linear_stats_kernel(N, tile_n, tiles_per_core),
        grid=grid2,
        in_specs=[row_spec(HID), bcast_spec(HID), bcast_spec(HID),
                  full_spec(pp["w2"])],
        out_specs=(row_spec(OUT), core_stat_spec(OUT), core_stat_spec(OUT)),
        out_shape=(jax.ShapeDtypeStruct((n_pad, OUT), jnp.bfloat16),
                   jax.ShapeDtypeStruct((NUM_CORES, 1, OUT), jnp.float32),
                   jax.ShapeDtypeStruct((NUM_CORES, 1, OUT), jnp.float32)),
        compiler_params=params_stats,
    )(h1, scale1, shift1, pp["w2"])

    scale2, shift2 = _fold_bn(s2, q2, pp["g2"], pp["beta2"], N, eps)

    # ---- Pass 3: BN2 + ReLU (ApplyNodeFunc's norm + act) -----------------------
    total_tiles = NUM_CORES * tiles_per_core
    y = pl.pallas_call(
        _bn_relu_kernel,
        grid=(total_tiles,),
        in_specs=[pl.BlockSpec((tile_n, OUT), lambda i: (i, 0)),
                  pl.BlockSpec((1, OUT), lambda i: (0, 0)),
                  pl.BlockSpec((1, OUT), lambda i: (0, 0))],
        out_specs=pl.BlockSpec((tile_n, OUT), lambda i: (i, 0)),
        out_shape=jax.ShapeDtypeStruct((n_pad, OUT), jnp.float32),
        compiler_params=pltpu.CompilerParams(
            dimension_semantics=("parallel",),
            vmem_limit_bytes=VMEM_LIMIT_BYTES),
    )(h2, scale2, shift2)

    return y


# ----------------------------- test harness -----------------------------------

def init_params(key, in_dim, hid_dim, out_dim):
    ks = jax.random.split(key, 8)
    return {
        "w1": jax.random.normal(ks[0], (in_dim, hid_dim), jnp.float32)
              * (1.0 / jnp.sqrt(in_dim)),
        "b1": 0.1 * jax.random.normal(ks[1], (1, hid_dim), jnp.float32),
        "g1": 1.0 + 0.1 * jax.random.normal(ks[2], (1, hid_dim), jnp.float32),
        "beta1": 0.1 * jax.random.normal(ks[3], (1, hid_dim), jnp.float32),
        "w2": jax.random.normal(ks[4], (hid_dim, out_dim), jnp.float32)
              * (1.0 / jnp.sqrt(hid_dim)),
        "b2": 0.1 * jax.random.normal(ks[5], (1, out_dim), jnp.float32),
        "g2": 1.0 + 0.1 * jax.random.normal(ks[6], (1, out_dim), jnp.float32),
        "beta2": 0.1 * jax.random.normal(ks[7], (1, out_dim), jnp.float32),
    }


def reference(x, p, eps=EPS):
    """Pure-JAX reference faithful to the PyTorch forward (includes biases and
    centered batch variance); bf16 matmul operands with f32 accumulation to
    match the kernel's dtype policy."""
    def bn_relu(h, g, b):
        mu = jnp.mean(h, axis=0, keepdims=True)
        var = jnp.mean((h - mu) ** 2, axis=0, keepdims=True)
        return jnp.maximum((h - mu) * jax.lax.rsqrt(var + eps) * g + b, 0.0)

    h = jnp.dot(x.astype(jnp.bfloat16), p["w1"].astype(jnp.bfloat16),
                preferred_element_type=jnp.float32) + p["b1"]
    h = bn_relu(h, p["g1"], p["beta1"])
    h = jnp.dot(h.astype(jnp.bfloat16), p["w2"].astype(jnp.bfloat16),
                preferred_element_type=jnp.float32) + p["b2"]
    return bn_relu(h, p["g2"], p["beta2"])


if __name__ == "__main__":
    key = jax.random.PRNGKey(0)
    k_x, k_p = jax.random.split(key)

    # Small but padding-exercising shapes: N=600 -> one row tile per "core" with
    # masked tail rows; feature dims 48/96/80 get padded to 128 lanes.
    N, in_dim, hid_dim, out_dim = 600, 48, 96, 80
    x = jax.random.normal(k_x, (N, in_dim), jnp.float32)
    params = init_params(k_p, in_dim, hid_dim, out_dim)

    padded_params = prepare_params(params)           # hoisted out of the hot path
    fwd = jax.jit(apply_node_func)
    y_pad = jax.block_until_ready(fwd(x, padded_params))
    out = y_pad[:N, :out_dim]                         # slab slice outside the jitted path

    ref = reference(x, params)
    assert out.shape == (N, out_dim)
    err = float(jnp.max(jnp.abs(out - ref)))
    assert jnp.allclose(out, ref, atol=2e-2, rtol=2e-2), err

    # TODO(synk): BatchNorm1d running_mean/running_var buffer updates (training-mode
    # side effect) are not part of the returned forward value and are not computed.
    print("KERNEL_OK")
</pallas_src>

<mosaic_0001>
module attributes {stable_mosaic.version = 11 : i64} {
  func.func @_linear_stats_kernel(%arg0: i32, %arg1: i32, %arg2: memref<304x128xbf16, #tpu.memory_space<vmem>>, %arg3: memref<128x128xbf16, #tpu.memory_space<vmem>>, %arg4: memref<304x128xbf16, #tpu.memory_space<vmem>>, %arg5: memref<1x1x128xf32, #tpu.memory_space<vmem>>, %arg6: memref<1x1x128xf32, #tpu.memory_space<vmem>>) attributes {dimension_semantics = [#tpu.dimension_semantics<parallel>, #tpu.dimension_semantics<arbitrary>], iteration_bounds = array<i64: 2, 1>, scalar_prefetch = 0 : i64, scratch_operands = 0 : i64, tpu.core_type = #tpu.core_type<tc>, window_params = [{transform_indices = @transform_0, window_bounds = array<i64: 304, 128>}, {pipeline_mode = #tpu.pipeline_mode<synchronous>, transform_indices = @transform_1, window_bounds = array<i64: 128, 128>}, {transform_indices = @transform_2, window_bounds = array<i64: 304, 128>}, {transform_indices = @transform_3, window_bounds = array<i64: 1, 1, 128>}, {transform_indices = @transform_4, window_bounds = array<i64: 1, 1, 128>}]} {
    %c0_i32 = arith.constant 0 : i32
    %0 = arith.cmpi eq, %arg1, %c0_i32 : i32
    %1 = arith.extui %0 : i1 to i32
    %c0_i32_0 = arith.constant 0 : i32
    %2 = arith.cmpi ne, %1, %c0_i32_0 : i32
    scf.if %2 {
      %cst_20 = arith.constant 0.000000e+00 : f32
      %21 = vector.broadcast %cst_20 : f32 to vector<1x1x128xf32>
      %c0_21 = arith.constant 0 : index
      %c0_22 = arith.constant 0 : index
      %c0_23 = arith.constant 0 : index
      %22 = vector.load %arg5[%c0_21, %c0_22, %c0_23] : memref<1x1x128xf32, #tpu.memory_space<vmem>>, vector<1x1x128xf32>
      tpu.vector_store %arg5[%c0_21, %c0_22, %c0_23], %21 {strides = array<i32>} : memref<1x1x128xf32, #tpu.memory_space<vmem>>, vector<1x1x128xf32>,
      %cst_24 = arith.constant 0.000000e+00 : f32
      %23 = vector.broadcast %cst_24 : f32 to vector<1x1x128xf32>
      %c0_25 = arith.constant 0 : index
      %c0_26 = arith.constant 0 : index
      %c0_27 = arith.constant 0 : index
      %24 = vector.load %arg6[%c0_25, %c0_26, %c0_27] : memref<1x1x128xf32, #tpu.memory_space<vmem>>, vector<1x1x128xf32>
      tpu.vector_store %arg6[%c0_25, %c0_26, %c0_27], %23 {strides = array<i32>} : memref<1x1x128xf32, #tpu.memory_space<vmem>>, vector<1x1x128xf32>,
    } else {
    }
    %c0 = arith.constant 0 : index
    %c0_1 = arith.constant 0 : index
    %3 = vector.load %arg2[%c0, %c0_1] : memref<304x128xbf16, #tpu.memory_space<vmem>>, vector<304x128xbf16>
    %c0_2 = arith.constant 0 : index
    %c0_3 = arith.constant 0 : index
    %4 = vector.load %arg3[%c0_2, %c0_3] : memref<128x128xbf16, #tpu.memory_space<vmem>>, vector<128x128xbf16>
    %cst = arith.constant dense<0.000000e+00> : vector<304x128xf32>
    %5 = tpu.matmul %3, %4, %cst {dimension_numbers = #tpu.dot_dimension_numbers<[1], [0], [0], [1], [0, 0, 1, 1], [], []>} : vector<304x128xbf16>, vector<128x128xbf16>, vector<304x128xf32> -> vector<304x128xf32>
    %6 = arith.truncf %5 : vector<304x128xf32> to vector<304x128xbf16>
    %c0_4 = arith.constant 0 : index
    %c0_5 = arith.constant 0 : index
    %7 = vector.load %arg4[%c0_4, %c0_5] : memref<304x128xbf16, #tpu.memory_space<vmem>>, vector<304x128xbf16>
    tpu.vector_store %arg4[%c0_4, %c0_5], %6 {strides = array<i32>} : memref<304x128xbf16, #tpu.memory_space<vmem>>, vector<304x128xbf16>,
    %c0_6 = arith.constant 0 : index
    %c0_7 = arith.constant 0 : index
    %c0_8 = arith.constant 0 : index
    %8 = vector.load %arg5[%c0_6, %c0_7, %c0_8] : memref<1x1x128xf32, #tpu.memory_space<vmem>>, vector<1x1x128xf32>
    %cst_9 = arith.constant dense<0.000000e+00> : vector<128xf32>
    %9 = vector.multi_reduction <add>, %5, %cst_9 [0] : vector<304x128xf32> to vector<128xf32>
    %10 = vector.shape_cast %9 : vector<128xf32> to vector<1x128xf32>
    %11 = vector.shape_cast %10 : vector<1x128xf32> to vector<1x1x128xf32>
    %12 = arith.addf %8, %11 : vector<1x1x128xf32>
    %c0_10 = arith.constant 0 : index
    %c0_11 = arith.constant 0 : index
    %c0_12 = arith.constant 0 : index
    %13 = vector.load %arg5[%c0_10, %c0_11, %c0_12] : memref<1x1x128xf32, #tpu.memory_space<vmem>>, vector<1x1x128xf32>
    tpu.vector_store %arg5[%c0_10, %c0_11, %c0_12], %12 {strides = array<i32>} : memref<1x1x128xf32, #tpu.memory_space<vmem>>, vector<1x1x128xf32>,
    %c0_13 = arith.constant 0 : index
    %c0_14 = arith.constant 0 : index
    %c0_15 = arith.constant 0 : index
    %14 = vector.load %arg6[%c0_13, %c0_14, %c0_15] : memref<1x1x128xf32, #tpu.memory_space<vmem>>, vector<1x1x128xf32>
    %15 = arith.mulf %5, %5 : vector<304x128xf32>
    %cst_16 = arith.constant dense<0.000000e+00> : vector<128xf32>
    %16 = vector.multi_reduction <add>, %15, %cst_16 [0] : vector<304x128xf32> to vector<128xf32>
    %17 = vector.shape_cast %16 : vector<128xf32> to vector<1x128xf32>
    %18 = vector.shape_cast %17 : vector<1x128xf32> to vector<1x1x128xf32>
    %19 = arith.addf %14, %18 : vector<1x1x128xf32>
    %c0_17 = arith.constant 0 : index
    %c0_18 = arith.constant 0 : index
    %c0_19 = arith.constant 0 : index
    %20 = vector.load %arg6[%c0_17, %c0_18, %c0_19] : memref<1x1x128xf32, #tpu.memory_space<vmem>>, vector<1x1x128xf32>
    tpu.vector_store %arg6[%c0_17, %c0_18, %c0_19], %19 {strides = array<i32>} : memref<1x1x128xf32, #tpu.memory_space<vmem>>, vector<1x1x128xf32>,
    return
  }
  func.func @transform_0(%arg0: i32, %arg1: i32) -> (i32, i32) {
    %c1_i32 = arith.constant 1 : i32
    %0 = arith.muli %arg0, %c1_i32 : i32
    %1 = arith.addi %0, %arg1 : i32
    %c0_i32 = arith.constant 0 : i32
    %c0_i32_0 = arith.constant 0 : i32
    return %1, %c0_i32 : i32, i32
  }
  func.func @transform_1(%arg0: i32, %arg1: i32) -> (i32, i32) {
    %c0_i32 = arith.constant 0 : i32
    %c0_i32_0 = arith.constant 0 : i32
    %c0_i32_1 = arith.constant 0 : i32
    return %c0_i32, %c0_i32_0 : i32, i32
  }
  func.func @transform_2(%arg0: i32, %arg1: i32) -> (i32, i32) {
    %c1_i32 = arith.constant 1 : i32
    %0 = arith.muli %arg0, %c1_i32 : i32
    %1 = arith.addi %0, %arg1 : i32
    %c0_i32 = arith.constant 0 : i32
    %c0_i32_0 = arith.constant 0 : i32
    return %1, %c0_i32 : i32, i32
  }
  func.func @transform_3(%arg0: i32, %arg1: i32) -> (i32, i32, i32) {
    %c0_i32 = arith.constant 0 : i32
    %c0_i32_0 = arith.constant 0 : i32
    %c0_i32_1 = arith.constant 0 : i32
    return %arg0, %c0_i32, %c0_i32_0 : i32, i32, i32
  }
  func.func @transform_4(%arg0: i32, %arg1: i32) -> (i32, i32, i32) {
    %c0_i32 = arith.constant 0 : i32
    %c0_i32_0 = arith.constant 0 : i32
    %c0_i32_1 = arith.constant 0 : i32
    return %arg0, %c0_i32, %c0_i32_0 : i32, i32, i32
  }
}

module attributes {stable_mosaic.version = 11 : i64} {
  func.func @_bn_relu_kernel(%arg0: i32, %arg1: memref<304x128xbf16, #tpu.memory_space<vmem>>, %arg2: memref<1x128xf32, #tpu.memory_space<vmem>>, %arg3: memref<1x128xf32, #tpu.memory_space<vmem>>, %arg4: memref<304x128xf32, #tpu.memory_space<vmem>>) attributes {dimension_semantics = [#tpu.dimension_semantics<parallel>], iteration_bounds = array<i64: 2>, scalar_prefetch = 0 : i64, scratch_operands = 0 : i64, tpu.core_type = #tpu.core_type<tc>, window_params = [{transform_indices = @transform_0, window_bounds = array<i64: 304, 128>}, {pipeline_mode = #tpu.pipeline_mode<synchronous>, transform_indices = @transform_1, window_bounds = array<i64: 1, 128>}, {pipeline_mode = #tpu.pipeline_mode<synchronous>, transform_indices = @transform_2, window_bounds = array<i64: 1, 128>}, {transform_indices = @transform_3, window_bounds = array<i64: 304, 128>}]} {
    %c0 = arith.constant 0 : index
    %c0_0 = arith.constant 0 : index
    %0 = vector.load %arg1[%c0, %c0_0] : memref<304x128xbf16, #tpu.memory_space<vmem>>, vector<304x128xbf16>
    %1 = arith.extf %0 : vector<304x128xbf16> to vector<304x128xf32>
    %c0_1 = arith.constant 0 : index
    %c0_2 = arith.constant 0 : index
    %2 = vector.load %arg2[%c0_1, %c0_2] : memref<1x128xf32, #tpu.memory_space<vmem>>, vector<1x128xf32>
    %3 = vector.broadcast %2 : vector<1x128xf32> to vector<304x128xf32>
    %4 = arith.mulf %1, %3 : vector<304x128xf32>
    %c0_3 = arith.constant 0 : index
    %c0_4 = arith.constant 0 : index
    %5 = vector.load %arg3[%c0_3, %c0_4] : memref<1x128xf32, #tpu.memory_space<vmem>>, vector<1x128xf32>
    %6 = vector.broadcast %5 : vector<1x128xf32> to vector<304x128xf32>
    %7 = arith.addf %4, %6 : vector<304x128xf32>
    %cst = arith.constant 0.000000e+00 : f32
    %8 = vector.broadcast %cst : f32 to vector<304x128xf32>
    %9 = arith.maximumf %7, %8 : vector<304x128xf32>
    %c0_5 = arith.constant 0 : index
    %c0_6 = arith.constant 0 : index
    %10 = vector.load %arg4[%c0_5, %c0_6] : memref<304x128xf32, #tpu.memory_space<vmem>>, vector<304x128xf32>
    tpu.vector_store %arg4[%c0_5, %c0_6], %9 {strides = array<i32>} : memref<304x128xf32, #tpu.memory_space<vmem>>, vector<304x128xf32>,
    return
  }
  func.func @transform_0(%arg0: i32) -> (i32, i32) {
    %c0_i32 = arith.constant 0 : i32
    %c0_i32_0 = arith.constant 0 : i32
    return %arg0, %c0_i32 : i32, i32
  }
  func.func @transform_1(%arg0: i32) -> (i32, i32) {
    %c0_i32 = arith.constant 0 : i32
    %c0_i32_0 = arith.constant 0 : i32
    %c0_i32_1 = arith.constant 0 : i32
    return %c0_i32, %c0_i32_0 : i32, i32
  }
  func.func @transform_2(%arg0: i32) -> (i32, i32) {
    %c0_i32 = arith.constant 0 : i32
    %c0_i32_0 = arith.constant 0 : i32
    %c0_i32_1 = arith.constant 0 : i32
    return %c0_i32, %c0_i32_0 : i32, i32
  }
  func.func @transform_3(%arg0: i32) -> (i32, i32) {
    %c0_i32 = arith.constant 0 : i32
    %c0_i32_0 = arith.constant 0 : i32
    return %arg0, %c0_i32 : i32, i32
  }
}

module attributes {stable_mosaic.version = 11 : i64} {
  func.func @kernel(%arg0: i32, %arg1: i32, %arg2: memref<304x128xbf16, #tpu.memory_space<vmem>>, %arg3: memref<1x128xf32, #tpu.memory_space<vmem>>, %arg4: memref<1x128xf32, #tpu.memory_space<vmem>>, %arg5: memref<128x128xbf16, #tpu.memory_space<vmem>>, %arg6: memref<304x128xbf16, #tpu.memory_space<vmem>>, %arg7: memref<1x1x128xf32, #tpu.memory_space<vmem>>, %arg8: memref<1x1x128xf32, #tpu.memory_space<vmem>>) attributes {dimension_semantics = [#tpu.dimension_semantics<parallel>, #tpu.dimension_semantics<arbitrary>], iteration_bounds = array<i64: 2, 1>, scalar_prefetch = 0 : i64, scratch_operands = 0 : i64, tpu.core_type = #tpu.core_type<tc>, window_params = [{transform_indices = @transform_0, window_bounds = array<i64: 304, 128>}, {pipeline_mode = #tpu.pipeline_mode<synchronous>, transform_indices = @transform_1, window_bounds = array<i64: 1, 128>}, {pipeline_mode = #tpu.pipeline_mode<synchronous>, transform_indices = @transform_2, window_bounds = array<i64: 1, 128>}, {pipeline_mode = #tpu.pipeline_mode<synchronous>, transform_indices = @transform_3, window_bounds = array<i64: 128, 128>}, {transform_indices = @transform_4, window_bounds = array<i64: 304, 128>}, {transform_indices = @transform_5, window_bounds = array<i64: 1, 1, 128>}, {transform_indices = @transform_6, window_bounds = array<i64: 1, 1, 128>}]} {
    %c0_i32 = arith.constant 0 : i32
    %0 = arith.cmpi eq, %arg1, %c0_i32 : i32
    %1 = arith.extui %0 : i1 to i32
    %c0_i32_0 = arith.constant 0 : i32
    %2 = arith.cmpi ne, %1, %c0_i32_0 : i32
    scf.if %2 {
      %cst_14 = arith.constant 0.000000e+00 : f32
      %28 = vector.broadcast %cst_14 : f32 to vector<1x1x128xf32>
      %c0_15 = arith.constant 0 : index
      %c0_16 = arith.constant 0 : index
      %c0_17 = arith.constant 0 : index
      %29 = vector.load %arg7[%c0_15, %c0_16, %c0_17] : memref<1x1x128xf32, #tpu.memory_space<vmem>>, vector<1x1x128xf32>
      tpu.vector_store %arg7[%c0_15, %c0_16, %c0_17], %28 {strides = array<i32>} : memref<1x1x128xf32, #tpu.memory_space<vmem>>, vector<1x1x128xf32>,
      %cst_18 = arith.constant 0.000000e+00 : f32
      %30 = vector.broadcast %cst_18 : f32 to vector<1x1x128xf32>
      %c0_19 = arith.constant 0 : index
      %c0_20 = arith.constant 0 : index
      %c0_21 = arith.constant 0 : index
      %31 = vector.load %arg8[%c0_19, %c0_20, %c0_21] : memref<1x1x128xf32, #tpu.memory_space<vmem>>, vector<1x1x128xf32>
      tpu.vector_store %arg8[%c0_19, %c0_20, %c0_21], %30 {strides = array<i32>} : memref<1x1x128xf32, #tpu.memory_space<vmem>>, vector<1x1x128xf32>,
    } else {
    }
    %c0 = arith.constant 0 : index
    %c0_1 = arith.constant 0 : index
    %3 = vector.load %arg2[%c0, %c0_1] : memref<304x128xbf16, #tpu.memory_space<vmem>>, vector<304x128xbf16>
    %4 = arith.extf %3 : vector<304x128xbf16> to vector<304x128xf32>
    %c0_2 = arith.constant 0 : index
    %c0_3 = arith.constant 0 : index
    %5 = vector.load %arg3[%c0_2, %c0_3] : memref<1x128xf32, #tpu.memory_space<vmem>>, vector<1x128xf32>
    %6 = vector.broadcast %5 : vector<1x128xf32> to vector<304x128xf32>
    %7 = arith.mulf %4, %6 : vector<304x128xf32>
    %c0_4 = arith.constant 0 : index
    %c0_5 = arith.constant 0 : index
    %8 = vector.load %arg4[%c0_4, %c0_5] : memref<1x128xf32, #tpu.memory_space<vmem>>, vector<1x128xf32>
    %9 = vector.broadcast %8 : vector<1x128xf32> to vector<304x128xf32>
    %10 = arith.addf %7, %9 : vector<304x128xf32>
    %cst = arith.constant 0.000000e+00 : f32
    %11 = vector.broadcast %cst : f32 to vector<304x128xf32>
    %12 = arith.maximumf %10, %11 : vector<304x128xf32>
    %13 = arith.truncf %12 : vector<304x128xf32> to vector<304x128xbf16>
    %c0_6 = arith.constant 0 : index
    %c0_7 = arith.constant 0 : index
    %14 = vector.load %arg5[%c0_6, %c0_7] : memref<128x128xbf16, #tpu.memory_space<vmem>>, vector<128x128xbf16>
    %cst_8 = arith.constant dense<0.000000e+00> : vector<304x128xf32>
    %15 = tpu.matmul %13, %14, %cst_8 {dimension_numbers = #tpu.dot_dimension_numbers<[1], [0], [0], [1], [0, 0, 1, 1], [], []>} : vector<304x128xbf16>, vector<128x128xbf16>, vector<304x128xf32> -> vector<304x128xf32>
    %16 = arith.truncf %15 : vector<304x128xf32> to vector<304x128xbf16>
    %c0_9 = arith.constant 0 : index
    %c0_10 = arith.constant 0 : index
    %17 = vector.load %arg6[%c0_9, %c0_10] : memref<304x128xbf16, #tpu.memory_space<vmem>>, vector<304x128xbf16>
    tpu.vector_store %arg6[%c0_9, %c0_10], %16 {strides = array<i32>} : memref<304x128xbf16, #tpu.memory_space<vmem>>, vector<304x128xbf16>,
    %c1_i32 = arith.constant 1 : i32
    %18 = arith.muli %arg0, %c1_i32 : i32
    %19 = arith.addi %18, %arg1 : i32
    %c304_i32 = arith.constant 304 : i32
    %20 = arith.muli %19, %c304_i32 : i32
    %c304_i32_11 = arith.constant 304 : i32
    %21 = arith.addi %20, %c304_i32_11 : i32
    %c600_i32 = arith.constant 600 : i32
    %22 = arith.cmpi sgt, %21, %c600_i32 : i32
    %true = arith.constant true
    %23 = arith.xori %22, %true : i1
    %24 = arith.extui %23 : i1 to i32
    %c0_i32_12 = arith.constant 0 : i32
    %25 = arith.cmpi ne, %24, %c0_i32_12 : i32
    scf.if %25 {
      %c0_14 = arith.constant 0 : index
      %c0_15 = arith.constant 0 : index
      %c0_16 = arith.constant 0 : index
      %28 = vector.load %arg7[%c0_14, %c0_15, %c0_16] : memref<1x1x128xf32, #tpu.memory_space<vmem>>, vector<1x1x128xf32>
      %cst_17 = arith.constant dense<0.000000e+00> : vector<128xf32>
      %29 = vector.multi_reduction <add>, %15, %cst_17 [0] : vector<304x128xf32> to vector<128xf32>
      %30 = vector.shape_cast %29 : vector<128xf32> to vector<1x128xf32>
      %31 = vector.shape_cast %30 : vector<1x128xf32> to vector<1x1x128xf32>
      %32 = arith.addf %28, %31 : vector<1x1x128xf32>
      %c0_18 = arith.constant 0 : index
      %c0_19 = arith.constant 0 : index
      %c0_20 = arith.constant 0 : index
      %33 = vector.load %arg7[%c0_18, %c0_19, %c0_20] : memref<1x1x128xf32, #tpu.memory_space<vmem>>, vector<1x1x128xf32>
      tpu.vector_store %arg7[%c0_18, %c0_19, %c0_20], %32 {strides = array<i32>} : memref<1x1x128xf32, #tpu.memory_space<vmem>>, vector<1x1x128xf32>,
      %c0_21 = arith.constant 0 : index
      %c0_22 = arith.constant 0 : index
      %c0_23 = arith.constant 0 : index
      %34 = vector.load %arg8[%c0_21, %c0_22, %c0_23] : memref<1x1x128xf32, #tpu.memory_space<vmem>>, vector<1x1x128xf32>
      %35 = arith.mulf %15, %15 : vector<304x128xf32>
      %cst_24 = arith.constant dense<0.000000e+00> : vector<128xf32>
      %36 = vector.multi_reduction <add>, %35, %cst_24 [0] : vector<304x128xf32> to vector<128xf32>
      %37 = vector.shape_cast %36 : vector<128xf32> to vector<1x128xf32>
      %38 = vector.shape_cast %37 : vector<1x128xf32> to vector<1x1x128xf32>
      %39 = arith.addf %34, %38 : vector<1x1x128xf32>
      %c0_25 = arith.constant 0 : index
      %c0_26 = arith.constant 0 : index
      %c0_27 = arith.constant 0 : index
      %40 = vector.load %arg8[%c0_25, %c0_26, %c0_27] : memref<1x1x128xf32, #tpu.memory_space<vmem>>, vector<1x1x128xf32>
      tpu.vector_store %arg8[%c0_25, %c0_26, %c0_27], %39 {strides = array<i32>} : memref<1x1x128xf32, #tpu.memory_space<vmem>>, vector<1x1x128xf32>,
    } else {
    }
    %26 = arith.extui %22 : i1 to i32
    %c0_i32_13 = arith.constant 0 : i32
    %27 = arith.cmpi ne, %26, %c0_i32_13 : i32
    scf.if %27 {
      %28 = tpu.iota {dimensions = array<i32: 0>} : vector<304x1xi32>
      %29 = vector.broadcast %20 : i32 to vector<304x1xi32>
      %30 = arith.addi %29, %28 : vector<304x1xi32>
      %c600_i32_14 = arith.constant 600 : i32
      %31 = vector.broadcast %c600_i32_14 : i32 to vector<304x1xi32>
      %32 = arith.cmpi slt, %30, %31 : vector<304x1xi32>
      %cst_15 = arith.constant 0.000000e+00 : f32
      %33 = vector.shape_cast %32 : vector<304x1xi1> to vector<304x1xi1>
      %34 = vector.broadcast %33 : vector<304x1xi1> to vector<304x128xi1>
      %35 = vector.broadcast %cst_15 : f32 to vector<304x128xf32>
      %36 = arith.select %34, %15, %35 : vector<304x128xi1>, vector<304x128xf32>
      %c0_16 = arith.constant 0 : index
      %c0_17 = arith.constant 0 : index
      %c0_18 = arith.constant 0 : index
      %37 = vector.load %arg7[%c0_16, %c0_17, %c0_18] : memref<1x1x128xf32, #tpu.memory_space<vmem>>, vector<1x1x128xf32>
      %cst_19 = arith.constant dense<0.000000e+00> : vector<128xf32>
      %38 = vector.multi_reduction <add>, %36, %cst_19 [0] : vector<304x128xf32> to vector<128xf32>
      %39 = vector.shape_cast %38 : vector<128xf32> to vector<1x128xf32>
      %40 = vector.shape_cast %39 : vector<1x128xf32> to vector<1x1x128xf32>
      %41 = arith.addf %37, %40 : vector<1x1x128xf32>
      %c0_20 = arith.constant 0 : index
      %c0_21 = arith.constant 0 : index
      %c0_22 = arith.constant 0 : index
      %42 = vector.load %arg7[%c0_20, %c0_21, %c0_22] : memref<1x1x128xf32, #tpu.memory_space<vmem>>, vector<1x1x128xf32>
      tpu.vector_store %arg7[%c0_20, %c0_21, %c0_22], %41 {strides = array<i32>} : memref<1x1x128xf32, #tpu.memory_space<vmem>>, vector<1x1x128xf32>,
      %c0_23 = arith.constant 0 : index
      %c0_24 = arith.constant 0 : index
      %c0_25 = arith.constant 0 : index
      %43 = vector.load %arg8[%c0_23, %c0_24, %c0_25] : memref<1x1x128xf32, #tpu.memory_space<vmem>>, vector<1x1x128xf32>
      %44 = arith.mulf %36, %36 : vector<304x128xf32>
      %cst_26 = arith.constant dense<0.000000e+00> : vector<128xf32>
      %45 = vector.multi_reduction <add>, %44, %cst_26 [0] : vector<304x128xf32> to vector<128xf32>
      %46 = vector.shape_cast %45 : vector<128xf32> to vector<1x128xf32>
      %47 = vector.shape_cast %46 : vector<1x128xf32> to vector<1x1x128xf32>
      %48 = arith.addf %43, %47 : vector<1x1x128xf32>
      %c0_27 = arith.constant 0 : index
      %c0_28 = arith.constant 0 : index
      %c0_29 = arith.constant 0 : index
      %49 = vector.load %arg8[%c0_27, %c0_28, %c0_29] : memref<1x1x128xf32, #tpu.memory_space<vmem>>, vector<1x1x128xf32>
      tpu.vector_store %arg8[%c0_27, %c0_28, %c0_29], %48 {strides = array<i32>} : memref<1x1x128xf32, #tpu.memory_space<vmem>>, vector<1x1x128xf32>,
    } else {
    }
    return
  }
  func.func @transform_0(%arg0: i32, %arg1: i32) -> (i32, i32) {
    %c1_i32 = arith.constant 1 : i32
    %0 = arith.muli %arg0, %c1_i32 : i32
    %1 = arith.addi %0, %arg1 : i32
    %c0_i32 = arith.constant 0 : i32
    %c0_i32_0 = arith.constant 0 : i32
    return %1, %c0_i32 : i32, i32
  }
  func.func @transform_1(%arg0: i32, %arg1: i32) -> (i32, i32) {
    %c0_i32 = arith.constant 0 : i32
    %c0_i32_0 = arith.constant 0 : i32
    %c0_i32_1 = arith.constant 0 : i32
    return %c0_i32, %c0_i32_0 : i32, i32
  }
  func.func @transform_2(%arg0: i32, %arg1: i32) -> (i32, i32) {
    %c0_i32 = arith.constant 0 : i32
    %c0_i32_0 = arith.constant 0 : i32
    %c0_i32_1 = arith.constant 0 : i32
    return %c0_i32, %c0_i32_0 : i32, i32
  }
  func.func @transform_3(%arg0: i32, %arg1: i32) -> (i32, i32) {
    %c0_i32 = arith.constant 0 : i32
    %c0_i32_0 = arith.constant 0 : i32
    %c0_i32_1 = arith.constant 0 : i32
    return %c0_i32, %c0_i32_0 : i32, i32
  }
  func.func @transform_4(%arg0: i32, %arg1: i32) -> (i32, i32) {
    %c1_i32 = arith.constant 1 : i32
    %0 = arith.muli %arg0, %c1_i32 : i32
    %1 = arith.addi %0, %arg1 : i32
    %c0_i32 = arith.constant 0 : i32
    %c0_i32_0 = arith.constant 0 : i32
    return %1, %c0_i32 : i32, i32
  }
  func.func @transform_5(%arg0: i32, %arg1: i32) -> (i32, i32, i32) {
    %c0_i32 = arith.constant 0 : i32
    %c0_i32_0 = arith.constant 0 : i32
    %c0_i32_1 = arith.constant 0 : i32
    return %arg0, %c0_i32, %c0_i32_0 : i32, i32, i32
  }
  func.func @transform_6(%arg0: i32, %arg1: i32) -> (i32, i32, i32) {
    %c0_i32 = arith.constant 0 : i32
    %c0_i32_0 = arith.constant 0 : i32
    %c0_i32_1 = arith.constant 0 : i32
    return %arg0, %c0_i32, %c0_i32_0 : i32, i32, i32
  }
}

</mosaic_0001>

<llo_original>
// kernel: apply_node_func.5
$region0: #{apply_node_func.5}
  #allocation0 [shape = 'u32[]', space=smem, size = 0x4, offset = 0x4, fixed_abs, tag = 'smem constant byte address 0x4 - core index']
  #allocation1 [shape = 'u32[144,128]{1,0:T(1,128)}', space=vmem, size = 0x12000, scoped, tag = 'internal scratch']
  %s0 = inlined_call_operand.vmem [shape: bf16[608,128], index: 0, kind: input, shape index: {}]
  %s1 = inlined_call_operand.vmem [shape: f32[1,128], index: 1, kind: input, shape index: {}]
  %s2 = inlined_call_operand.vmem [shape: f32[1,128], index: 2, kind: input, shape index: {}]
  %s3 = inlined_call_operand.hbm [shape: f32[608,128], index: 3, kind: output, shape index: {}]
  %s4 = sld [smem:[#allocation0]]
  $region45: #{apply_node_func.5} parent=0
    _
  %s6 = ssub.s32 1, %s4
  %s7 = scalar_select 0, %s6, %s4
  $region1: #{apply_node_func.5} parent=0
    #allocation2 [shape = 'u8[311296]{0}', space=vmem, size = 0x4c000, scoped, tag = 'output window, operand 0']
    #allocation3 [shape = 's32[2]{0}', space=sflag, size = 0x8, scoped, tag = 'scoped memory for apply_node_func.5']
    %8 = vsyncpa [#allocation3], 0
    %s9 = scalar_lea.sflag [#allocation3], 1
    %10 = vsyncpa %s9, 0
    loop: start=0, step=1, limit=4
    $region2: #{apply_node_func.5} parent=1 // loop_pre_header
      _
    $region3: #{apply_node_func.5} parent=1 // loop_header
      %s12 = sphi 0, %s16
      %p13 = scmp.ge.s32.totalorder %s12, 4
      %s22 = sphi 0, %s24
      %s25 = sphi 0, %s22
      %s26 = sphi 0, %s25
      %s42 = sphi 0, %s26
      %s46 = sphi 0, %s46
      %s48 = sphi 0, %s46
      %s49 = sphi 0, %s48
      %s63 = sphi 0, %s49
      %s67 = sphi 0, %s67
      %s69 = sphi 0, %s67
      %s70 = sphi 0, %s69
      %s84 = sphi 0, %s70
      %s90 = sphi 0, %s92
      %s93 = sphi 0, %s90
      %s94 = sphi 0, %s93
      %s110 = sphi 0, %s94
    $region4: #{apply_node_func.5} parent=1 // loop_header_branch
      %15 = sbr.rel (%p13) target = $region8
    $region5: #{apply_node_func.5} parent=1 // loop_body
      %s17 = ssub.s32 %s12, 1
      %s18 = ssub.s32 %s12, 2
      %s19 = sadd.s32 %s12, 1
      %s20 = ssub.s32 %s12, %s19
      %p21 = scmp.eq.s32.totalorder %s20, 0
      %s23 = sadd.s32 %s22, 1
      %s24 = scalar_select %p21, %s22, %s23
      %p27 = pneg %p21
      %p28 = scmp.eq.s32.totalorder %s12, 1
      %p29 = por %p27, %p28
      %p30 = scmp.ne.s32.totalorder %s22, %s25
      %p31 = scmp.eq.s32.totalorder %s12, 0
      %p32 = por %p30, %p31
      %p33 = scmp.ne.s32.totalorder %s22, %s25
      %p34 = scmp.eq.s32.totalorder %s17, 1
      %p35 = por %p33, %p34
      %p36 = scmp.ne.s32.totalorder %s25, %s26
      %p37 = scmp.eq.s32.totalorder %s17, 0
      %p38 = por %p36, %p37
      %p39 = scmp.ne.s32.totalorder %s25, %s26
      %p40 = scmp.eq.s32.totalorder %s18, 1
      %p41 = por %p39, %p40
      %p43 = scmp.ne.s32.totalorder %s26, %s42
      %p44 = scmp.eq.s32.totalorder %s18, 0
      %p45 = por %p43, %p44
      %s47 = sadd.s32 %s46, 1
      %p50 = scmp.eq.s32.totalorder %s12, 1
      %p51 = scmp.ne.s32.totalorder %s46, %s48
      %p52 = scmp.eq.s32.totalorder %s12, 0
      %p53 = por %p51, %p52
      %p54 = scmp.ne.s32.totalorder %s46, %s48
      %p55 = scmp.eq.s32.totalorder %s17, 1
      %p56 = por %p54, %p55
      %p57 = scmp.ne.s32.totalorder %s48, %s49
      %p58 = scmp.eq.s32.totalorder %s17, 0
      %p59 = por %p57, %p58
      %p60 = scmp.ne.s32.totalorder %s48, %s49
      %p61 = scmp.eq.s32.totalorder %s18, 1
      %p62 = por %p60, %p61
      %p64 = scmp.ne.s32.totalorder %s49, %s63
      %p65 = scmp.eq.s32.totalorder %s18, 0
      %p66 = por %p64, %p65
      %s68 = sadd.s32 %s67, 1
      %p71 = scmp.eq.s32.totalorder %s12, 1
      %p72 = scmp.ne.s32.totalorder %s67, %s69
      %p73 = scmp.eq.s32.totalorder %s12, 0
      %p74 = por %p72, %p73
      %p75 = scmp.ne.s32.totalorder %s67, %s69
      %p76 = scmp.eq.s32.totalorder %s17, 1
      %p77 = por %p75, %p76
      %p78 = scmp.ne.s32.totalorder %s69, %s70
      %p79 = scmp.eq.s32.totalorder %s17, 0
      %p80 = por %p78, %p79
      %p81 = scmp.ne.s32.totalorder %s69, %s70
      %p82 = scmp.eq.s32.totalorder %s18, 1
      %p83 = por %p81, %p82
      %p85 = scmp.ne.s32.totalorder %s70, %s84
      %p86 = scmp.eq.s32.totalorder %s18, 0
      %p87 = por %p85, %p86
      %s88 = ssub.s32 %s12, %s19
      %p89 = scmp.eq.s32.totalorder %s88, 0
      %s91 = sadd.s32 %s90, 1
      %s92 = scalar_select %p89, %s90, %s91
      %p95 = pneg %p89
      %p96 = scmp.eq.s32.totalorder %s12, 1
      %p97 = por %p95, %p96
      %p98 = scmp.ne.s32.totalorder %s90, %s93
      %p99 = scmp.eq.s32.totalorder %s12, 0
      %p100 = por %p98, %p99
      %p101 = scmp.ne.s32.totalorder %s90, %s93
      %p102 = scmp.eq.s32.totalorder %s17, 1
      %p103 = por %p101, %p102
      %p104 = scmp.ne.s32.totalorder %s93, %s94
      %p105 = scmp.eq.s32.totalorder %s17, 0
      %p106 = por %p104, %p105
      %p107 = scmp.ne.s32.totalorder %s93, %s94
      %p108 = scmp.eq.s32.totalorder %s18, 1
      %p109 = por %p107, %p108
      %p111 = scmp.ne.s32.totalorder %s94, %s110
      %p112 = scmp.eq.s32.totalorder %s18, 0
      %p113 = por %p111, %p112
      %p114 = scmp.le.s32.totalorder 1, %s12
      %p115 = scmp.lt.s32.totalorder %s12, 3
      %p116 = pnand %p114, %p115
      %p117 = pneg %p116
      // Predicated region
      $region9: #{apply_node_func.5} parent=5 // pred_check
        _
      $region10: #{apply_node_func.5} parent=5 // pred_check_branch
        %119 = sbr.rel (%p116) target = $region12
      $region11: #{apply_node_func.5} parent=5 // pred_region
        %s120 = ssub.s32 %s12, 1
        // Predicated region
        $region13: #{apply_node_func.5} parent=11 // pred_check
          %p121 = pneg %p59
        $region14: #{apply_node_func.5} parent=11 // pred_check_branch
          %123 = sbr.rel (%p121) target = $region16
        $region15: #{apply_node_func.5} parent=11 // pred_region
          _
        $region16: #{apply_node_func.5} parent=11 // pred_fallthru
          _
        // Predicated region
        $region17: #{apply_node_func.5} parent=11 // pred_check
          %p124 = pneg %p80
        $region18: #{apply_node_func.5} parent=11 // pred_check_branch
          %126 = sbr.rel (%p124) target = $region20
        $region19: #{apply_node_func.5} parent=11 // pred_region
          _
        $region20: #{apply_node_func.5} parent=11 // pred_fallthru
          _
      $region12: #{apply_node_func.5} parent=5 // pred_fallthru
        _
      %p127 = scmp.lt.s32.totalorder %s12, 2
      // Predicated region
      $region21: #{apply_node_func.5} parent=5 // pred_check
        %p128 = pneg %p127
      $region22: #{apply_node_func.5} parent=5 // pred_check_branch
        %130 = sbr.rel (%p128) target = $region24
      $region23: #{apply_node_func.5} parent=5 // pred_region
        // Predicated region
        $region25: #{apply_node_func.5} parent=23 // pred_check
          %p131 = pneg %p32
        $region26: #{apply_node_func.5} parent=23 // pred_check_branch
          %133 = sbr.rel (%p131) target = $region28
        $region27: #{apply_node_func.5} parent=23 // pred_region
          %s134 = smul.u32 38, %s12
          %p135 = scmp.lt.s32.totalorder %s134, 75
          %s136 = scalar_select %p135, %s134, 75
          %s137 = smul.addr %s136, 4
          %s138 = scalar_lea.vmem %s0, %s137
          %s139 = smul.u32 38, %s12
        $region28: #{apply_node_func.5} parent=23 // pred_fallthru
          _
      $region24: #{apply_node_func.5} parent=5 // pred_fallthru
        _
      %p140 = scmp.le.s32.totalorder 1, %s12
      %p141 = scmp.lt.s32.totalorder %s12, 3
      %p142 = pnand %p140, %p141
      %p143 = pneg %p142
      // Predicated region
      $region29: #{apply_node_func.5} parent=5 // pred_check
        _
      $region30: #{apply_node_func.5} parent=5 // pred_check_branch
        %145 = sbr.rel (%p142) target = $region32
      $region31: #{apply_node_func.5} parent=5 // pred_region
        %s146 = ssub.s32 %s12, 1
        %s147 = smul.u32 38, %s17
        %p148 = scmp.lt.s32.totalorder %s147, 75
        %s149 = scalar_select %p148, %s147, 75
        %s150 = smul.addr %s149, 4
        %s151 = scalar_lea.vmem %s0, %s150
        %p152 = pneg %p38
        %p153 = pneg %p35
        %p154 = pneg %p59
        %p155 = pneg %p56
        %p156 = pneg %p80
        %p157 = pneg %p77
        %p158 = pneg %p106
        %p159 = pneg %p103
        %s160 = sand.u32 %s93, 1
        %s161 = scalar_lea.sflag [#allocation3], %s160
        %s162 = sand.u32 %s93, 1
        %s163 = smul.addr %s162, 304
        %s164 = scalar_lea.vmem [#allocation2], %s163
        %s165 = smul.u32 38, %s17
        %p166 = scmp.lt.s32.totalorder %s165, 75
        %s167 = scalar_select %p166, %s165, 75
        %s168 = smul.addr %s167, 4
        %s169 = scalar_lea.vmem %s0, %s168
        %s170 = smul.u32 38, %s17
        %s171 = smul.u32 38, %s17
        %v172 = vld [vmem:[%s169] sm:$0xf]
        %v173 = vld [vmem:[%s169 + $0x4] sm:$0xf]
        %v174 = vld [vmem:[%s169 + $0x8] sm:$0xf]
        %v175 = vld [vmem:[%s169 + $0xc] sm:$0xf]
        %v176 = vld [vmem:[%s169 + $0x10] sm:$0xf]
        %v177 = vld [vmem:[%s169 + $0x14] sm:$0xf]
        %v178 = vld [vmem:[%s169 + $0x18] sm:$0xf]
        %v179 = vld [vmem:[%s169 + $0x1c] sm:$0xf]
        %v180 = vld [vmem:[%s169 + $0x20] sm:$0xf]
        %v181 = vld [vmem:[%s169 + $0x24] sm:$0xf]
        %v182 = vld [vmem:[%s169 + $0x28] sm:$0xf]
        %v183 = vld [vmem:[%s169 + $0x2c] sm:$0xf]
        %v184 = vld [vmem:[%s169 + $0x30] sm:$0xf]
        %v185 = vld [vmem:[%s169 + $0x34] sm:$0xf]
        %v186 = vld [vmem:[%s169 + $0x38] sm:$0xf]
        %v187 = vld [vmem:[%s169 + $0x3c] sm:$0xf]
        %v188 = vld [vmem:[%s169 + $0x40] sm:$0xf]
        %v189 = vld [vmem:[%s169 + $0x44] sm:$0xf]
        %v190 = vld [vmem:[%s169 + $0x48] sm:$0xf]
        %v191 = vld [vmem:[%s169 + $0x4c] sm:$0xf]
        %v192 = vld [vmem:[%s169 + $0x50] sm:$0xf]
        %v193 = vld [vmem:[%s169 + $0x54] sm:$0xf]
        %v194 = vld [vmem:[%s169 + $0x58] sm:$0xf]
        %v195 = vld [vmem:[%s169 + $0x5c] sm:$0xf]
        %v196 = vld [vmem:[%s169 + $0x60] sm:$0xf]
        %v197 = vld [vmem:[%s169 + $0x64] sm:$0xf]
        %v198 = vld [vmem:[%s169 + $0x68] sm:$0xf]
        %v199 = vld [vmem:[%s169 + $0x6c] sm:$0xf]
        %v200 = vld [vmem:[%s169 + $0x70] sm:$0xf]
        %v201 = vld [vmem:[%s169 + $0x74] sm:$0xf]
        %v202 = vld [vmem:[%s169 + $0x78] sm:$0xf]
        %v203 = vld [vmem:[%s169 + $0x7c] sm:$0xf]
        %v204 = vld [vmem:[%s169 + $0x80] sm:$0xf]
        %v205 = vld [vmem:[%s169 + $0x84] sm:$0xf]
        %v206 = vld [vmem:[%s169 + $0x88] sm:$0xf]
        %v207 = vld [vmem:[%s169 + $0x8c] sm:$0xf]
        %v208 = vld [vmem:[%s169 + $0x90] sm:$0xf]
        %v209 = vld [vmem:[%s169 + $0x94] sm:$0xf]
        %v210 = vunpack.c.l.bf16 %v172
        %v211 = vunpack.c.l.bf16 %v173
        %v212 = vunpack.c.l.bf16 %v174
        %v213 = vunpack.c.l.bf16 %v175
        %v214 = vunpack.c.l.bf16 %v176
        %v215 = vunpack.c.l.bf16 %v177
        %v216 = vunpack.c.l.bf16 %v178
        %v217 = vunpack.c.l.bf16 %v179
        %v218 = vunpack.c.l.bf16 %v180
        %v219 = vunpack.c.l.bf16 %v181
        %v220 = vunpack.c.l.bf16 %v182
        %v221 = vunpack.c.l.bf16 %v183
        %v222 = vunpack.c.l.bf16 %v184
        %v223 = vunpack.c.l.bf16 %v185
        %v224 = vunpack.c.l.bf16 %v186
        %v225 = vunpack.c.l.bf16 %v187
        %v226 = vunpack.c.l.bf16 %v188
        %v227 = vunpack.c.l.bf16 %v189
        %v228 = vunpack.c.l.bf16 %v190
        %v229 = vunpack.c.l.bf16 %v191
        %v230 = vunpack.c.l.bf16 %v192
        %v231 = vunpack.c.l.bf16 %v193
        %v232 = vunpack.c.l.bf16 %v194
        %v233 = vunpack.c.l.bf16 %v195
        %v234 = vunpack.c.l.bf16 %v196
        %v235 = vunpack.c.l.bf16 %v197
        %v236 = vunpack.c.l.bf16 %v198
        %v237 = vunpack.c.l.bf16 %v199
        %v238 = vunpack.c.l.bf16 %v200
        %v239 = vunpack.c.l.bf16 %v201
        %v240 = vunpack.c.l.bf16 %v202
        %v241 = vunpack.c.l.bf16 %v203
        %v242 = vunpack.c.l.bf16 %v204
        %v243 = vunpack.c.l.bf16 %v205
        %v244 = vunpack.c.l.bf16 %v206
        %v245 = vunpack.c.l.bf16 %v207
        %v246 = vunpack.c.l.bf16 %v208
        %v247 = vunpack.c.l.bf16 %v209
        %v248 = vld [vmem:[%s1] sm:$0x1]
        %v250 = vlaneseq
        %v251 = vshrl.u32 %v250, 7
        %v252 = vsub.s32 0, %v251
        %v253 = vrot.slane %v248, %v252
        %v255 = vmul.f32 %v210, %v253
        %v256 = vmul.f32 %v211, %v253
        %v257 = vmul.f32 %v212, %v253
        %v258 = vmul.f32 %v213, %v253
        %v259 = vmul.f32 %v214, %v253
        %v260 = vmul.f32 %v215, %v253
        %v261 = vmul.f32 %v216, %v253
        %v262 = vmul.f32 %v217, %v253
        %v263 = vmul.f32 %v218, %v253
        %v264 = vmul.f32 %v219, %v253
        %v265 = vmul.f32 %v220, %v253
        %v266 = vmul.f32 %v221, %v253
        %v267 = vmul.f32 %v222, %v253
        %v268 = vmul.f32 %v223, %v253
        %v269 = vmul.f32 %v224, %v253
        %v270 = vmul.f32 %v225, %v253
        %v271 = vmul.f32 %v226, %v253
        %v272 = vmul.f32 %v227, %v253
        %v273 = vmul.f32 %v228, %v253
        %v274 = vmul.f32 %v229, %v253
        %v275 = vmul.f32 %v230, %v253
        %v276 = vmul.f32 %v231, %v253
        %v277 = vmul.f32 %v232, %v253
        %v278 = vmul.f32 %v233, %v253
        %v279 = vmul.f32 %v234, %v253
        %v280 = vmul.f32 %v235, %v253
        %v281 = vmul.f32 %v236, %v253
        %v282 = vmul.f32 %v237, %v253
        %v283 = vmul.f32 %v238, %v253
        %v284 = vmul.f32 %v239, %v253
        %v285 = vmul.f32 %v240, %v253
        %v286 = vmul.f32 %v241, %v253
        %v287 = vmul.f32 %v242, %v253
        %v288 = vmul.f32 %v243, %v253
        %v289 = vmul.f32 %v244, %v253
        %v290 = vmul.f32 %v245, %v253
        %v291 = vmul.f32 %v246, %v253
        %v292 = vmul.f32 %v247, %v253
        %v293 = vld [vmem:[%s2] sm:$0x1]
        %v295 = vlaneseq
        %v296 = vshrl.u32 %v295, 7
        %v297 = vsub.s32 0, %v296
        %v298 = vrot.slane %v293, %v297
        %v300 = vadd.f32 %v255, %v298
        %v301 = vadd.f32 %v256, %v298
        %v302 = vadd.f32 %v257, %v298
        %v303 = vadd.f32 %v258, %v298
        %v304 = vadd.f32 %v259, %v298
        %v305 = vadd.f32 %v260, %v298
        %v306 = vadd.f32 %v261, %v298
        %v307 = vadd.f32 %v262, %v298
        %v308 = vadd.f32 %v263, %v298
        %v309 = vadd.f32 %v264, %v298
        %v310 = vadd.f32 %v265, %v298
        %v311 = vadd.f32 %v266, %v298
        %v312 = vadd.f32 %v267, %v298
        %v313 = vadd.f32 %v268, %v298
        %v314 = vadd.f32 %v269, %v298
        %v315 = vadd.f32 %v270, %v298
        %v316 = vadd.f32 %v271, %v298
        %v317 = vadd.f32 %v272, %v298
        %v318 = vadd.f32 %v273, %v298
        %v319 = vadd.f32 %v274, %v298
        %v320 = vadd.f32 %v275, %v298
        %v321 = vadd.f32 %v276, %v298
        %v322 = vadd.f32 %v277, %v298
        %v323 = vadd.f32 %v278, %v298
        %v324 = vadd.f32 %v279, %v298
        %v325 = vadd.f32 %v280, %v298
        %v326 = vadd.f32 %v281, %v298
        %v327 = vadd.f32 %v282, %v298
        %v328 = vadd.f32 %v283, %v298
        %v329 = vadd.f32 %v284, %v298
        %v330 = vadd.f32 %v285, %v298
        %v331 = vadd.f32 %v286, %v298
        %v332 = vadd.f32 %v287, %v298
        %v333 = vadd.f32 %v288, %v298
        %v334 = vadd.f32 %v289, %v298
        %v335 = vadd.f32 %v290, %v298
        %v336 = vadd.f32 %v291, %v298
        %v337 = vadd.f32 %v292, %v298
        %v338 = vmax.f32 %v300, 0.0
        %v339 = vmax.f32 %v301, 0.0
        %v340 = vmax.f32 %v302, 0.0
        %v341 = vmax.f32 %v303, 0.0
        %v342 = vmax.f32 %v304, 0.0
        %v343 = vmax.f32 %v305, 0.0
        %v344 = vmax.f32 %v306, 0.0
        %v345 = vmax.f32 %v307, 0.0
        %v346 = vmax.f32 %v308, 0.0
        %v347 = vmax.f32 %v309, 0.0
        %v348 = vmax.f32 %v310, 0.0
        %v349 = vmax.f32 %v311, 0.0
        %v350 = vmax.f32 %v312, 0.0
        %v351 = vmax.f32 %v313, 0.0
        %v352 = vmax.f32 %v314, 0.0
        %v353 = vmax.f32 %v315, 0.0
        %v354 = vmax.f32 %v316, 0.0
        %v355 = vmax.f32 %v317, 0.0
        %v356 = vmax.f32 %v318, 0.0
        %v357 = vmax.f32 %v319, 0.0
        %v358 = vmax.f32 %v320, 0.0
        %v359 = vmax.f32 %v321, 0.0
        %v360 = vmax.f32 %v322, 0.0
        %v361 = vmax.f32 %v323, 0.0
        %v362 = vmax.f32 %v324, 0.0
        %v363 = vmax.f32 %v325, 0.0
        %v364 = vmax.f32 %v326, 0.0
        %v365 = vmax.f32 %v327, 0.0
        %v366 = vmax.f32 %v328, 0.0
        %v367 = vmax.f32 %v329, 0.0
        %v368 = vmax.f32 %v330, 0.0
        %v369 = vmax.f32 %v331, 0.0
        %v370 = vmax.f32 %v332, 0.0
        %v371 = vmax.f32 %v333, 0.0
        %v372 = vmax.f32 %v334, 0.0
        %v373 = vmax.f32 %v335, 0.0
        %v374 = vmax.f32 %v336, 0.0
        %v375 = vmax.f32 %v337, 0.0
        %376 = vst [vmem:[%s164] sm:$0xff] %v338
        %377 = vst [vmem:[%s164 + $0x8] sm:$0xff] %v339
        %378 = vst [vmem:[%s164 + $0x10] sm:$0xff] %v340
        %379 = vst [vmem:[%s164 + $0x18] sm:$0xff] %v341
        %380 = vst [vmem:[%s164 + $0x20] sm:$0xff] %v342
        %381 = vst [vmem:[%s164 + $0x28] sm:$0xff] %v343
        %382 = vst [vmem:[%s164 + $0x30] sm:$0xff] %v344
        %383 = vst [vmem:[%s164 + $0x38] sm:$0xff] %v345
        %384 = vst [vmem:[%s164 + $0x40] sm:$0xff] %v346
        %385 = vst [vmem:[%s164 + $0x48] sm:$0xff] %v347
        %386 = vst [vmem:[%s164 + $0x50] sm:$0xff] %v348
        %387 = vst [vmem:[%s164 + $0x58] sm:$0xff] %v349
        %388 = vst [vmem:[%s164 + $0x60] sm:$0xff] %v350
        %389 = vst [vmem:[%s164 + $0x68] sm:$0xff] %v351
        %390 = vst [vmem:[%s164 + $0x70] sm:$0xff] %v352
        %391 = vst [vmem:[%s164 + $0x78] sm:$0xff] %v353
        %392 = vst [vmem:[%s164 + $0x80] sm:$0xff] %v354
        %393 = vst [vmem:[%s164 + $0x88] sm:$0xff] %v355
        %394 = vst [vmem:[%s164 + $0x90] sm:$0xff] %v356
        %395 = vst [vmem:[%s164 + $0x98] sm:$0xff] %v357
        %396 = vst [vmem:[%s164 + $0xa0] sm:$0xff] %v358
        %397 = vst [vmem:[%s164 + $0xa8] sm:$0xff] %v359
        %398 = vst [vmem:[%s164 + $0xb0] sm:$0xff] %v360
        %399 = vst [vmem:[%s164 + $0xb8] sm:$0xff] %v361
        %400 = vst [vmem:[%s164 + $0xc0] sm:$0xff] %v362
        %401 = vst [vmem:[%s164 + $0xc8] sm:$0xff] %v363
        %402 = vst [vmem:[%s164 + $0xd0] sm:$0xff] %v364
        %403 = vst [vmem:[%s164 + $0xd8] sm:$0xff] %v365
        %404 = vst [vmem:[%s164 + $0xe0] sm:$0xff] %v366
        %405 = vst [vmem:[%s164 + $0xe8] sm:$0xff] %v367
        %406 = vst [vmem:[%s164 + $0xf0] sm:$0xff] %v368
        %407 = vst [vmem:[%s164 + $0xf8] sm:$0xff] %v369
        %408 = vst [vmem:[%s164 + $0x100] sm:$0xff] %v370
        %409 = vst [vmem:[%s164 + $0x108] sm:$0xff] %v371
        %410 = vst [vmem:[%s164 + $0x110] sm:$0xff] %v372
        %411 = vst [vmem:[%s164 + $0x118] sm:$0xff] %v373
        %412 = vst [vmem:[%s164 + $0x120] sm:$0xff] %v374
        %413 = vst [vmem:[%s164 + $0x128] sm:$0xff] %v375
        %s414 = sand.u32 %s93, 1
        %s415 = scalar_lea.sflag [#allocation3], %s414
        %s416 = sand.u32 %s93, 1
        %s417 = smul.addr %s416, 304
        %s418 = scalar_lea.vmem [#allocation2], %s417
        // Predicated region
        $region33: #{apply_node_func.5} parent=31 // pred_check
          %p419 = pneg %p103
        $region34: #{apply_node_func.5} parent=31 // pred_check_branch
          %421 = sbr.rel (%p419) target = $region36
        $region35: #{apply_node_func.5} parent=31 // pred_region
          %s422 = smul.u32 38, %s17
          %s424 = ssub.s32 4864, 4864
          %425 = vsyncadd %s415, %s424
          %s426 = smul.addr %s422, 128
          %s427 = scalar_lea.hbm %s3, %s426
          %s428 = sshll.u32 %s418, 4
          %s429 = int_to_ptr.vmem [resolvable:$true] %s428
          %434 = dma.vmem_to_hbm [thread:$0]  %s429, 4864, %s427, %s415, 128, 128, 8
        $region36: #{apply_node_func.5} parent=31 // pred_fallthru
          _
      $region32: #{apply_node_func.5} parent=5 // pred_fallthru
        _
      %p435 = scmp.le.s32.totalorder 2, %s12
      // Predicated region
      $region37: #{apply_node_func.5} parent=5 // pred_check
        %p436 = pneg %p435
      $region38: #{apply_node_func.5} parent=5 // pred_check_branch
        %438 = sbr.rel (%p436) target = $region40
      $region39: #{apply_node_func.5} parent=5 // pred_region
        %s439 = ssub.s32 %s12, 2
        // Predicated region
        $region41: #{apply_node_func.5} parent=39 // pred_check
          %p440 = pneg %p109
        $region42: #{apply_node_func.5} parent=39 // pred_check_branch
          %442 = sbr.rel (%p440) target = $region44
        $region43: #{apply_node_func.5} parent=39 // pred_region
          %s443 = sand.u32 %s94, 1
          %s444 = scalar_lea.sflag [#allocation3], %s443
          %s445 = sand.u32 %s94, 1
          %s446 = smul.addr %s445, 304
          %s447 = scalar_lea.vmem [#allocation2], %s446
          %448 = dma.done %s444, 4864
        $region44: #{apply_node_func.5} parent=39 // pred_fallthru
          _
      $region40: #{apply_node_func.5} parent=5 // pred_fallthru
        _
    $region6: #{apply_node_func.5} parent=1 // loop_footer
      %s16 = sadd.s32 1, %s12
    $region7: #{apply_node_func.5} parent=1 // loop_footer_branch
      %11 = sbr.rel target = $region3
    $region8: #{apply_node_func.5} parent=1 // loop_exit
      _
    %449 = vsyncpa [#allocation3], 1
    %s450 = scalar_lea.sflag [#allocation3], 1
    %451 = vsyncpa %s450, 1

// kernel: apply_node_func.3
$region0: #{apply_node_func.3}
  #allocation0 [shape = 'u32[]', space=smem, size = 0x4, offset = 0x4, fixed_abs, tag = 'smem constant byte address 0x4 - core index']
  #allocation1 [shape = 'u32[144,128]{1,0:T(1,128)}', space=vmem, size = 0x12000, scoped, tag = 'internal scratch']
  %s0 = inlined_call_operand.vmem [shape: bf16[608,128], index: 0, kind: input, shape index: {}]
  %s1 = inlined_call_operand.vmem [shape: bf16[128,128], index: 1, kind: input, shape index: {}]
  %s2 = inlined_call_operand.vmem [shape: bf16[608,128], index: 2, kind: output, shape index: {0}]
  %s3 = inlined_call_operand.vmem [shape: f32[2,1,128], index: 3, kind: output, shape index: {1}]
  %s4 = inlined_call_operand.vmem [shape: f32[2,1,128], index: 4, kind: output, shape index: {2}]
  %5 = xla_tuple %s2, %s3, %s4
  %s6 = sld [smem:[#allocation0]]
  $region61: #{apply_node_func.3} parent=0
    _
  %s8 = ssub.s32 1, %s6
  %s9 = scalar_select 0, %s8, %s6
  loop: start=0, step=1, limit=4
  $region2: #{apply_node_func.3} parent=0 // loop_pre_header
    _
  $region3: #{apply_node_func.3} parent=0 // loop_header
    %s11 = sphi 0, %s15
    %p12 = scmp.ge.s32.totalorder %s11, 4
    %s18 = sphi 0, %s30
    %s19 = sphi 0, %s26
    %s20 = sphi 0, %s18
    %s21 = sphi 0, %s19
    %s22 = sphi 0, %s20
    %s23 = sphi 0, %s21
    %s35 = sphi 0, %s37
    %s38 = sphi 0, %s35
    %s39 = sphi 0, %s38
    %s55 = sphi 0, %s39
    %s59 = sphi 0, %s59
    %s61 = sphi 0, %s59
    %s62 = sphi 0, %s61
    %s76 = sphi 0, %s62
    %s84 = sphi 0, %s86
    %s87 = sphi 0, %s84
    %s88 = sphi 0, %s87
    %s104 = sphi 0, %s88
    %s110 = sphi 0, %s112
    %s113 = sphi 0, %s110
    %s114 = sphi 0, %s113
    %s130 = sphi 0, %s114
    %s136 = sphi 0, %s138
    %s139 = sphi 0, %s136
    %s140 = sphi 0, %s139
    %s156 = sphi 0, %s140
  $region4: #{apply_node_func.3} parent=0 // loop_header_branch
    %14 = sbr.rel (%p12) target = $region8
  $region5: #{apply_node_func.3} parent=0 // loop_body
    %s16 = ssub.s32 %s11, 1
    %s17 = ssub.s32 %s11, 2
    %s24 = sadd.s32 1, %s19
    %p25 = scmp.ge.s32.totalorder %s24, 1
    %s26 = scalar_select %p25, 0, %s24
    %s27 = sadd.s32 1, %s18
    %s28 = scalar_select %p25, %s27, %s18
    %p29 = scmp.ge.s32.totalorder %s28, 2
    %s30 = scalar_select %p29, 0, %s28
    %s31 = sadd.s32 %s18, %s19
    %s32 = sadd.s32 %s30, %s26
    %s33 = ssub.s32 %s31, %s32
    %p34 = scmp.eq.s32.totalorder %s33, 0
    %s36 = sadd.s32 %s35, 1
    %s37 = scalar_select %p34, %s35, %s36
    %p40 = pneg %p34
    %p41 = scmp.eq.s32.totalorder %s11, 1
    %p42 = por %p40, %p41
    %p43 = scmp.ne.s32.totalorder %s35, %s38
    %p44 = scmp.eq.s32.totalorder %s11, 0
    %p45 = por %p43, %p44
    %p46 = scmp.ne.s32.totalorder %s35, %s38
    %p47 = scmp.eq.s32.totalorder %s16, 1
    %p48 = por %p46, %p47
    %p49 = scmp.ne.s32.totalorder %s38, %s39
    %p50 = scmp.eq.s32.totalorder %s16, 0
    %p51 = por %p49, %p50
    %p52 = scmp.ne.s32.totalorder %s38, %s39
    %p53 = scmp.eq.s32.totalorder %s17, 1
    %p54 = por %p52, %p53
    %p56 = scmp.ne.s32.totalorder %s39, %s55
    %p57 = scmp.eq.s32.totalorder %s17, 0
    %p58 = por %p56, %p57
    %s60 = sadd.s32 %s59, 1
    %p63 = scmp.eq.s32.totalorder %s11, 1
    %p64 = scmp.ne.s32.totalorder %s59, %s61
    %p65 = scmp.eq.s32.totalorder %s11, 0
    %p66 = por %p64, %p65
    %p67 = scmp.ne.s32.totalorder %s59, %s61
    %p68 = scmp.eq.s32.totalorder %s16, 1
    %p69 = por %p67, %p68
    %p70 = scmp.ne.s32.totalorder %s61, %s62
    %p71 = scmp.eq.s32.totalorder %s16, 0
    %p72 = por %p70, %p71
    %p73 = scmp.ne.s32.totalorder %s61, %s62
    %p74 = scmp.eq.s32.totalorder %s17, 1
    %p75 = por %p73, %p74
    %p77 = scmp.ne.s32.totalorder %s62, %s76
    %p78 = scmp.eq.s32.totalorder %s17, 0
    %p79 = por %p77, %p78
    %s80 = sadd.s32 %s18, %s19
    %s81 = sadd.s32 %s30, %s26
    %s82 = ssub.s32 %s80, %s81
    %p83 = scmp.eq.s32.totalorder %s82, 0
    %s85 = sadd.s32 %s84, 1
    %s86 = scalar_select %p83, %s84, %s85
    %p89 = pneg %p83
    %p90 = scmp.eq.s32.totalorder %s11, 1
    %p91 = por %p89, %p90
    %p92 = scmp.ne.s32.totalorder %s84, %s87
    %p93 = scmp.eq.s32.totalorder %s11, 0
    %p94 = por %p92, %p93
    %p95 = scmp.ne.s32.totalorder %s84, %s87
    %p96 = scmp.eq.s32.totalorder %s16, 1
    %p97 = por %p95, %p96
    %p98 = scmp.ne.s32.totalorder %s87, %s88
    %p99 = scmp.eq.s32.totalorder %s16, 0
    %p100 = por %p98, %p99
    %p101 = scmp.ne.s32.totalorder %s87, %s88
    %p102 = scmp.eq.s32.totalorder %s17, 1
    %p103 = por %p101, %p102
    %p105 = scmp.ne.s32.totalorder %s88, %s104
    %p106 = scmp.eq.s32.totalorder %s17, 0
    %p107 = por %p105, %p106
    %s108 = ssub.s32 %s18, %s30
    %p109 = scmp.eq.s32.totalorder %s108, 0
    %s111 = sadd.s32 %s110, 1
    %s112 = scalar_select %p109, %s110, %s111
    %p115 = pneg %p109
    %p116 = scmp.eq.s32.totalorder %s11, 1
    %p117 = por %p115, %p116
    %p118 = scmp.ne.s32.totalorder %s110, %s113
    %p119 = scmp.eq.s32.totalorder %s11, 0
    %p120 = por %p118, %p119
    %p121 = scmp.ne.s32.totalorder %s110, %s113
    %p122 = scmp.eq.s32.totalorder %s16, 1
    %p123 = por %p121, %p122
    %p124 = scmp.ne.s32.totalorder %s113, %s114
    %p125 = scmp.eq.s32.totalorder %s16, 0
    %p126 = por %p124, %p125
    %p127 = scmp.ne.s32.totalorder %s113, %s114
    %p128 = scmp.eq.s32.totalorder %s17, 1
    %p129 = por %p127, %p128
    %p131 = scmp.ne.s32.totalorder %s114, %s130
    %p132 = scmp.eq.s32.totalorder %s17, 0
    %p133 = por %p131, %p132
    %s134 = ssub.s32 %s18, %s30
    %p135 = scmp.eq.s32.totalorder %s134, 0
    %s137 = sadd.s32 %s136, 1
    %s138 = scalar_select %p135, %s136, %s137
    %p141 = pneg %p135
    %p142 = scmp.eq.s32.totalorder %s11, 1
    %p143 = por %p141, %p142
    %p144 = scmp.ne.s32.totalorder %s136, %s139
    %p145 = scmp.eq.s32.totalorder %s11, 0
    %p146 = por %p144, %p145
    %p147 = scmp.ne.s32.totalorder %s136, %s139
    %p148 = scmp.eq.s32.totalorder %s16, 1
    %p149 = por %p147, %p148
    %p150 = scmp.ne.s32.totalorder %s139, %s140
    %p151 = scmp.eq.s32.totalorder %s16, 0
    %p152 = por %p150, %p151
    %p153 = scmp.ne.s32.totalorder %s139, %s140
    %p154 = scmp.eq.s32.totalorder %s17, 1
    %p155 = por %p153, %p154
    %p157 = scmp.ne.s32.totalorder %s140, %s156
    %p158 = scmp.eq.s32.totalorder %s17, 0
    %p159 = por %p157, %p158
    %p160 = scmp.le.s32.totalorder 1, %s11
    %p161 = scmp.lt.s32.totalorder %s11, 3
    %p162 = pnand %p160, %p161
    %p163 = pneg %p162
    // Predicated region
    $region9: #{apply_node_func.3} parent=5 // pred_check
      _
    $region10: #{apply_node_func.3} parent=5 // pred_check_branch
      %165 = sbr.rel (%p162) target = $region12
    $region11: #{apply_node_func.3} parent=5 // pred_region
      %s166 = ssub.s32 %s11, 1
      // Predicated region
      $region13: #{apply_node_func.3} parent=11 // pred_check
        %p167 = pneg %p72
      $region14: #{apply_node_func.3} parent=11 // pred_check_branch
        %169 = sbr.rel (%p167) target = $region16
      $region15: #{apply_node_func.3} parent=11 // pred_region
        _
      $region16: #{apply_node_func.3} parent=11 // pred_fallthru
        _
    $region12: #{apply_node_func.3} parent=5 // pred_fallthru
      _
    %p170 = scmp.lt.s32.totalorder %s11, 2
    // Predicated region
    $region17: #{apply_node_func.3} parent=5 // pred_check
      %p171 = pneg %p170
    $region18: #{apply_node_func.3} parent=5 // pred_check_branch
      %173 = sbr.rel (%p171) target = $region20
    $region19: #{apply_node_func.3} parent=5 // pred_region
      // Predicated region
      $region21: #{apply_node_func.3} parent=19 // pred_check
        %p174 = pneg %p45
      $region22: #{apply_node_func.3} parent=19 // pred_check_branch
        %176 = sbr.rel (%p174) target = $region24
      $region23: #{apply_node_func.3} parent=19 // pred_region
        %s177 = sadd.s32 %s18, %s19
        %s178 = smul.u32 38, %s177
        %p179 = scmp.lt.s32.totalorder %s178, 75
        %s180 = scalar_select %p179, %s178, 75
        %s181 = smul.addr %s180, 4
        %s182 = scalar_lea.vmem %s0, %s181
        %s183 = sadd.s32 %s18, %s19
        %s184 = smul.u32 38, %s183
      $region24: #{apply_node_func.3} parent=19 // pred_fallthru
        _
    $region20: #{apply_node_func.3} parent=5 // pred_fallthru
      _
    %p185 = scmp.le.s32.totalorder 1, %s11
    %p186 = scmp.lt.s32.totalorder %s11, 3
    %p187 = pnand %p185, %p186
    %p188 = pneg %p187
    // Predicated region
    $region25: #{apply_node_func.3} parent=5 // pred_check
      _
    $region26: #{apply_node_func.3} parent=5 // pred_check_branch
      %190 = sbr.rel (%p187) target = $region28
    $region27: #{apply_node_func.3} parent=5 // pred_region
      %s191 = ssub.s32 %s11, 1
      %s192 = sadd.s32 %s20, %s21
      %s193 = smul.u32 38, %s192
      %p194 = scmp.lt.s32.totalorder %s193, 75
      %s195 = scalar_select %p194, %s193, 75
      %s196 = smul.addr %s195, 4
      %s197 = scalar_lea.vmem %s0, %s196
      %p198 = pneg %p51
      %p199 = pneg %p48
      %p200 = pneg %p72
      %p201 = pneg %p69
      %p202 = pneg %p100
      %p203 = pneg %p97
      %s204 = sadd.s32 %s20, %s21
      %s205 = smul.u32 38, %s204
      %p206 = scmp.lt.s32.totalorder %s205, 75
      %s207 = scalar_select %p206, %s205, 75
      %s208 = smul.addr %s207, 4
      %s209 = scalar_lea.vmem %s2, %s208
      %p210 = pneg %p126
      %p211 = pneg %p123
      %p212 = scmp.lt.s32.totalorder %s20, 1
      %s213 = scalar_select %p212, %s20, 1
      %s214 = scalar_lea.vmem %s3, %s213
      %p215 = pneg %p152
      %p216 = pneg %p149
      %p217 = scmp.lt.s32.totalorder %s20, 1
      %s218 = scalar_select %p217, %s20, 1
      %s219 = scalar_lea.vmem %s4, %s218
      %s220 = sadd.s32 %s20, %s21
      %s221 = smul.u32 38, %s220
      %p222 = scmp.lt.s32.totalorder %s221, 75
      %s223 = scalar_select %p222, %s221, 75
      %s224 = smul.addr %s223, 4
      %s225 = scalar_lea.vmem %s0, %s224
      %s226 = sadd.s32 %s20, %s21
      %s227 = smul.u32 38, %s226
      %s228 = sadd.s32 %s20, %s21
      %s229 = smul.u32 38, %s228
      %p230 = scmp.lt.s32.totalorder %s229, 75
      %s231 = scalar_select %p230, %s229, 75
      %s232 = smul.addr %s231, 4
      %s233 = scalar_lea.vmem %s2, %s232
      %s234 = sadd.s32 %s20, %s21
      %s235 = smul.u32 38, %s234
      %p236 = scmp.lt.s32.totalorder %s20, 1
      %s237 = scalar_select %p236, %s20, 1
      %s238 = scalar_lea.vmem %s3, %s237
      %p239 = scmp.lt.s32.totalorder %s20, 1
      %s240 = scalar_select %p239, %s20, 1
      %s241 = scalar_lea.vmem %s4, %s240
      %p243 = scmp.eq.s32.totalorder %s21, 0
      // Predicated region
      $region29: #{apply_node_func.3} parent=27 // pred_check
        %p244 = pneg %p243
      $region30: #{apply_node_func.3} parent=27 // pred_check_branch
        %246 = sbr.rel (%p244) target = $region32
      $region31: #{apply_node_func.3} parent=27 // pred_region
        %247 = vst [vmem:[%s238] sm:$0x1] 0.0
        %248 = vst [vmem:[%s241] sm:$0x1] 0.0
      $region32: #{apply_node_func.3} parent=27 // pred_fallthru
        _
      %v249 = vld [vmem:[%s225] sm:$0xf]
      %v250 = vld [vmem:[%s225 + $0x4] sm:$0xf]
      %v251 = vld [vmem:[%s225 + $0x8] sm:$0xf]
      %v252 = vld [vmem:[%s225 + $0xc] sm:$0xf]
      %v253 = vld [vmem:[%s225 + $0x10] sm:$0xf]
      %v254 = vld [vmem:[%s225 + $0x14] sm:$0xf]
      %v255 = vld [vmem:[%s225 + $0x18] sm:$0xf]
      %v256 = vld [vmem:[%s225 + $0x1c] sm:$0xf]
      %v257 = vld [vmem:[%s225 + $0x20] sm:$0xf]
      %v258 = vld [vmem:[%s225 + $0x24] sm:$0xf]
      %v259 = vld [vmem:[%s225 + $0x28] sm:$0xf]
      %v260 = vld [vmem:[%s225 + $0x2c] sm:$0xf]
      %v261 = vld [vmem:[%s225 + $0x30] sm:$0xf]
      %v262 = vld [vmem:[%s225 + $0x34] sm:$0xf]
      %v263 = vld [vmem:[%s225 + $0x38] sm:$0xf]
      %v264 = vld [vmem:[%s225 + $0x3c] sm:$0xf]
      %v265 = vld [vmem:[%s225 + $0x40] sm:$0xf]
      %v266 = vld [vmem:[%s225 + $0x44] sm:$0xf]
      %v267 = vld [vmem:[%s225 + $0x48] sm:$0xf]
      %v268 = vld [vmem:[%s225 + $0x4c] sm:$0xf]
      %v269 = vld [vmem:[%s225 + $0x50] sm:$0xf]
      %v270 = vld [vmem:[%s225 + $0x54] sm:$0xf]
      %v271 = vld [vmem:[%s225 + $0x58] sm:$0xf]
      %v272 = vld [vmem:[%s225 + $0x5c] sm:$0xf]
      %v273 = vld [vmem:[%s225 + $0x60] sm:$0xf]
      %v274 = vld [vmem:[%s225 + $0x64] sm:$0xf]
      %v275 = vld [vmem:[%s225 + $0x68] sm:$0xf]
      %v276 = vld [vmem:[%s225 + $0x6c] sm:$0xf]
      %v277 = vld [vmem:[%s225 + $0x70] sm:$0xf]
      %v278 = vld [vmem:[%s225 + $0x74] sm:$0xf]
      %v279 = vld [vmem:[%s225 + $0x78] sm:$0xf]
      %v280 = vld [vmem:[%s225 + $0x7c] sm:$0xf]
      %v281 = vld [vmem:[%s225 + $0x80] sm:$0xf]
      %v282 = vld [vmem:[%s225 + $0x84] sm:$0xf]
      %v283 = vld [vmem:[%s225 + $0x88] sm:$0xf]
      %v284 = vld [vmem:[%s225 + $0x8c] sm:$0xf]
      %v285 = vld [vmem:[%s225 + $0x90] sm:$0xf]
      %v286 = vld [vmem:[%s225 + $0x94] sm:$0xf]
      %v287 = vld [vmem:[%s1] sm:$0xf]
      %v288 = vld [vmem:[%s1 + $0x4] sm:$0xf]
      %v289 = vld [vmem:[%s1 + $0x8] sm:$0xf]
      %v290 = vld [vmem:[%s1 + $0xc] sm:$0xf]
      %v291 = vld [vmem:[%s1 + $0x10] sm:$0xf]
      %v292 = vld [vmem:[%s1 + $0x14] sm:$0xf]
      %v293 = vld [vmem:[%s1 + $0x18] sm:$0xf]
      %v294 = vld [vmem:[%s1 + $0x1c] sm:$0xf]
      %v295 = vld [vmem:[%s1 + $0x20] sm:$0xf]
      %v296 = vld [vmem:[%s1 + $0x24] sm:$0xf]
      %v297 = vld [vmem:[%s1 + $0x28] sm:$0xf]
      %v298 = vld [vmem:[%s1 + $0x2c] sm:$0xf]
      %v299 = vld [vmem:[%s1 + $0x30] sm:$0xf]
      %v300 = vld [vmem:[%s1 + $0x34] sm:$0xf]
      %v301 = vld [vmem:[%s1 + $0x38] sm:$0xf]
      %v302 = vld [vmem:[%s1 + $0x3c] sm:$0xf]
      %v341 = vunpack.c.l.b16 %v249
      %v342 = vunpack.c.l.b16 %v250
      %v343 = vunpack.c.l.b16 %v251
      %v344 = vunpack.c.l.b16 %v252
      %v345 = vunpack.c.l.b16 %v253
      %v346 = vunpack.c.l.b16 %v254
      %v347 = vunpack.c.l.b16 %v255
      %v348 = vunpack.c.l.b16 %v256
      %v349 = vunpack.c.l.b16 %v257
      %v350 = vunpack.c.l.b16 %v258
      %v351 = vunpack.c.l.b16 %v259
      %v352 = vunpack.c.l.b16 %v260
      %v353 = vunpack.c.l.b16 %v261
      %v354 = vunpack.c.l.b16 %v262
      %v355 = vunpack.c.l.b16 %v263
      %v356 = vunpack.c.l.b16 %v264
      %v357 = vunpack.c.l.b16 %v265
      %v358 = vunpack.c.l.b16 %v266
      %v359 = vunpack.c.l.b16 %v267
      %v360 = vunpack.c.l.b16 %v268
      %v361 = vunpack.c.l.b16 %v269
      %v362 = vunpack.c.l.b16 %v270
      %v363 = vunpack.c.l.b16 %v271
      %v364 = vunpack.c.l.b16 %v272
      %v365 = vunpack.c.l.b16 %v273
      %v366 = vunpack.c.l.b16 %v274
      %v367 = vunpack.c.l.b16 %v275
      %v368 = vunpack.c.l.b16 %v276
      %v369 = vunpack.c.l.b16 %v277
      %v370 = vunpack.c.l.b16 %v278
      %v371 = vunpack.c.l.b16 %v279
      %v372 = vunpack.c.l.b16 %v280
      %v373 = vunpack.c.l.b16 %v281
      %v374 = vunpack.c.l.b16 %v282
      %v375 = vunpack.c.l.b16 %v283
      %v376 = vunpack.c.l.b16 %v284
      %v377 = vunpack.c.l.b16 %v285
      %v378 = vunpack.c.l.b16 %v286
      %v379 = vpack.c.b16 %v342, %v341
      %v380 = vpack.c.b16 %v344, %v343
      %v381 = vpack.c.b16 %v346, %v345
      %v382 = vpack.c.b16 %v348, %v347
      %v383 = vpack.c.b16 %v350, %v349
      %v384 = vpack.c.b16 %v352, %v351
      %v385 = vpack.c.b16 %v354, %v353
      %v386 = vpack.c.b16 %v356, %v355
      %v387 = vpack.c.b16 %v358, %v357
      %v388 = vpack.c.b16 %v360, %v359
      %v389 = vpack.c.b16 %v362, %v361
      %v390 = vpack.c.b16 %v364, %v363
      %v391 = vpack.c.b16 %v366, %v365
      %v392 = vpack.c.b16 %v368, %v367
      %v393 = vpack.c.b16 %v370, %v369
      %v394 = vpack.c.b16 %v372, %v371
      %v395 = vpack.c.b16 %v374, %v373
      %v396 = vpack.c.b16 %v376, %v375
      %v397 = vpack.c.b16 %v378, %v377
      %v433 = vunpack.c.l.b16 %v287
      %v434 = vunpack.c.l.b16 %v288
      %v435 = vunpack.c.l.b16 %v289
      %v436 = vunpack.c.l.b16 %v290
      %v437 = vunpack.c.l.b16 %v291
      %v438 = vunpack.c.l.b16 %v292
      %v439 = vunpack.c.l.b16 %v293
      %v440 = vunpack.c.l.b16 %v294
      %v441 = vunpack.c.l.b16 %v295
      %v442 = vunpack.c.l.b16 %v296
      %v443 = vunpack.c.l.b16 %v297
      %v444 = vunpack.c.l.b16 %v298
      %v445 = vunpack.c.l.b16 %v299
      %v446 = vunpack.c.l.b16 %v300
      %v447 = vunpack.c.l.b16 %v301
      %v448 = vunpack.c.l.b16 %v302
      %v449 = vpack.c.b16 %v434, %v433
      %v450 = vpack.c.b16 %v436, %v435
      %v451 = vpack.c.b16 %v438, %v437
      %v452 = vpack.c.b16 %v440, %v439
      %v453 = vpack.c.b16 %v442, %v441
      %v454 = vpack.c.b16 %v444, %v443
      %v455 = vpack.c.b16 %v446, %v445
      %v456 = vpack.c.b16 %v448, %v447
      %465 = vmatprep.subr.bf16.mxu0 0
      %466 = vmatpush1.bf16.msra.mxu0 %v449
      %467 = vmatprep.subr.bf16.mxu0 0
      %468 = vmatpush1.bf16.msra.mxu0 %v450
      %469 = vmatprep.subr.bf16.mxu0 0
      %470 = vmatpush1.bf16.msra.mxu0 %v451
      %471 = vmatprep.subr.bf16.mxu0 0
      %472 = vmatpush1.bf16.msra.mxu0 %v452
      %473 = vmatprep.subr.bf16.mxu0 0
      %474 = vmatpush1.bf16.msra.mxu0 %v453
      %475 = vmatprep.subr.bf16.mxu0 0
      %476 = vmatpush1.bf16.msra.mxu0 %v454
      %477 = vmatprep.subr.bf16.mxu0 0
      %478 = vmatpush1.bf16.msra.mxu0 %v455
      %479 = vmatprep.subr.bf16.mxu0 0
      %480 = vmatpush1.bf16.msra.mxu0 %v456
      %481 = vmatprep.subr.bf16.mxu0 0
      %482 = vmatpush1.bf16.msra.mxu0 0
      %483 = vmatprep.subr.bf16.mxu0 0
      %484 = vmatpush1.bf16.msra.mxu0 0
      %485 = vmatprep.subr.bf16.mxu0 0
      %486 = vmatpush1.bf16.msra.mxu0 0
      %487 = vmatprep.subr.bf16.mxu0 0
      %488 = vmatpush1.bf16.msra.mxu0 0
      %489 = vmatprep.subr.bf16.mxu0 0
      %490 = vmatpush1.bf16.msra.mxu0 0
      %491 = vmatprep.subr.bf16.mxu0 0
      %492 = vmatpush1.bf16.msra.mxu0 0
      %493 = vmatprep.subr.bf16.mxu0 0
      %494 = vmatpush1.bf16.msra.mxu0 0
      %495 = vmatprep.subr.bf16.mxu0 0
      %496 = vmatpush1.bf16.msra.mxu0 0
      %497 = vmatprep.mubr.bf16.mxu0 0
      %498 = vmatmul.mubr.bf16.gmra.mrb[0].mxu0 %v379
      %v499 = vpop.f32.mrb[0].mxu0
      %v500 = vadd.f32 0.0, %v499
      %v501 = vpop.f32.mrb[0].mxu0
      %v502 = vpop.f32.mrb[0].mxu0
      %v503 = vadd.f32 0.0, %v502
      %v504 = vpop.f32.mrb[0].mxu0
      %505 = vmatprep.mubr.bf16.mxu0 0
      %506 = vmatmul.mubr.bf16.gmra.mrb[0].mxu0 %v380
      %v507 = vpop.f32.mrb[0].mxu0
      %v508 = vadd.f32 0.0, %v507
      %v509 = vpop.f32.mrb[0].mxu0
      %v510 = vpop.f32.mrb[0].mxu0
      %v511 = vadd.f32 0.0, %v510
      %v512 = vpop.f32.mrb[0].mxu0
      %513 = vmatprep.mubr.bf16.mxu0 0
      %514 = vmatmul.mubr.bf16.gmra.mrb[0].mxu0 %v381
      %v515 = vpop.f32.mrb[0].mxu0
      %v516 = vadd.f32 0.0, %v515
      %v517 = vpop.f32.mrb[0].mxu0
      %v518 = vpop.f32.mrb[0].mxu0
      %v519 = vadd.f32 0.0, %v518
      %v520 = vpop.f32.mrb[0].mxu0
      %521 = vmatprep.mubr.bf16.mxu0 0
      %522 = vmatmul.mubr.bf16.gmra.mrb[0].mxu0 %v382
      %v523 = vpop.f32.mrb[0].mxu0
      %v524 = vadd.f32 0.0, %v523
      %v525 = vpop.f32.mrb[0].mxu0
      %v526 = vpop.f32.mrb[0].mxu0
      %v527 = vadd.f32 0.0, %v526
      %v528 = vpop.f32.mrb[0].mxu0
      %529 = vmatprep.mubr.bf16.mxu0 0
      %530 = vmatmul.mubr.bf16.gmra.mrb[0].mxu0 %v383
      %v531 = vpop.f32.mrb[0].mxu0
      %v532 = vadd.f32 0.0, %v531
      %v533 = vpop.f32.mrb[0].mxu0
      %v534 = vpop.f32.mrb[0].mxu0
      %v535 = vadd.f32 0.0, %v534
      %v536 = vpop.f32.mrb[0].mxu0
      %537 = vmatprep.mubr.bf16.mxu0 0
      %538 = vmatmul.mubr.bf16.gmra.mrb[0].mxu0 %v384
      %v539 = vpop.f32.mrb[0].mxu0
      %v540 = vadd.f32 0.0, %v539
      %v541 = vpop.f32.mrb[0].mxu0
      %v542 = vpop.f32.mrb[0].mxu0
      %v543 = vadd.f32 0.0, %v542
      %v544 = vpop.f32.mrb[0].mxu0
      %545 = vmatprep.mubr.bf16.mxu0 0
      %546 = vmatmul.mubr.bf16.gmra.mrb[0].mxu0 %v385
      %v547 = vpop.f32.mrb[0].mxu0
      %v548 = vadd.f32 0.0, %v547
      %v549 = vpop.f32.mrb[0].mxu0
      %v550 = vpop.f32.mrb[0].mxu0
      %v551 = vadd.f32 0.0, %v550
      %v552 = vpop.f32.mrb[0].mxu0
      %553 = vmatprep.mubr.bf16.mxu0 0
      %554 = vmatmul.mubr.bf16.gmra.mrb[0].mxu0 %v386
      %v555 = vpop.f32.mrb[0].mxu0
      %v556 = vadd.f32 0.0, %v555
      %v557 = vpop.f32.mrb[0].mxu0
      %v558 = vpop.f32.mrb[0].mxu0
      %v559 = vadd.f32 0.0, %v558
      %v560 = vpop.f32.mrb[0].mxu0
      %561 = vmatprep.mubr.bf16.mxu0 0
      %562 = vmatmul.mubr.bf16.gmra.mrb[0].mxu0 %v387
      %v563 = vpop.f32.mrb[0].mxu0
      %v564 = vadd.f32 0.0, %v563
      %v565 = vpop.f32.mrb[0].mxu0
      %v566 = vpop.f32.mrb[0].mxu0
      %v567 = vadd.f32 0.0, %v566
      %v568 = vpop.f32.mrb[0].mxu0
      %569 = vmatprep.mubr.bf16.mxu0 0
      %570 = vmatmul.mubr.bf16.gmra.mrb[0].mxu0 %v388
      %v571 = vpop.f32.mrb[0].mxu0
      %v572 = vadd.f32 0.0, %v571
      %v573 = vpop.f32.mrb[0].mxu0
      %v574 = vpop.f32.mrb[0].mxu0
      %v575 = vadd.f32 0.0, %v574
      %v576 = vpop.f32.mrb[0].mxu0
      %577 = vmatprep.mubr.bf16.mxu0 0
      %578 = vmatmul.mubr.bf16.gmra.mrb[0].mxu0 %v389
      %v579 = vpop.f32.mrb[0].mxu0
      %v580 = vadd.f32 0.0, %v579
      %v581 = vpop.f32.mrb[0].mxu0
      %v582 = vpop.f32.mrb[0].mxu0
      %v583 = vadd.f32 0.0, %v582
      %v584 = vpop.f32.mrb[0].mxu0
      %585 = vmatprep.mubr.bf16.mxu0 0
      %586 = vmatmul.mubr.bf16.gmra.mrb[0].mxu0 %v390
      %v587 = vpop.f32.mrb[0].mxu0
      %v588 = vadd.f32 0.0, %v587
      %v589 = vpop.f32.mrb[0].mxu0
      %v590 = vpop.f32.mrb[0].mxu0
      %v591 = vadd.f32 0.0, %v590
      %v592 = vpop.f32.mrb[0].mxu0
      %593 = vmatprep.mubr.bf16.mxu0 0
      %594 = vmatmul.mubr.bf16.gmra.mrb[0].mxu0 %v391
      %v595 = vpop.f32.mrb[0].mxu0
      %v596 = vadd.f32 0.0, %v595
      %v597 = vpop.f32.mrb[0].mxu0
      %v598 = vpop.f32.mrb[0].mxu0
      %v599 = vadd.f32 0.0, %v598
      %v600 = vpop.f32.mrb[0].mxu0
      %601 = vmatprep.mubr.bf16.mxu0 0
      %602 = vmatmul.mubr.bf16.gmra.mrb[0].mxu0 %v392
      %v603 = vpop.f32.mrb[0].mxu0
      %v604 = vadd.f32 0.0, %v603
      %v605 = vpop.f32.mrb[0].mxu0
      %v606 = vpop.f32.mrb[0].mxu0
      %v607 = vadd.f32 0.0, %v606
      %v608 = vpop.f32.mrb[0].mxu0
      %609 = vmatprep.mubr.bf16.mxu0 0
      %610 = vmatmul.mubr.bf16.gmra.mrb[0].mxu0 %v393
      %v611 = vpop.f32.mrb[0].mxu0
      %v612 = vadd.f32 0.0, %v611
      %v613 = vpop.f32.mrb[0].mxu0
      %v614 = vpop.f32.mrb[0].mxu0
      %v615 = vadd.f32 0.0, %v614
      %v616 = vpop.f32.mrb[0].mxu0
      %617 = vmatprep.mubr.bf16.mxu0 0
      %618 = vmatmul.mubr.bf16.gmra.mrb[0].mxu0 %v394
      %v619 = vpop.f32.mrb[0].mxu0
      %v620 = vadd.f32 0.0, %v619
      %v621 = vpop.f32.mrb[0].mxu0
      %v622 = vpop.f32.mrb[0].mxu0
      %v623 = vadd.f32 0.0, %v622
      %v624 = vpop.f32.mrb[0].mxu0
      %625 = vmatprep.mubr.bf16.mxu0 0
      %626 = vmatmul.mubr.bf16.gmra.mrb[0].mxu0 %v395
      %v627 = vpop.f32.mrb[0].mxu0
      %v628 = vadd.f32 0.0, %v627
      %v629 = vpop.f32.mrb[0].mxu0
      %v630 = vpop.f32.mrb[0].mxu0
      %v631 = vadd.f32 0.0, %v630
      %v632 = vpop.f32.mrb[0].mxu0
      %633 = vmatprep.mubr.bf16.mxu0 0
      %634 = vmatmul.mubr.bf16.gmra.mrb[0].mxu0 %v396
      %v635 = vpop.f32.mrb[0].mxu0
      %v636 = vadd.f32 0.0, %v635
      %v637 = vpop.f32.mrb[0].mxu0
      %v638 = vpop.f32.mrb[0].mxu0
      %v639 = vadd.f32 0.0, %v638
      %v640 = vpop.f32.mrb[0].mxu0
      %641 = vmatprep.mubr.bf16.mxu0 0
      %642 = vmatmul.mubr.bf16.gmra.mrb[0].mxu0 %v397
      %v643 = vpop.f32.mrb[0].mxu0
      %v644 = vadd.f32 0.0, %v643
      %v645 = vpop.f32.mrb[0].mxu0
      %v646 = vpop.f32.mrb[0].mxu0
      %v647 = vadd.f32 0.0, %v646
      %v648 = vpop.f32.mrb[0].mxu0
      %649 = vdwg.mxu0
      %v650 = vpack.c.bf16 %v503, %v500
      %v651 = vpack.c.bf16 %v511, %v508
      %v652 = vpack.c.bf16 %v519, %v516
      %v653 = vpack.c.bf16 %v527, %v524
      %v654 = vpack.c.bf16 %v535, %v532
      %v655 = vpack.c.bf16 %v543, %v540
      %v656 = vpack.c.bf16 %v551, %v548
      %v657 = vpack.c.bf16 %v559, %v556
      %v658 = vpack.c.bf16 %v567, %v564
      %v659 = vpack.c.bf16 %v575, %v572
      %v660 = vpack.c.bf16 %v583, %v580
      %v661 = vpack.c.bf16 %v591, %v588
      %v662 = vpack.c.bf16 %v599, %v596
      %v663 = vpack.c.bf16 %v607, %v604
      %v664 = vpack.c.bf16 %v615, %v612
      %v665 = vpack.c.bf16 %v623, %v620
      %v666 = vpack.c.bf16 %v631, %v628
      %v667 = vpack.c.bf16 %v639, %v636
      %v668 = vpack.c.bf16 %v647, %v644
      %v688 = vunpack.c.l.b16 %v650
      %v689 = vunpack.c.h.b16 %v650
      %v690 = vunpack.c.l.b16 %v651
      %v691 = vunpack.c.h.b16 %v651
      %v692 = vunpack.c.l.b16 %v652
      %v693 = vunpack.c.h.b16 %v652
      %v694 = vunpack.c.l.b16 %v653
      %v695 = vunpack.c.h.b16 %v653
      %v696 = vunpack.c.l.b16 %v654
      %v697 = vunpack.c.h.b16 %v654
      %v698 = vunpack.c.l.b16 %v655
      %v699 = vunpack.c.h.b16 %v655
      %v700 = vunpack.c.l.b16 %v656
      %v701 = vunpack.c.h.b16 %v656
      %v702 = vunpack.c.l.b16 %v657
      %v703 = vunpack.c.h.b16 %v657
      %v704 = vunpack.c.l.b16 %v658
      %v705 = vunpack.c.h.b16 %v658
      %v706 = vunpack.c.l.b16 %v659
      %v707 = vunpack.c.h.b16 %v659
      %v708 = vunpack.c.l.b16 %v660
      %v709 = vunpack.c.h.b16 %v660
      %v710 = vunpack.c.l.b16 %v661
      %v711 = vunpack.c.h.b16 %v661
      %v712 = vunpack.c.l.b16 %v662
      %v713 = vunpack.c.h.b16 %v662
      %v714 = vunpack.c.l.b16 %v663
      %v715 = vunpack.c.h.b16 %v663
      %v716 = vunpack.c.l.b16 %v664
      %v717 = vunpack.c.h.b16 %v664
      %v718 = vunpack.c.l.b16 %v665
      %v719 = vunpack.c.h.b16 %v665
      %v720 = vunpack.c.l.b16 %v666
      %v721 = vunpack.c.h.b16 %v666
      %v722 = vunpack.c.l.b16 %v667
      %v723 = vunpack.c.h.b16 %v667
      %v724 = vunpack.c.l.b16 %v668
      %v725 = vunpack.c.h.b16 %v668
      %v726 = vpack.c.b16 %v688, %v688
      %v727 = vpack.c.b16 %v689, %v689
      %v728 = vpack.c.b16 %v690, %v690
      %v729 = vpack.c.b16 %v691, %v691
      %v730 = vpack.c.b16 %v692, %v692
      %v731 = vpack.c.b16 %v693, %v693
      %v732 = vpack.c.b16 %v694, %v694
      %v733 = vpack.c.b16 %v695, %v695
      %v734 = vpack.c.b16 %v696, %v696
      %v735 = vpack.c.b16 %v697, %v697
      %v736 = vpack.c.b16 %v698, %v698
      %v737 = vpack.c.b16 %v699, %v699
      %v738 = vpack.c.b16 %v700, %v700
      %v739 = vpack.c.b16 %v701, %v701
      %v740 = vpack.c.b16 %v702, %v702
      %v741 = vpack.c.b16 %v703, %v703
      %v742 = vpack.c.b16 %v704, %v704
      %v743 = vpack.c.b16 %v705, %v705
      %v744 = vpack.c.b16 %v706, %v706
      %v745 = vpack.c.b16 %v707, %v707
      %v746 = vpack.c.b16 %v708, %v708
      %v747 = vpack.c.b16 %v709, %v709
      %v748 = vpack.c.b16 %v710, %v710
      %v749 = vpack.c.b16 %v711, %v711
      %v750 = vpack.c.b16 %v712, %v712
      %v751 = vpack.c.b16 %v713, %v713
      %v752 = vpack.c.b16 %v714, %v714
      %v753 = vpack.c.b16 %v715, %v715
      %v754 = vpack.c.b16 %v716, %v716
      %v755 = vpack.c.b16 %v717, %v717
      %v756 = vpack.c.b16 %v718, %v718
      %v757 = vpack.c.b16 %v719, %v719
      %v758 = vpack.c.b16 %v720, %v720
      %v759 = vpack.c.b16 %v721, %v721
      %v760 = vpack.c.b16 %v722, %v722
      %v761 = vpack.c.b16 %v723, %v723
      %v762 = vpack.c.b16 %v724, %v724
      %v763 = vpack.c.b16 %v725, %v725
      %802 = vst [vmem:[%s233] sm:$0xf] %v726
      %803 = vst [vmem:[%s233 + $0x4] sm:$0xf] %v727
      %804 = vst [vmem:[%s233 + $0x8] sm:$0xf] %v728
      %805 = vst [vmem:[%s233 + $0xc] sm:$0xf] %v729
      %806 = vst [vmem:[%s233 + $0x10] sm:$0xf] %v730
      %807 = vst [vmem:[%s233 + $0x14] sm:$0xf] %v731
      %808 = vst [vmem:[%s233 + $0x18] sm:$0xf] %v732
      %809 = vst [vmem:[%s233 + $0x1c] sm:$0xf] %v733
      %810 = vst [vmem:[%s233 + $0x20] sm:$0xf] %v734
      %811 = vst [vmem:[%s233 + $0x24] sm:$0xf] %v735
      %812 = vst [vmem:[%s233 + $0x28] sm:$0xf] %v736
      %813 = vst [vmem:[%s233 + $0x2c] sm:$0xf] %v737
      %814 = vst [vmem:[%s233 + $0x30] sm:$0xf] %v738
      %815 = vst [vmem:[%s233 + $0x34] sm:$0xf] %v739
      %816 = vst [vmem:[%s233 + $0x38] sm:$0xf] %v740
      %817 = vst [vmem:[%s233 + $0x3c] sm:$0xf] %v741
      %818 = vst [vmem:[%s233 + $0x40] sm:$0xf] %v742
      %819 = vst [vmem:[%s233 + $0x44] sm:$0xf] %v743
      %820 = vst [vmem:[%s233 + $0x48] sm:$0xf] %v744
      %821 = vst [vmem:[%s233 + $0x4c] sm:$0xf] %v745
      %822 = vst [vmem:[%s233 + $0x50] sm:$0xf] %v746
      %823 = vst [vmem:[%s233 + $0x54] sm:$0xf] %v747
      %824 = vst [vmem:[%s233 + $0x58] sm:$0xf] %v748
      %825 = vst [vmem:[%s233 + $0x5c] sm:$0xf] %v749
      %826 = vst [vmem:[%s233 + $0x60] sm:$0xf] %v750
      %827 = vst [vmem:[%s233 + $0x64] sm:$0xf] %v751
      %828 = vst [vmem:[%s233 + $0x68] sm:$0xf] %v752
      %829 = vst [vmem:[%s233 + $0x6c] sm:$0xf] %v753
      %830 = vst [vmem:[%s233 + $0x70] sm:$0xf] %v754
      %831 = vst [vmem:[%s233 + $0x74] sm:$0xf] %v755
      %832 = vst [vmem:[%s233 + $0x78] sm:$0xf] %v756
      %833 = vst [vmem:[%s233 + $0x7c] sm:$0xf] %v757
      %834 = vst [vmem:[%s233 + $0x80] sm:$0xf] %v758
      %835 = vst [vmem:[%s233 + $0x84] sm:$0xf] %v759
      %836 = vst [vmem:[%s233 + $0x88] sm:$0xf] %v760
      %837 = vst [vmem:[%s233 + $0x8c] sm:$0xf] %v761
      %838 = vst [vmem:[%s233 + $0x90] sm:$0xf] %v762
      %839 = vst [vmem:[%s233 + $0x94] sm:$0xf] %v763
      %v840 = vld [vmem:[%s238] sm:$0x1]
      %v841 = vadd.f32 %v500, %v503
      %v842 = vadd.f32 %v841, %v508
      %v843 = vadd.f32 %v842, %v511
      %v844 = vadd.f32 %v843, %v516
      %v845 = vadd.f32 %v844, %v519
      %v846 = vadd.f32 %v845, %v524
      %v847 = vadd.f32 %v846, %v527
      %v848 = vadd.f32 %v847, %v532
      %v849 = vadd.f32 %v848, %v535
      %v850 = vadd.f32 %v849, %v540
      %v851 = vadd.f32 %v850, %v543
      %v852 = vadd.f32 %v851, %v548
      %v853 = vadd.f32 %v852, %v551
      %v854 = vadd.f32 %v853, %v556
      %v855 = vadd.f32 %v854, %v559
      %v856 = vadd.f32 %v855, %v564
      %v857 = vadd.f32 %v856, %v567
      %v858 = vadd.f32 %v857, %v572
      %v859 = vadd.f32 %v858, %v575
      %v860 = vadd.f32 %v859, %v580
      %v861 = vadd.f32 %v860, %v583
      %v862 = vadd.f32 %v861, %v588
      %v863 = vadd.f32 %v862, %v591
      %v864 = vadd.f32 %v863, %v596
      %v865 = vadd.f32 %v864, %v599
      %v866 = vadd.f32 %v865, %v604
      %v867 = vadd.f32 %v866, %v607
      %v868 = vadd.f32 %v867, %v612
      %v869 = vadd.f32 %v868, %v615
      %v870 = vadd.f32 %v869, %v620
      %v871 = vadd.f32 %v870, %v623
      %v872 = vadd.f32 %v871, %v628
      %v873 = vadd.f32 %v872, %v631
      %v874 = vadd.f32 %v873, %v636
      %v875 = vadd.f32 %v874, %v639
      %v876 = vadd.f32 %v875, %v644
      %v877 = vadd.f32 %v876, %v647
      %v878 = vrot.slane %v877, 4
      %v879 = vadd.f32 %v877, %v878
      %v880 = vrot.slane %v879, 2
      %v881 = vadd.f32 %v879, %v880
      %v882 = vrot.slane %v881, 1
      %v883 = vadd.f32 %v881, %v882
      %v884 = vadd.f32 %v840, %v883
      %885 = vst [vmem:[%s238] sm:$0x1] %v884
      %v886 = vld [vmem:[%s241] sm:$0x1]
      %v887 = vmul.f32 %v500, %v500
      %v888 = vmul.f32 %v503, %v503
      %v889 = vmul.f32 %v508, %v508
      %v890 = vmul.f32 %v511, %v511
      %v891 = vmul.f32 %v516, %v516
      %v892 = vmul.f32 %v519, %v519
      %v893 = vmul.f32 %v524, %v524
      %v894 = vmul.f32 %v527, %v527
      %v895 = vmul.f32 %v532, %v532
      %v896 = vmul.f32 %v535, %v535
      %v897 = vmul.f32 %v540, %v540
      %v898 = vmul.f32 %v543, %v543
      %v899 = vmul.f32 %v548, %v548
      %v900 = vmul.f32 %v551, %v551
      %v901 = vmul.f32 %v556, %v556
      %v902 = vmul.f32 %v559, %v559
      %v903 = vmul.f32 %v564, %v564
      %v904 = vmul.f32 %v567, %v567
      %v905 = vmul.f32 %v572, %v572
      %v906 = vmul.f32 %v575, %v575
      %v907 = vmul.f32 %v580, %v580
      %v908 = vmul.f32 %v583, %v583
      %v909 = vmul.f32 %v588, %v588
      %v910 = vmul.f32 %v591, %v591
      %v911 = vmul.f32 %v596, %v596
      %v912 = vmul.f32 %v599, %v599
      %v913 = vmul.f32 %v604, %v604
      %v914 = vmul.f32 %v607, %v607
      %v915 = vmul.f32 %v612, %v612
      %v916 = vmul.f32 %v615, %v615
      %v917 = vmul.f32 %v620, %v620
      %v918 = vmul.f32 %v623, %v623
      %v919 = vmul.f32 %v628, %v628
      %v920 = vmul.f32 %v631, %v631
      %v921 = vmul.f32 %v636, %v636
      %v922 = vmul.f32 %v639, %v639
      %v923 = vmul.f32 %v644, %v644
      %v924 = vmul.f32 %v647, %v647
      %v925 = vadd.f32 %v887, %v888
      %v926 = vadd.f32 %v925, %v889
      %v927 = vadd.f32 %v926, %v890
      %v928 = vadd.f32 %v927, %v891
      %v929 = vadd.f32 %v928, %v892
      %v930 = vadd.f32 %v929, %v893
      %v931 = vadd.f32 %v930, %v894
      %v932 = vadd.f32 %v931, %v895
      %v933 = vadd.f32 %v932, %v896
      %v934 = vadd.f32 %v933, %v897
      %v935 = vadd.f32 %v934, %v898
      %v936 = vadd.f32 %v935, %v899
      %v937 = vadd.f32 %v936, %v900
      %v938 = vadd.f32 %v937, %v901
      %v939 = vadd.f32 %v938, %v902
      %v940 = vadd.f32 %v939, %v903
      %v941 = vadd.f32 %v940, %v904
      %v942 = vadd.f32 %v941, %v905
      %v943 = vadd.f32 %v942, %v906
      %v944 = vadd.f32 %v943, %v907
      %v945 = vadd.f32 %v944, %v908
      %v946 = vadd.f32 %v945, %v909
      %v947 = vadd.f32 %v946, %v910
      %v948 = vadd.f32 %v947, %v911
      %v949 = vadd.f32 %v948, %v912
      %v950 = vadd.f32 %v949, %v913
      %v951 = vadd.f32 %v950, %v914
      %v952 = vadd.f32 %v951, %v915
      %v953 = vadd.f32 %v952, %v916
      %v954 = vadd.f32 %v953, %v917
      %v955 = vadd.f32 %v954, %v918
      %v956 = vadd.f32 %v955, %v919
      %v957 = vadd.f32 %v956, %v920
      %v958 = vadd.f32 %v957, %v921
      %v959 = vadd.f32 %v958, %v922
      %v960 = vadd.f32 %v959, %v923
      %v961 = vadd.f32 %v960, %v924
      %v962 = vrot.slane %v961, 4
      %v963 = vadd.f32 %v961, %v962
      %v964 = vrot.slane %v963, 2
      %v965 = vadd.f32 %v963, %v964
      %v966 = vrot.slane %v965, 1
      %v967 = vadd.f32 %v965, %v966
      %v968 = vadd.f32 %v886, %v967
      %969 = vst [vmem:[%s241] sm:$0x1] %v968
      %s970 = sadd.s32 %s20, %s21
      %s971 = smul.u32 38, %s970
      %p972 = scmp.lt.s32.totalorder %s971, 75
      %s973 = scalar_select %p972, %s971, 75
      %s974 = smul.addr %s973, 4
      %s975 = scalar_lea.vmem %s2, %s974
      %p976 = scmp.lt.s32.totalorder %s20, 1
      %s977 = scalar_select %p976, %s20, 1
      %s978 = scalar_lea.vmem %s3, %s977
      %p979 = scmp.lt.s32.totalorder %s20, 1
      %s980 = scalar_select %p979, %s20, 1
      %s981 = scalar_lea.vmem %s4, %s980
      // Predicated region
      $region33: #{apply_node_func.3} parent=27 // pred_check
        %p982 = pneg %p97
      $region34: #{apply_node_func.3} parent=27 // pred_check_branch
        %984 = sbr.rel (%p982) target = $region36
      $region35: #{apply_node_func.3} parent=27 // pred_region
        %s985 = sadd.s32 %s20, %s21
        %s986 = smul.u32 38, %s985
      $region36: #{apply_node_func.3} parent=27 // pred_fallthru
        _
      // Predicated region
      $region37: #{apply_node_func.3} parent=27 // pred_check
        %p987 = pneg %p123
      $region38: #{apply_node_func.3} parent=27 // pred_check_branch
        %989 = sbr.rel (%p987) target = $region40
      $region39: #{apply_node_func.3} parent=27 // pred_region
        _
      $region40: #{apply_node_func.3} parent=27 // pred_fallthru
        _
      // Predicated region
      $region41: #{apply_node_func.3} parent=27 // pred_check
        %p990 = pneg %p149
      $region42: #{apply_node_func.3} parent=27 // pred_check_branch
        %992 = sbr.rel (%p990) target = $region44
      $region43: #{apply_node_func.3} parent=27 // pred_region
        _
      $region44: #{apply_node_func.3} parent=27 // pred_fallthru
        _
    $region28: #{apply_node_func.3} parent=5 // pred_fallthru
      _
    %p993 = scmp.le.s32.totalorder 2, %s11
    // Predicated region
    $region45: #{apply_node_func.3} parent=5 // pred_check
      %p994 = pneg %p993
    $region46: #{apply_node_func.3} parent=5 // pred_check_branch
      %996 = sbr.rel (%p994) target = $region48
    $region47: #{apply_node_func.3} parent=5 // pred_region
      %s997 = ssub.s32 %s11, 2
      // Predicated region
      $region49: #{apply_node_func.3} parent=47 // pred_check
        %p998 = pneg %p103
      $region50: #{apply_node_func.3} parent=47 // pred_check_branch
        %1000 = sbr.rel (%p998) target = $region52
      $region51: #{apply_node_func.3} parent=47 // pred_region
        %s1001 = sadd.s32 %s22, %s23
        %s1002 = smul.u32 38, %s1001
        %p1003 = scmp.lt.s32.totalorder %s1002, 75
        %s1004 = scalar_select %p1003, %s1002, 75
        %s1005 = smul.addr %s1004, 4
        %s1006 = scalar_lea.vmem %s2, %s1005
      $region52: #{apply_node_func.3} parent=47 // pred_fallthru
        _
      // Predicated region
      $region53: #{apply_node_func.3} parent=47 // pred_check
        %p1007 = pneg %p129
      $region54: #{apply_node_func.3} parent=47 // pred_check_branch
        %1009 = sbr.rel (%p1007) target = $region56
      $region55: #{apply_node_func.3} parent=47 // pred_region
        %p1010 = scmp.lt.s32.totalorder %s22, 1
        %s1011 = scalar_select %p1010, %s22, 1
        %s1012 = scalar_lea.vmem %s3, %s1011
      $region56: #{apply_node_func.3} parent=47 // pred_fallthru
        _
      // Predicated region
      $region57: #{apply_node_func.3} parent=47 // pred_check
        %p1013 = pneg %p155
      $region58: #{apply_node_func.3} parent=47 // pred_check_branch
        %1015 = sbr.rel (%p1013) target = $region60
      $region59: #{apply_node_func.3} parent=47 // pred_region
        %p1016 = scmp.lt.s32.totalorder %s22, 1
        %s1017 = scalar_select %p1016, %s22, 1
        %s1018 = scalar_lea.vmem %s4, %s1017
      $region60: #{apply_node_func.3} parent=47 // pred_fallthru
        _
    $region48: #{apply_node_func.3} parent=5 // pred_fallthru
      _
  $region6: #{apply_node_func.3} parent=0 // loop_footer
    %s15 = sadd.s32 1, %s11
  $region7: #{apply_node_func.3} parent=0 // loop_footer_branch
    %10 = sbr.rel target = $region3
  $region8: #{apply_node_func.3} parent=0 // loop_exit
    _

// kernel: apply_node_func.4
$region0: #{apply_node_func.4}
  #allocation0 [shape = 'u32[]', space=smem, size = 0x4, offset = 0x4, fixed_abs, tag = 'smem constant byte address 0x4 - core index']
  #allocation1 [shape = 'u32[144,128]{1,0:T(1,128)}', space=vmem, size = 0x12000, scoped, tag = 'internal scratch']
  %s0 = inlined_call_operand.vmem [shape: bf16[608,128], index: 0, kind: input, shape index: {}]
  %s1 = inlined_call_operand.vmem [shape: f32[1,128], index: 1, kind: input, shape index: {}]
  %s2 = inlined_call_operand.vmem [shape: f32[1,128], index: 2, kind: input, shape index: {}]
  %s3 = inlined_call_operand.vmem [shape: bf16[128,128], index: 3, kind: input, shape index: {}]
  %s4 = inlined_call_operand.vmem [shape: bf16[608,128], index: 4, kind: output, shape index: {0}]
  %s5 = inlined_call_operand.vmem [shape: f32[2,1,128], index: 5, kind: output, shape index: {1}]
  %s6 = inlined_call_operand.vmem [shape: f32[2,1,128], index: 6, kind: output, shape index: {2}]
  %7 = xla_tuple %s4, %s5, %s6
  %s8 = sld [smem:[#allocation0]]
  $region77: #{apply_node_func.4} parent=0
    _
  %s10 = ssub.s32 1, %s8
  %s11 = scalar_select 0, %s10, %s8
  loop: start=0, step=1, limit=4
  $region2: #{apply_node_func.4} parent=0 // loop_pre_header
    _
  $region3: #{apply_node_func.4} parent=0 // loop_header
    %s13 = sphi 0, %s17
    %p14 = scmp.ge.s32.totalorder %s13, 4
    %s20 = sphi 0, %s32
    %s21 = sphi 0, %s28
    %s22 = sphi 0, %s20
    %s23 = sphi 0, %s21
    %s24 = sphi 0, %s22
    %s25 = sphi 0, %s23
    %s37 = sphi 0, %s39
    %s40 = sphi 0, %s37
    %s41 = sphi 0, %s40
    %s57 = sphi 0, %s41
    %s61 = sphi 0, %s61
    %s63 = sphi 0, %s61
    %s64 = sphi 0, %s63
    %s78 = sphi 0, %s64
    %s82 = sphi 0, %s82
    %s84 = sphi 0, %s82
    %s85 = sphi 0, %s84
    %s99 = sphi 0, %s85
    %s103 = sphi 0, %s103
    %s105 = sphi 0, %s103
    %s106 = sphi 0, %s105
    %s120 = sphi 0, %s106
    %s128 = sphi 0, %s130
    %s131 = sphi 0, %s128
    %s132 = sphi 0, %s131
    %s148 = sphi 0, %s132
    %s154 = sphi 0, %s156
    %s157 = sphi 0, %s154
    %s158 = sphi 0, %s157
    %s174 = sphi 0, %s158
    %s180 = sphi 0, %s182
    %s183 = sphi 0, %s180
    %s184 = sphi 0, %s183
    %s200 = sphi 0, %s184
  $region4: #{apply_node_func.4} parent=0 // loop_header_branch
    %16 = sbr.rel (%p14) target = $region8
  $region5: #{apply_node_func.4} parent=0 // loop_body
    %s18 = ssub.s32 %s13, 1
    %s19 = ssub.s32 %s13, 2
    %s26 = sadd.s32 1, %s21
    %p27 = scmp.ge.s32.totalorder %s26, 1
    %s28 = scalar_select %p27, 0, %s26
    %s29 = sadd.s32 1, %s20
    %s30 = scalar_select %p27, %s29, %s20
    %p31 = scmp.ge.s32.totalorder %s30, 2
    %s32 = scalar_select %p31, 0, %s30
    %s33 = sadd.s32 %s20, %s21
    %s34 = sadd.s32 %s32, %s28
    %s35 = ssub.s32 %s33, %s34
    %p36 = scmp.eq.s32.totalorder %s35, 0
    %s38 = sadd.s32 %s37, 1
    %s39 = scalar_select %p36, %s37, %s38
    %p42 = pneg %p36
    %p43 = scmp.eq.s32.totalorder %s13, 1
    %p44 = por %p42, %p43
    %p45 = scmp.ne.s32.totalorder %s37, %s40
    %p46 = scmp.eq.s32.totalorder %s13, 0
    %p47 = por %p45, %p46
    %p48 = scmp.ne.s32.totalorder %s37, %s40
    %p49 = scmp.eq.s32.totalorder %s18, 1
    %p50 = por %p48, %p49
    %p51 = scmp.ne.s32.totalorder %s40, %s41
    %p52 = scmp.eq.s32.totalorder %s18, 0
    %p53 = por %p51, %p52
    %p54 = scmp.ne.s32.totalorder %s40, %s41
    %p55 = scmp.eq.s32.totalorder %s19, 1
    %p56 = por %p54, %p55
    %p58 = scmp.ne.s32.totalorder %s41, %s57
    %p59 = scmp.eq.s32.totalorder %s19, 0
    %p60 = por %p58, %p59
    %s62 = sadd.s32 %s61, 1
    %p65 = scmp.eq.s32.totalorder %s13, 1
    %p66 = scmp.ne.s32.totalorder %s61, %s63
    %p67 = scmp.eq.s32.totalorder %s13, 0
    %p68 = por %p66, %p67
    %p69 = scmp.ne.s32.totalorder %s61, %s63
    %p70 = scmp.eq.s32.totalorder %s18, 1
    %p71 = por %p69, %p70
    %p72 = scmp.ne.s32.totalorder %s63, %s64
    %p73 = scmp.eq.s32.totalorder %s18, 0
    %p74 = por %p72, %p73
    %p75 = scmp.ne.s32.totalorder %s63, %s64
    %p76 = scmp.eq.s32.totalorder %s19, 1
    %p77 = por %p75, %p76
    %p79 = scmp.ne.s32.totalorder %s64, %s78
    %p80 = scmp.eq.s32.totalorder %s19, 0
    %p81 = por %p79, %p80
    %s83 = sadd.s32 %s82, 1
    %p86 = scmp.eq.s32.totalorder %s13, 1
    %p87 = scmp.ne.s32.totalorder %s82, %s84
    %p88 = scmp.eq.s32.totalorder %s13, 0
    %p89 = por %p87, %p88
    %p90 = scmp.ne.s32.totalorder %s82, %s84
    %p91 = scmp.eq.s32.totalorder %s18, 1
    %p92 = por %p90, %p91
    %p93 = scmp.ne.s32.totalorder %s84, %s85
    %p94 = scmp.eq.s32.totalorder %s18, 0
    %p95 = por %p93, %p94
    %p96 = scmp.ne.s32.totalorder %s84, %s85
    %p97 = scmp.eq.s32.totalorder %s19, 1
    %p98 = por %p96, %p97
    %p100 = scmp.ne.s32.totalorder %s85, %s99
    %p101 = scmp.eq.s32.totalorder %s19, 0
    %p102 = por %p100, %p101
    %s104 = sadd.s32 %s103, 1
    %p107 = scmp.eq.s32.totalorder %s13, 1
    %p108 = scmp.ne.s32.totalorder %s103, %s105
    %p109 = scmp.eq.s32.totalorder %s13, 0
    %p110 = por %p108, %p109
    %p111 = scmp.ne.s32.totalorder %s103, %s105
    %p112 = scmp.eq.s32.totalorder %s18, 1
    %p113 = por %p111, %p112
    %p114 = scmp.ne.s32.totalorder %s105, %s106
    %p115 = scmp.eq.s32.totalorder %s18, 0
    %p116 = por %p114, %p115
    %p117 = scmp.ne.s32.totalorder %s105, %s106
    %p118 = scmp.eq.s32.totalorder %s19, 1
    %p119 = por %p117, %p118
    %p121 = scmp.ne.s32.totalorder %s106, %s120
    %p122 = scmp.eq.s32.totalorder %s19, 0
    %p123 = por %p121, %p122
    %s124 = sadd.s32 %s20, %s21
    %s125 = sadd.s32 %s32, %s28
    %s126 = ssub.s32 %s124, %s125
    %p127 = scmp.eq.s32.totalorder %s126, 0
    %s129 = sadd.s32 %s128, 1
    %s130 = scalar_select %p127, %s128, %s129
    %p133 = pneg %p127
    %p134 = scmp.eq.s32.totalorder %s13, 1
    %p135 = por %p133, %p134
    %p136 = scmp.ne.s32.totalorder %s128, %s131
    %p137 = scmp.eq.s32.totalorder %s13, 0
    %p138 = por %p136, %p137
    %p139 = scmp.ne.s32.totalorder %s128, %s131
    %p140 = scmp.eq.s32.totalorder %s18, 1
    %p141 = por %p139, %p140
    %p142 = scmp.ne.s32.totalorder %s131, %s132
    %p143 = scmp.eq.s32.totalorder %s18, 0
    %p144 = por %p142, %p143
    %p145 = scmp.ne.s32.totalorder %s131, %s132
    %p146 = scmp.eq.s32.totalorder %s19, 1
    %p147 = por %p145, %p146
    %p149 = scmp.ne.s32.totalorder %s132, %s148
    %p150 = scmp.eq.s32.totalorder %s19, 0
    %p151 = por %p149, %p150
    %s152 = ssub.s32 %s20, %s32
    %p153 = scmp.eq.s32.totalorder %s152, 0
    %s155 = sadd.s32 %s154, 1
    %s156 = scalar_select %p153, %s154, %s155
    %p159 = pneg %p153
    %p160 = scmp.eq.s32.totalorder %s13, 1
    %p161 = por %p159, %p160
    %p162 = scmp.ne.s32.totalorder %s154, %s157
    %p163 = scmp.eq.s32.totalorder %s13, 0
    %p164 = por %p162, %p163
    %p165 = scmp.ne.s32.totalorder %s154, %s157
    %p166 = scmp.eq.s32.totalorder %s18, 1
    %p167 = por %p165, %p166
    %p168 = scmp.ne.s32.totalorder %s157, %s158
    %p169 = scmp.eq.s32.totalorder %s18, 0
    %p170 = por %p168, %p169
    %p171 = scmp.ne.s32.totalorder %s157, %s158
    %p172 = scmp.eq.s32.totalorder %s19, 1
    %p173 = por %p171, %p172
    %p175 = scmp.ne.s32.totalorder %s158, %s174
    %p176 = scmp.eq.s32.totalorder %s19, 0
    %p177 = por %p175, %p176
    %s178 = ssub.s32 %s20, %s32
    %p179 = scmp.eq.s32.totalorder %s178, 0
    %s181 = sadd.s32 %s180, 1
    %s182 = scalar_select %p179, %s180, %s181
    %p185 = pneg %p179
    %p186 = scmp.eq.s32.totalorder %s13, 1
    %p187 = por %p185, %p186
    %p188 = scmp.ne.s32.totalorder %s180, %s183
    %p189 = scmp.eq.s32.totalorder %s13, 0
    %p190 = por %p188, %p189
    %p191 = scmp.ne.s32.totalorder %s180, %s183
    %p192 = scmp.eq.s32.totalorder %s18, 1
    %p193 = por %p191, %p192
    %p194 = scmp.ne.s32.totalorder %s183, %s184
    %p195 = scmp.eq.s32.totalorder %s18, 0
    %p196 = por %p194, %p195
    %p197 = scmp.ne.s32.totalorder %s183, %s184
    %p198 = scmp.eq.s32.totalorder %s19, 1
    %p199 = por %p197, %p198
    %p201 = scmp.ne.s32.totalorder %s184, %s200
    %p202 = scmp.eq.s32.totalorder %s19, 0
    %p203 = por %p201, %p202
    %p204 = scmp.le.s32.totalorder 1, %s13
    %p205 = scmp.lt.s32.totalorder %s13, 3
    %p206 = pnand %p204, %p205
    %p207 = pneg %p206
    // Predicated region
    $region9: #{apply_node_func.4} parent=5 // pred_check
      _
    $region10: #{apply_node_func.4} parent=5 // pred_check_branch
      %209 = sbr.rel (%p206) target = $region12
    $region11: #{apply_node_func.4} parent=5 // pred_region
      %s210 = ssub.s32 %s13, 1
      // Predicated region
      $region13: #{apply_node_func.4} parent=11 // pred_check
        %p211 = pneg %p74
      $region14: #{apply_node_func.4} parent=11 // pred_check_branch
        %213 = sbr.rel (%p211) target = $region16
      $region15: #{apply_node_func.4} parent=11 // pred_region
        _
      $region16: #{apply_node_func.4} parent=11 // pred_fallthru
        _
      // Predicated region
      $region17: #{apply_node_func.4} parent=11 // pred_check
        %p214 = pneg %p95
      $region18: #{apply_node_func.4} parent=11 // pred_check_branch
        %216 = sbr.rel (%p214) target = $region20
      $region19: #{apply_node_func.4} parent=11 // pred_region
        _
      $region20: #{apply_node_func.4} parent=11 // pred_fallthru
        _
      // Predicated region
      $region21: #{apply_node_func.4} parent=11 // pred_check
        %p217 = pneg %p116
      $region22: #{apply_node_func.4} parent=11 // pred_check_branch
        %219 = sbr.rel (%p217) target = $region24
      $region23: #{apply_node_func.4} parent=11 // pred_region
        _
      $region24: #{apply_node_func.4} parent=11 // pred_fallthru
        _
    $region12: #{apply_node_func.4} parent=5 // pred_fallthru
      _
    %p220 = scmp.lt.s32.totalorder %s13, 2
    // Predicated region
    $region25: #{apply_node_func.4} parent=5 // pred_check
      %p221 = pneg %p220
    $region26: #{apply_node_func.4} parent=5 // pred_check_branch
      %223 = sbr.rel (%p221) target = $region28
    $region27: #{apply_node_func.4} parent=5 // pred_region
      // Predicated region
      $region29: #{apply_node_func.4} parent=27 // pred_check
        %p224 = pneg %p47
      $region30: #{apply_node_func.4} parent=27 // pred_check_branch
        %226 = sbr.rel (%p224) target = $region32
      $region31: #{apply_node_func.4} parent=27 // pred_region
        %s227 = sadd.s32 %s20, %s21
        %s228 = smul.u32 38, %s227
        %p229 = scmp.lt.s32.totalorder %s228, 75
        %s230 = scalar_select %p229, %s228, 75
        %s231 = smul.addr %s230, 4
        %s232 = scalar_lea.vmem %s0, %s231
        %s233 = sadd.s32 %s20, %s21
        %s234 = smul.u32 38, %s233
      $region32: #{apply_node_func.4} parent=27 // pred_fallthru
        _
    $region28: #{apply_node_func.4} parent=5 // pred_fallthru
      _
    %p235 = scmp.le.s32.totalorder 1, %s13
    %p236 = scmp.lt.s32.totalorder %s13, 3
    %p237 = pnand %p235, %p236
    %p238 = pneg %p237
    // Predicated region
    $region33: #{apply_node_func.4} parent=5 // pred_check
      _
    $region34: #{apply_node_func.4} parent=5 // pred_check_branch
      %240 = sbr.rel (%p237) target = $region36
    $region35: #{apply_node_func.4} parent=5 // pred_region
      %s241 = ssub.s32 %s13, 1
      %s242 = sadd.s32 %s22, %s23
      %s243 = smul.u32 38, %s242
      %p244 = scmp.lt.s32.totalorder %s243, 75
      %s245 = scalar_select %p244, %s243, 75
      %s246 = smul.addr %s245, 4
      %s247 = scalar_lea.vmem %s0, %s246
      %p248 = pneg %p53
      %p249 = pneg %p50
      %p250 = pneg %p74
      %p251 = pneg %p71
      %p252 = pneg %p95
      %p253 = pneg %p92
      %p254 = pneg %p116
      %p255 = pneg %p113
      %p256 = pneg %p144
      %p257 = pneg %p141
      %s258 = sadd.s32 %s22, %s23
      %s259 = smul.u32 38, %s258
      %p260 = scmp.lt.s32.totalorder %s259, 75
      %s261 = scalar_select %p260, %s259, 75
      %s262 = smul.addr %s261, 4
      %s263 = scalar_lea.vmem %s4, %s262
      %p264 = pneg %p170
      %p265 = pneg %p167
      %p266 = scmp.lt.s32.totalorder %s22, 1
      %s267 = scalar_select %p266, %s22, 1
      %s268 = scalar_lea.vmem %s5, %s267
      %p269 = pneg %p196
      %p270 = pneg %p193
      %p271 = scmp.lt.s32.totalorder %s22, 1
      %s272 = scalar_select %p271, %s22, 1
      %s273 = scalar_lea.vmem %s6, %s272
      %s274 = sadd.s32 %s22, %s23
      %s275 = smul.u32 38, %s274
      %p276 = scmp.lt.s32.totalorder %s275, 75
      %s277 = scalar_select %p276, %s275, 75
      %s278 = smul.addr %s277, 4
      %s279 = scalar_lea.vmem %s0, %s278
      %s280 = sadd.s32 %s22, %s23
      %s281 = smul.u32 38, %s280
      %s282 = sadd.s32 %s22, %s23
      %s283 = smul.u32 38, %s282
      %p284 = scmp.lt.s32.totalorder %s283, 75
      %s285 = scalar_select %p284, %s283, 75
      %s286 = smul.addr %s285, 4
      %s287 = scalar_lea.vmem %s4, %s286
      %s288 = sadd.s32 %s22, %s23
      %s289 = smul.u32 38, %s288
      %p290 = scmp.lt.s32.totalorder %s22, 1
      %s291 = scalar_select %p290, %s22, 1
      %s292 = scalar_lea.vmem %s5, %s291
      %p293 = scmp.lt.s32.totalorder %s22, 1
      %s294 = scalar_select %p293, %s22, 1
      %s295 = scalar_lea.vmem %s6, %s294
      %p297 = scmp.eq.s32.totalorder %s23, 0
      // Predicated region
      $region37: #{apply_node_func.4} parent=35 // pred_check
        %p298 = pneg %p297
      $region38: #{apply_node_func.4} parent=35 // pred_check_branch
        %300 = sbr.rel (%p298) target = $region40
      $region39: #{apply_node_func.4} parent=35 // pred_region
        %301 = vst [vmem:[%s292] sm:$0x1] 0.0
        %302 = vst [vmem:[%s295] sm:$0x1] 0.0
      $region40: #{apply_node_func.4} parent=35 // pred_fallthru
        _
      %v303 = vld [vmem:[%s279] sm:$0xf]
      %v304 = vld [vmem:[%s279 + $0x4] sm:$0xf]
      %v305 = vld [vmem:[%s279 + $0x8] sm:$0xf]
      %v306 = vld [vmem:[%s279 + $0xc] sm:$0xf]
      %v307 = vld [vmem:[%s279 + $0x10] sm:$0xf]
      %v308 = vld [vmem:[%s279 + $0x14] sm:$0xf]
      %v309 = vld [vmem:[%s279 + $0x18] sm:$0xf]
      %v310 = vld [vmem:[%s279 + $0x1c] sm:$0xf]
      %v311 = vld [vmem:[%s279 + $0x20] sm:$0xf]
      %v312 = vld [vmem:[%s279 + $0x24] sm:$0xf]
      %v313 = vld [vmem:[%s279 + $0x28] sm:$0xf]
      %v314 = vld [vmem:[%s279 + $0x2c] sm:$0xf]
      %v315 = vld [vmem:[%s279 + $0x30] sm:$0xf]
      %v316 = vld [vmem:[%s279 + $0x34] sm:$0xf]
      %v317 = vld [vmem:[%s279 + $0x38] sm:$0xf]
      %v318 = vld [vmem:[%s279 + $0x3c] sm:$0xf]
      %v319 = vld [vmem:[%s279 + $0x40] sm:$0xf]
      %v320 = vld [vmem:[%s279 + $0x44] sm:$0xf]
      %v321 = vld [vmem:[%s279 + $0x48] sm:$0xf]
      %v322 = vld [vmem:[%s279 + $0x4c] sm:$0xf]
      %v323 = vld [vmem:[%s279 + $0x50] sm:$0xf]
      %v324 = vld [vmem:[%s279 + $0x54] sm:$0xf]
      %v325 = vld [vmem:[%s279 + $0x58] sm:$0xf]
      %v326 = vld [vmem:[%s279 + $0x5c] sm:$0xf]
      %v327 = vld [vmem:[%s279 + $0x60] sm:$0xf]
      %v328 = vld [vmem:[%s279 + $0x64] sm:$0xf]
      %v329 = vld [vmem:[%s279 + $0x68] sm:$0xf]
      %v330 = vld [vmem:[%s279 + $0x6c] sm:$0xf]
      %v331 = vld [vmem:[%s279 + $0x70] sm:$0xf]
      %v332 = vld [vmem:[%s279 + $0x74] sm:$0xf]
      %v333 = vld [vmem:[%s279 + $0x78] sm:$0xf]
      %v334 = vld [vmem:[%s279 + $0x7c] sm:$0xf]
      %v335 = vld [vmem:[%s279 + $0x80] sm:$0xf]
      %v336 = vld [vmem:[%s279 + $0x84] sm:$0xf]
      %v337 = vld [vmem:[%s279 + $0x88] sm:$0xf]
      %v338 = vld [vmem:[%s279 + $0x8c] sm:$0xf]
      %v339 = vld [vmem:[%s279 + $0x90] sm:$0xf]
      %v340 = vld [vmem:[%s279 + $0x94] sm:$0xf]
      %v341 = vunpack.c.l.bf16 %v303
      %v342 = vunpack.c.l.bf16 %v304
      %v343 = vunpack.c.l.bf16 %v305
      %v344 = vunpack.c.l.bf16 %v306
      %v345 = vunpack.c.l.bf16 %v307
      %v346 = vunpack.c.l.bf16 %v308
      %v347 = vunpack.c.l.bf16 %v309
      %v348 = vunpack.c.l.bf16 %v310
      %v349 = vunpack.c.l.bf16 %v311
      %v350 = vunpack.c.l.bf16 %v312
      %v351 = vunpack.c.l.bf16 %v313
      %v352 = vunpack.c.l.bf16 %v314
      %v353 = vunpack.c.l.bf16 %v315
      %v354 = vunpack.c.l.bf16 %v316
      %v355 = vunpack.c.l.bf16 %v317
      %v356 = vunpack.c.l.bf16 %v318
      %v357 = vunpack.c.l.bf16 %v319
      %v358 = vunpack.c.l.bf16 %v320
      %v359 = vunpack.c.l.bf16 %v321
      %v360 = vunpack.c.l.bf16 %v322
      %v361 = vunpack.c.l.bf16 %v323
      %v362 = vunpack.c.l.bf16 %v324
      %v363 = vunpack.c.l.bf16 %v325
      %v364 = vunpack.c.l.bf16 %v326
      %v365 = vunpack.c.l.bf16 %v327
      %v366 = vunpack.c.l.bf16 %v328
      %v367 = vunpack.c.l.bf16 %v329
      %v368 = vunpack.c.l.bf16 %v330
      %v369 = vunpack.c.l.bf16 %v331
      %v370 = vunpack.c.l.bf16 %v332
      %v371 = vunpack.c.l.bf16 %v333
      %v372 = vunpack.c.l.bf16 %v334
      %v373 = vunpack.c.l.bf16 %v335
      %v374 = vunpack.c.l.bf16 %v336
      %v375 = vunpack.c.l.bf16 %v337
      %v376 = vunpack.c.l.bf16 %v338
      %v377 = vunpack.c.l.bf16 %v339
      %v378 = vunpack.c.l.bf16 %v340
      %v379 = vld [vmem:[%s1] sm:$0x1]
      %v381 = vlaneseq
      %v382 = vshrl.u32 %v381, 7
      %v383 = vsub.s32 0, %v382
      %v384 = vrot.slane %v379, %v383
      %v386 = vmul.f32 %v341, %v384
      %v387 = vmul.f32 %v342, %v384
      %v388 = vmul.f32 %v343, %v384
      %v389 = vmul.f32 %v344, %v384
      %v390 = vmul.f32 %v345, %v384
      %v391 = vmul.f32 %v346, %v384
      %v392 = vmul.f32 %v347, %v384
      %v393 = vmul.f32 %v348, %v384
      %v394 = vmul.f32 %v349, %v384
      %v395 = vmul.f32 %v350, %v384
      %v396 = vmul.f32 %v351, %v384
      %v397 = vmul.f32 %v352, %v384
      %v398 = vmul.f32 %v353, %v384
      %v399 = vmul.f32 %v354, %v384
      %v400 = vmul.f32 %v355, %v384
      %v401 = vmul.f32 %v356, %v384
      %v402 = vmul.f32 %v357, %v384
      %v403 = vmul.f32 %v358, %v384
      %v404 = vmul.f32 %v359, %v384
      %v405 = vmul.f32 %v360, %v384
      %v406 = vmul.f32 %v361, %v384
      %v407 = vmul.f32 %v362, %v384
      %v408 = vmul.f32 %v363, %v384
      %v409 = vmul.f32 %v364, %v384
      %v410 = vmul.f32 %v365, %v384
      %v411 = vmul.f32 %v366, %v384
      %v412 = vmul.f32 %v367, %v384
      %v413 = vmul.f32 %v368, %v384
      %v414 = vmul.f32 %v369, %v384
      %v415 = vmul.f32 %v370, %v384
      %v416 = vmul.f32 %v371, %v384
      %v417 = vmul.f32 %v372, %v384
      %v418 = vmul.f32 %v373, %v384
      %v419 = vmul.f32 %v374, %v384
      %v420 = vmul.f32 %v375, %v384
      %v421 = vmul.f32 %v376, %v384
      %v422 = vmul.f32 %v377, %v384
      %v423 = vmul.f32 %v378, %v384
      %v424 = vld [vmem:[%s2] sm:$0x1]
      %v426 = vlaneseq
      %v427 = vshrl.u32 %v426, 7
      %v428 = vsub.s32 0, %v427
      %v429 = vrot.slane %v424, %v428
      %v431 = vadd.f32 %v386, %v429
      %v432 = vadd.f32 %v387, %v429
      %v433 = vadd.f32 %v388, %v429
      %v434 = vadd.f32 %v389, %v429
      %v435 = vadd.f32 %v390, %v429
      %v436 = vadd.f32 %v391, %v429
      %v437 = vadd.f32 %v392, %v429
      %v438 = vadd.f32 %v393, %v429
      %v439 = vadd.f32 %v394, %v429
      %v440 = vadd.f32 %v395, %v429
      %v441 = vadd.f32 %v396, %v429
      %v442 = vadd.f32 %v397, %v429
      %v443 = vadd.f32 %v398, %v429
      %v444 = vadd.f32 %v399, %v429
      %v445 = vadd.f32 %v400, %v429
      %v446 = vadd.f32 %v401, %v429
      %v447 = vadd.f32 %v402, %v429
      %v448 = vadd.f32 %v403, %v429
      %v449 = vadd.f32 %v404, %v429
      %v450 = vadd.f32 %v405, %v429
      %v451 = vadd.f32 %v406, %v429
      %v452 = vadd.f32 %v407, %v429
      %v453 = vadd.f32 %v408, %v429
      %v454 = vadd.f32 %v409, %v429
      %v455 = vadd.f32 %v410, %v429
      %v456 = vadd.f32 %v411, %v429
      %v457 = vadd.f32 %v412, %v429
      %v458 = vadd.f32 %v413, %v429
      %v459 = vadd.f32 %v414, %v429
      %v460 = vadd.f32 %v415, %v429
      %v461 = vadd.f32 %v416, %v429
      %v462 = vadd.f32 %v417, %v429
      %v463 = vadd.f32 %v418, %v429
      %v464 = vadd.f32 %v419, %v429
      %v465 = vadd.f32 %v420, %v429
      %v466 = vadd.f32 %v421, %v429
      %v467 = vadd.f32 %v422, %v429
      %v468 = vadd.f32 %v423, %v429
      %v469 = vmax.f32 %v431, 0.0
      %v470 = vmax.f32 %v432, 0.0
      %v471 = vmax.f32 %v433, 0.0
      %v472 = vmax.f32 %v434, 0.0
      %v473 = vmax.f32 %v435, 0.0
      %v474 = vmax.f32 %v436, 0.0
      %v475 = vmax.f32 %v437, 0.0
      %v476 = vmax.f32 %v438, 0.0
      %v477 = vmax.f32 %v439, 0.0
      %v478 = vmax.f32 %v440, 0.0
      %v479 = vmax.f32 %v441, 0.0
      %v480 = vmax.f32 %v442, 0.0
      %v481 = vmax.f32 %v443, 0.0
      %v482 = vmax.f32 %v444, 0.0
      %v483 = vmax.f32 %v445, 0.0
      %v484 = vmax.f32 %v446, 0.0
      %v485 = vmax.f32 %v447, 0.0
      %v486 = vmax.f32 %v448, 0.0
      %v487 = vmax.f32 %v449, 0.0
      %v488 = vmax.f32 %v450, 0.0
      %v489 = vmax.f32 %v451, 0.0
      %v490 = vmax.f32 %v452, 0.0
      %v491 = vmax.f32 %v453, 0.0
      %v492 = vmax.f32 %v454, 0.0
      %v493 = vmax.f32 %v455, 0.0
      %v494 = vmax.f32 %v456, 0.0
      %v495 = vmax.f32 %v457, 0.0
      %v496 = vmax.f32 %v458, 0.0
      %v497 = vmax.f32 %v459, 0.0
      %v498 = vmax.f32 %v460, 0.0
      %v499 = vmax.f32 %v461, 0.0
      %v500 = vmax.f32 %v462, 0.0
      %v501 = vmax.f32 %v463, 0.0
      %v502 = vmax.f32 %v464, 0.0
      %v503 = vmax.f32 %v465, 0.0
      %v504 = vmax.f32 %v466, 0.0
      %v505 = vmax.f32 %v467, 0.0
      %v506 = vmax.f32 %v468, 0.0
      %v507 = vpack.c.bf16 %v470, %v469
      %v508 = vpack.c.bf16 %v472, %v471
      %v509 = vpack.c.bf16 %v474, %v473
      %v510 = vpack.c.bf16 %v476, %v475
      %v511 = vpack.c.bf16 %v478, %v477
      %v512 = vpack.c.bf16 %v480, %v479
      %v513 = vpack.c.bf16 %v482, %v481
      %v514 = vpack.c.bf16 %v484, %v483
      %v515 = vpack.c.bf16 %v486, %v485
      %v516 = vpack.c.bf16 %v488, %v487
      %v517 = vpack.c.bf16 %v490, %v489
      %v518 = vpack.c.bf16 %v492, %v491
      %v519 = vpack.c.bf16 %v494, %v493
      %v520 = vpack.c.bf16 %v496, %v495
      %v521 = vpack.c.bf16 %v498, %v497
      %v522 = vpack.c.bf16 %v500, %v499
      %v523 = vpack.c.bf16 %v502, %v501
      %v524 = vpack.c.bf16 %v504, %v503
      %v525 = vpack.c.bf16 %v506, %v505
      %v526 = vld [vmem:[%s3] sm:$0xf]
      %v527 = vld [vmem:[%s3 + $0x4] sm:$0xf]
      %v528 = vld [vmem:[%s3 + $0x8] sm:$0xf]
      %v529 = vld [vmem:[%s3 + $0xc] sm:$0xf]
      %v530 = vld [vmem:[%s3 + $0x10] sm:$0xf]
      %v531 = vld [vmem:[%s3 + $0x14] sm:$0xf]
      %v532 = vld [vmem:[%s3 + $0x18] sm:$0xf]
      %v533 = vld [vmem:[%s3 + $0x1c] sm:$0xf]
      %v534 = vld [vmem:[%s3 + $0x20] sm:$0xf]
      %v535 = vld [vmem:[%s3 + $0x24] sm:$0xf]
      %v536 = vld [vmem:[%s3 + $0x28] sm:$0xf]
      %v537 = vld [vmem:[%s3 + $0x2c] sm:$0xf]
      %v538 = vld [vmem:[%s3 + $0x30] sm:$0xf]
      %v539 = vld [vmem:[%s3 + $0x34] sm:$0xf]
      %v540 = vld [vmem:[%s3 + $0x38] sm:$0xf]
      %v541 = vld [vmem:[%s3 + $0x3c] sm:$0xf]
      %v558 = vunpack.c.l.b16 %v526
      %v559 = vunpack.c.l.b16 %v527
      %v560 = vunpack.c.l.b16 %v528
      %v561 = vunpack.c.l.b16 %v529
      %v562 = vunpack.c.l.b16 %v530
      %v563 = vunpack.c.l.b16 %v531
      %v564 = vunpack.c.l.b16 %v532
      %v565 = vunpack.c.l.b16 %v533
      %v566 = vunpack.c.l.b16 %v534
      %v567 = vunpack.c.l.b16 %v535
      %v568 = vunpack.c.l.b16 %v536
      %v569 = vunpack.c.l.b16 %v537
      %v570 = vunpack.c.l.b16 %v538
      %v571 = vunpack.c.l.b16 %v539
      %v572 = vunpack.c.l.b16 %v540
      %v573 = vunpack.c.l.b16 %v541
      %v574 = vpack.c.b16 %v559, %v558
      %v575 = vpack.c.b16 %v561, %v560
      %v576 = vpack.c.b16 %v563, %v562
      %v577 = vpack.c.b16 %v565, %v564
      %v578 = vpack.c.b16 %v567, %v566
      %v579 = vpack.c.b16 %v569, %v568
      %v580 = vpack.c.b16 %v571, %v570
      %v581 = vpack.c.b16 %v573, %v572
      %590 = vmatprep.subr.bf16.mxu0 0
      %591 = vmatpush1.bf16.msra.mxu0 %v574
      %592 = vmatprep.subr.bf16.mxu0 0
      %593 = vmatpush1.bf16.msra.mxu0 %v575
      %594 = vmatprep.subr.bf16.mxu0 0
      %595 = vmatpush1.bf16.msra.mxu0 %v576
      %596 = vmatprep.subr.bf16.mxu0 0
      %597 = vmatpush1.bf16.msra.mxu0 %v577
      %598 = vmatprep.subr.bf16.mxu0 0
      %599 = vmatpush1.bf16.msra.mxu0 %v578
      %600 = vmatprep.subr.bf16.mxu0 0
      %601 = vmatpush1.bf16.msra.mxu0 %v579
      %602 = vmatprep.subr.bf16.mxu0 0
      %603 = vmatpush1.bf16.msra.mxu0 %v580
      %604 = vmatprep.subr.bf16.mxu0 0
      %605 = vmatpush1.bf16.msra.mxu0 %v581
      %606 = vmatprep.subr.bf16.mxu0 0
      %607 = vmatpush1.bf16.msra.mxu0 0
      %608 = vmatprep.subr.bf16.mxu0 0
      %609 = vmatpush1.bf16.msra.mxu0 0
      %610 = vmatprep.subr.bf16.mxu0 0
      %611 = vmatpush1.bf16.msra.mxu0 0
      %612 = vmatprep.subr.bf16.mxu0 0
      %613 = vmatpush1.bf16.msra.mxu0 0
      %614 = vmatprep.subr.bf16.mxu0 0
      %615 = vmatpush1.bf16.msra.mxu0 0
      %616 = vmatprep.subr.bf16.mxu0 0
      %617 = vmatpush1.bf16.msra.mxu0 0
      %618 = vmatprep.subr.bf16.mxu0 0
      %619 = vmatpush1.bf16.msra.mxu0 0
      %620 = vmatprep.subr.bf16.mxu0 0
      %621 = vmatpush1.bf16.msra.mxu0 0
      %622 = vmatprep.mubr.bf16.mxu0 0
      %623 = vmatmul.mubr.bf16.gmra.mrb[0].mxu0 %v507
      %v624 = vpop.f32.mrb[0].mxu0
      %v625 = vadd.f32 0.0, %v624
      %v626 = vpop.f32.mrb[0].mxu0
      %v627 = vpop.f32.mrb[0].mxu0
      %v628 = vadd.f32 0.0, %v627
      %v629 = vpop.f32.mrb[0].mxu0
      %630 = vmatprep.mubr.bf16.mxu0 0
      %631 = vmatmul.mubr.bf16.gmra.mrb[0].mxu0 %v508
      %v632 = vpop.f32.mrb[0].mxu0
      %v633 = vadd.f32 0.0, %v632
      %v634 = vpop.f32.mrb[0].mxu0
      %v635 = vpop.f32.mrb[0].mxu0
      %v636 = vadd.f32 0.0, %v635
      %v637 = vpop.f32.mrb[0].mxu0
      %638 = vmatprep.mubr.bf16.mxu0 0
      %639 = vmatmul.mubr.bf16.gmra.mrb[0].mxu0 %v509
      %v640 = vpop.f32.mrb[0].mxu0
      %v641 = vadd.f32 0.0, %v640
      %v642 = vpop.f32.mrb[0].mxu0
      %v643 = vpop.f32.mrb[0].mxu0
      %v644 = vadd.f32 0.0, %v643
      %v645 = vpop.f32.mrb[0].mxu0
      %646 = vmatprep.mubr.bf16.mxu0 0
      %647 = vmatmul.mubr.bf16.gmra.mrb[0].mxu0 %v510
      %v648 = vpop.f32.mrb[0].mxu0
      %v649 = vadd.f32 0.0, %v648
      %v650 = vpop.f32.mrb[0].mxu0
      %v651 = vpop.f32.mrb[0].mxu0
      %v652 = vadd.f32 0.0, %v651
      %v653 = vpop.f32.mrb[0].mxu0
      %654 = vmatprep.mubr.bf16.mxu0 0
      %655 = vmatmul.mubr.bf16.gmra.mrb[0].mxu0 %v511
      %v656 = vpop.f32.mrb[0].mxu0
      %v657 = vadd.f32 0.0, %v656
      %v658 = vpop.f32.mrb[0].mxu0
      %v659 = vpop.f32.mrb[0].mxu0
      %v660 = vadd.f32 0.0, %v659
      %v661 = vpop.f32.mrb[0].mxu0
      %662 = vmatprep.mubr.bf16.mxu0 0
      %663 = vmatmul.mubr.bf16.gmra.mrb[0].mxu0 %v512
      %v664 = vpop.f32.mrb[0].mxu0
      %v665 = vadd.f32 0.0, %v664
      %v666 = vpop.f32.mrb[0].mxu0
      %v667 = vpop.f32.mrb[0].mxu0
      %v668 = vadd.f32 0.0, %v667
      %v669 = vpop.f32.mrb[0].mxu0
      %670 = vmatprep.mubr.bf16.mxu0 0
      %671 = vmatmul.mubr.bf16.gmra.mrb[0].mxu0 %v513
      %v672 = vpop.f32.mrb[0].mxu0
      %v673 = vadd.f32 0.0, %v672
      %v674 = vpop.f32.mrb[0].mxu0
      %v675 = vpop.f32.mrb[0].mxu0
      %v676 = vadd.f32 0.0, %v675
      %v677 = vpop.f32.mrb[0].mxu0
      %678 = vmatprep.mubr.bf16.mxu0 0
      %679 = vmatmul.mubr.bf16.gmra.mrb[0].mxu0 %v514
      %v680 = vpop.f32.mrb[0].mxu0
      %v681 = vadd.f32 0.0, %v680
      %v682 = vpop.f32.mrb[0].mxu0
      %v683 = vpop.f32.mrb[0].mxu0
      %v684 = vadd.f32 0.0, %v683
      %v685 = vpop.f32.mrb[0].mxu0
      %686 = vmatprep.mubr.bf16.mxu0 0
      %687 = vmatmul.mubr.bf16.gmra.mrb[0].mxu0 %v515
      %v688 = vpop.f32.mrb[0].mxu0
      %v689 = vadd.f32 0.0, %v688
      %v690 = vpop.f32.mrb[0].mxu0
      %v691 = vpop.f32.mrb[0].mxu0
      %v692 = vadd.f32 0.0, %v691
      %v693 = vpop.f32.mrb[0].mxu0
      %694 = vmatprep.mubr.bf16.mxu0 0
      %695 = vmatmul.mubr.bf16.gmra.mrb[0].mxu0 %v516
      %v696 = vpop.f32.mrb[0].mxu0
      %v697 = vadd.f32 0.0, %v696
      %v698 = vpop.f32.mrb[0].mxu0
      %v699 = vpop.f32.mrb[0].mxu0
      %v700 = vadd.f32 0.0, %v699
      %v701 = vpop.f32.mrb[0].mxu0
      %702 = vmatprep.mubr.bf16.mxu0 0
      %703 = vmatmul.mubr.bf16.gmra.mrb[0].mxu0 %v517
      %v704 = vpop.f32.mrb[0].mxu0
      %v705 = vadd.f32 0.0, %v704
      %v706 = vpop.f32.mrb[0].mxu0
      %v707 = vpop.f32.mrb[0].mxu0
      %v708 = vadd.f32 0.0, %v707
      %v709 = vpop.f32.mrb[0].mxu0
      %710 = vmatprep.mubr.bf16.mxu0 0
      %711 = vmatmul.mubr.bf16.gmra.mrb[0].mxu0 %v518
      %v712 = vpop.f32.mrb[0].mxu0
      %v713 = vadd.f32 0.0, %v712
      %v714 = vpop.f32.mrb[0].mxu0
      %v715 = vpop.f32.mrb[0].mxu0
      %v716 = vadd.f32 0.0, %v715
      %v717 = vpop.f32.mrb[0].mxu0
      %718 = vmatprep.mubr.bf16.mxu0 0
      %719 = vmatmul.mubr.bf16.gmra.mrb[0].mxu0 %v519
      %v720 = vpop.f32.mrb[0].mxu0
      %v721 = vadd.f32 0.0, %v720
      %v722 = vpop.f32.mrb[0].mxu0
      %v723 = vpop.f32.mrb[0].mxu0
      %v724 = vadd.f32 0.0, %v723
      %v725 = vpop.f32.mrb[0].mxu0
      %726 = vmatprep.mubr.bf16.mxu0 0
      %727 = vmatmul.mubr.bf16.gmra.mrb[0].mxu0 %v520
      %v728 = vpop.f32.mrb[0].mxu0
      %v729 = vadd.f32 0.0, %v728
      %v730 = vpop.f32.mrb[0].mxu0
      %v731 = vpop.f32.mrb[0].mxu0
      %v732 = vadd.f32 0.0, %v731
      %v733 = vpop.f32.mrb[0].mxu0
      %734 = vmatprep.mubr.bf16.mxu0 0
      %735 = vmatmul.mubr.bf16.gmra.mrb[0].mxu0 %v521
      %v736 = vpop.f32.mrb[0].mxu0
      %v737 = vadd.f32 0.0, %v736
      %v738 = vpop.f32.mrb[0].mxu0
      %v739 = vpop.f32.mrb[0].mxu0
      %v740 = vadd.f32 0.0, %v739
      %v741 = vpop.f32.mrb[0].mxu0
      %742 = vmatprep.mubr.bf16.mxu0 0
      %743 = vmatmul.mubr.bf16.gmra.mrb[0].mxu0 %v522
      %v744 = vpop.f32.mrb[0].mxu0
      %v745 = vadd.f32 0.0, %v744
      %v746 = vpop.f32.mrb[0].mxu0
      %v747 = vpop.f32.mrb[0].mxu0
      %v748 = vadd.f32 0.0, %v747
      %v749 = vpop.f32.mrb[0].mxu0
      %750 = vmatprep.mubr.bf16.mxu0 0
      %751 = vmatmul.mubr.bf16.gmra.mrb[0].mxu0 %v523
      %v752 = vpop.f32.mrb[0].mxu0
      %v753 = vadd.f32 0.0, %v752
      %v754 = vpop.f32.mrb[0].mxu0
      %v755 = vpop.f32.mrb[0].mxu0
      %v756 = vadd.f32 0.0, %v755
      %v757 = vpop.f32.mrb[0].mxu0
      %758 = vmatprep.mubr.bf16.mxu0 0
      %759 = vmatmul.mubr.bf16.gmra.mrb[0].mxu0 %v524
      %v760 = vpop.f32.mrb[0].mxu0
      %v761 = vadd.f32 0.0, %v760
      %v762 = vpop.f32.mrb[0].mxu0
      %v763 = vpop.f32.mrb[0].mxu0
      %v764 = vadd.f32 0.0, %v763
      %v765 = vpop.f32.mrb[0].mxu0
      %766 = vmatprep.mubr.bf16.mxu0 0
      %767 = vmatmul.mubr.bf16.gmra.mrb[0].mxu0 %v525
      %v768 = vpop.f32.mrb[0].mxu0
      %v769 = vadd.f32 0.0, %v768
      %v770 = vpop.f32.mrb[0].mxu0
      %v771 = vpop.f32.mrb[0].mxu0
      %v772 = vadd.f32 0.0, %v771
      %v773 = vpop.f32.mrb[0].mxu0
      %774 = vdwg.mxu0
      %v775 = vpack.c.bf16 %v628, %v625
      %v776 = vpack.c.bf16 %v636, %v633
      %v777 = vpack.c.bf16 %v644, %v641
      %v778 = vpack.c.bf16 %v652, %v649
      %v779 = vpack.c.bf16 %v660, %v657
      %v780 = vpack.c.bf16 %v668, %v665
      %v781 = vpack.c.bf16 %v676, %v673
      %v782 = vpack.c.bf16 %v684, %v681
      %v783 = vpack.c.bf16 %v692, %v689
      %v784 = vpack.c.bf16 %v700, %v697
      %v785 = vpack.c.bf16 %v708, %v705
      %v786 = vpack.c.bf16 %v716, %v713
      %v787 = vpack.c.bf16 %v724, %v721
      %v788 = vpack.c.bf16 %v732, %v729
      %v789 = vpack.c.bf16 %v740, %v737
      %v790 = vpack.c.bf16 %v748, %v745
      %v791 = vpack.c.bf16 %v756, %v753
      %v792 = vpack.c.bf16 %v764, %v761
      %v793 = vpack.c.bf16 %v772, %v769
      %v813 = vunpack.c.l.b16 %v775
      %v814 = vunpack.c.h.b16 %v775
      %v815 = vunpack.c.l.b16 %v776
      %v816 = vunpack.c.h.b16 %v776
      %v817 = vunpack.c.l.b16 %v777
      %v818 = vunpack.c.h.b16 %v777
      %v819 = vunpack.c.l.b16 %v778
      %v820 = vunpack.c.h.b16 %v778
      %v821 = vunpack.c.l.b16 %v779
      %v822 = vunpack.c.h.b16 %v779
      %v823 = vunpack.c.l.b16 %v780
      %v824 = vunpack.c.h.b16 %v780
      %v825 = vunpack.c.l.b16 %v781
      %v826 = vunpack.c.h.b16 %v781
      %v827 = vunpack.c.l.b16 %v782
      %v828 = vunpack.c.h.b16 %v782
      %v829 = vunpack.c.l.b16 %v783
      %v830 = vunpack.c.h.b16 %v783
      %v831 = vunpack.c.l.b16 %v784
      %v832 = vunpack.c.h.b16 %v784
      %v833 = vunpack.c.l.b16 %v785
      %v834 = vunpack.c.h.b16 %v785
      %v835 = vunpack.c.l.b16 %v786
      %v836 = vunpack.c.h.b16 %v786
      %v837 = vunpack.c.l.b16 %v787
      %v838 = vunpack.c.h.b16 %v787
      %v839 = vunpack.c.l.b16 %v788
      %v840 = vunpack.c.h.b16 %v788
      %v841 = vunpack.c.l.b16 %v789
      %v842 = vunpack.c.h.b16 %v789
      %v843 = vunpack.c.l.b16 %v790
      %v844 = vunpack.c.h.b16 %v790
      %v845 = vunpack.c.l.b16 %v791
      %v846 = vunpack.c.h.b16 %v791
      %v847 = vunpack.c.l.b16 %v792
      %v848 = vunpack.c.h.b16 %v792
      %v849 = vunpack.c.l.b16 %v793
      %v850 = vunpack.c.h.b16 %v793
      %v851 = vpack.c.b16 %v813, %v813
      %v852 = vpack.c.b16 %v814, %v814
      %v853 = vpack.c.b16 %v815, %v815
      %v854 = vpack.c.b16 %v816, %v816
      %v855 = vpack.c.b16 %v817, %v817
      %v856 = vpack.c.b16 %v818, %v818
      %v857 = vpack.c.b16 %v819, %v819
      %v858 = vpack.c.b16 %v820, %v820
      %v859 = vpack.c.b16 %v821, %v821
      %v860 = vpack.c.b16 %v822, %v822
      %v861 = vpack.c.b16 %v823, %v823
      %v862 = vpack.c.b16 %v824, %v824
      %v863 = vpack.c.b16 %v825, %v825
      %v864 = vpack.c.b16 %v826, %v826
      %v865 = vpack.c.b16 %v827, %v827
      %v866 = vpack.c.b16 %v828, %v828
      %v867 = vpack.c.b16 %v829, %v829
      %v868 = vpack.c.b16 %v830, %v830
      %v869 = vpack.c.b16 %v831, %v831
      %v870 = vpack.c.b16 %v832, %v832
      %v871 = vpack.c.b16 %v833, %v833
      %v872 = vpack.c.b16 %v834, %v834
      %v873 = vpack.c.b16 %v835, %v835
      %v874 = vpack.c.b16 %v836, %v836
      %v875 = vpack.c.b16 %v837, %v837
      %v876 = vpack.c.b16 %v838, %v838
      %v877 = vpack.c.b16 %v839, %v839
      %v878 = vpack.c.b16 %v840, %v840
      %v879 = vpack.c.b16 %v841, %v841
      %v880 = vpack.c.b16 %v842, %v842
      %v881 = vpack.c.b16 %v843, %v843
      %v882 = vpack.c.b16 %v844, %v844
      %v883 = vpack.c.b16 %v845, %v845
      %v884 = vpack.c.b16 %v846, %v846
      %v885 = vpack.c.b16 %v847, %v847
      %v886 = vpack.c.b16 %v848, %v848
      %v887 = vpack.c.b16 %v849, %v849
      %v888 = vpack.c.b16 %v850, %v850
      %927 = vst [vmem:[%s287] sm:$0xf] %v851
      %928 = vst [vmem:[%s287 + $0x4] sm:$0xf] %v852
      %929 = vst [vmem:[%s287 + $0x8] sm:$0xf] %v853
      %930 = vst [vmem:[%s287 + $0xc] sm:$0xf] %v854
      %931 = vst [vmem:[%s287 + $0x10] sm:$0xf] %v855
      %932 = vst [vmem:[%s287 + $0x14] sm:$0xf] %v856
      %933 = vst [vmem:[%s287 + $0x18] sm:$0xf] %v857
      %934 = vst [vmem:[%s287 + $0x1c] sm:$0xf] %v858
      %935 = vst [vmem:[%s287 + $0x20] sm:$0xf] %v859
      %936 = vst [vmem:[%s287 + $0x24] sm:$0xf] %v860
      %937 = vst [vmem:[%s287 + $0x28] sm:$0xf] %v861
      %938 = vst [vmem:[%s287 + $0x2c] sm:$0xf] %v862
      %939 = vst [vmem:[%s287 + $0x30] sm:$0xf] %v863
      %940 = vst [vmem:[%s287 + $0x34] sm:$0xf] %v864
      %941 = vst [vmem:[%s287 + $0x38] sm:$0xf] %v865
      %942 = vst [vmem:[%s287 + $0x3c] sm:$0xf] %v866
      %943 = vst [vmem:[%s287 + $0x40] sm:$0xf] %v867
      %944 = vst [vmem:[%s287 + $0x44] sm:$0xf] %v868
      %945 = vst [vmem:[%s287 + $0x48] sm:$0xf] %v869
      %946 = vst [vmem:[%s287 + $0x4c] sm:$0xf] %v870
      %947 = vst [vmem:[%s287 + $0x50] sm:$0xf] %v871
      %948 = vst [vmem:[%s287 + $0x54] sm:$0xf] %v872
      %949 = vst [vmem:[%s287 + $0x58] sm:$0xf] %v873
      %950 = vst [vmem:[%s287 + $0x5c] sm:$0xf] %v874
      %951 = vst [vmem:[%s287 + $0x60] sm:$0xf] %v875
      %952 = vst [vmem:[%s287 + $0x64] sm:$0xf] %v876
      %953 = vst [vmem:[%s287 + $0x68] sm:$0xf] %v877
      %954 = vst [vmem:[%s287 + $0x6c] sm:$0xf] %v878
      %955 = vst [vmem:[%s287 + $0x70] sm:$0xf] %v879
      %956 = vst [vmem:[%s287 + $0x74] sm:$0xf] %v880
      %957 = vst [vmem:[%s287 + $0x78] sm:$0xf] %v881
      %958 = vst [vmem:[%s287 + $0x7c] sm:$0xf] %v882
      %959 = vst [vmem:[%s287 + $0x80] sm:$0xf] %v883
      %960 = vst [vmem:[%s287 + $0x84] sm:$0xf] %v884
      %961 = vst [vmem:[%s287 + $0x88] sm:$0xf] %v885
      %962 = vst [vmem:[%s287 + $0x8c] sm:$0xf] %v886
      %963 = vst [vmem:[%s287 + $0x90] sm:$0xf] %v887
      %964 = vst [vmem:[%s287 + $0x94] sm:$0xf] %v888
      %s965 = sadd.s32 %s22, %s23
      %s966 = smul.u32 %s965, 304
      %s967 = sadd.s32 %s966, 304
      %p968 = scmp.gt.s32.totalorder %s967, 600
      %p969 = scmp.le.s32.totalorder %s967, 600
      // Predicated region
      $region41: #{apply_node_func.4} parent=35 // pred_check
        %p970 = pneg %p969
      $region42: #{apply_node_func.4} parent=35 // pred_check_branch
        %972 = sbr.rel (%p970) target = $region44
      $region43: #{apply_node_func.4} parent=35 // pred_region
        %v973 = vld [vmem:[%s292] sm:$0x1]
        %v974 = vadd.f32 %v625, %v628
        %v975 = vadd.f32 %v974, %v633
        %v976 = vadd.f32 %v975, %v636
        %v977 = vadd.f32 %v976, %v641
        %v978 = vadd.f32 %v977, %v644
        %v979 = vadd.f32 %v978, %v649
        %v980 = vadd.f32 %v979, %v652
        %v981 = vadd.f32 %v980, %v657
        %v982 = vadd.f32 %v981, %v660
        %v983 = vadd.f32 %v982, %v665
        %v984 = vadd.f32 %v983, %v668
        %v985 = vadd.f32 %v984, %v673
        %v986 = vadd.f32 %v985, %v676
        %v987 = vadd.f32 %v986, %v681
        %v988 = vadd.f32 %v987, %v684
        %v989 = vadd.f32 %v988, %v689
        %v990 = vadd.f32 %v989, %v692
        %v991 = vadd.f32 %v990, %v697
        %v992 = vadd.f32 %v991, %v700
        %v993 = vadd.f32 %v992, %v705
        %v994 = vadd.f32 %v993, %v708
        %v995 = vadd.f32 %v994, %v713
        %v996 = vadd.f32 %v995, %v716
        %v997 = vadd.f32 %v996, %v721
        %v998 = vadd.f32 %v997, %v724
        %v999 = vadd.f32 %v998, %v729
        %v1000 = vadd.f32 %v999, %v732
        %v1001 = vadd.f32 %v1000, %v737
        %v1002 = vadd.f32 %v1001, %v740
        %v1003 = vadd.f32 %v1002, %v745
        %v1004 = vadd.f32 %v1003, %v748
        %v1005 = vadd.f32 %v1004, %v753
        %v1006 = vadd.f32 %v1005, %v756
        %v1007 = vadd.f32 %v1006, %v761
        %v1008 = vadd.f32 %v1007, %v764
        %v1009 = vadd.f32 %v1008, %v769
        %v1010 = vadd.f32 %v1009, %v772
        %v1011 = vrot.slane %v1010, 4
        %v1012 = vadd.f32 %v1010, %v1011
        %v1013 = vrot.slane %v1012, 2
        %v1014 = vadd.f32 %v1012, %v1013
        %v1015 = vrot.slane %v1014, 1
        %v1016 = vadd.f32 %v1014, %v1015
        %v1017 = vadd.f32 %v973, %v1016
        %1018 = vst [vmem:[%s292] sm:$0x1] %v1017
        %v1019 = vld [vmem:[%s295] sm:$0x1]
        %v1020 = vmul.f32 %v625, %v625
        %v1021 = vmul.f32 %v628, %v628
        %v1022 = vmul.f32 %v633, %v633
        %v1023 = vmul.f32 %v636, %v636
        %v1024 = vmul.f32 %v641, %v641
        %v1025 = vmul.f32 %v644, %v644
        %v1026 = vmul.f32 %v649, %v649
        %v1027 = vmul.f32 %v652, %v652
        %v1028 = vmul.f32 %v657, %v657
        %v1029 = vmul.f32 %v660, %v660
        %v1030 = vmul.f32 %v665, %v665
        %v1031 = vmul.f32 %v668, %v668
        %v1032 = vmul.f32 %v673, %v673
        %v1033 = vmul.f32 %v676, %v676
        %v1034 = vmul.f32 %v681, %v681
        %v1035 = vmul.f32 %v684, %v684
        %v1036 = vmul.f32 %v689, %v689
        %v1037 = vmul.f32 %v692, %v692
        %v1038 = vmul.f32 %v697, %v697
        %v1039 = vmul.f32 %v700, %v700
        %v1040 = vmul.f32 %v705, %v705
        %v1041 = vmul.f32 %v708, %v708
        %v1042 = vmul.f32 %v713, %v713
        %v1043 = vmul.f32 %v716, %v716
        %v1044 = vmul.f32 %v721, %v721
        %v1045 = vmul.f32 %v724, %v724
        %v1046 = vmul.f32 %v729, %v729
        %v1047 = vmul.f32 %v732, %v732
        %v1048 = vmul.f32 %v737, %v737
        %v1049 = vmul.f32 %v740, %v740
        %v1050 = vmul.f32 %v745, %v745
        %v1051 = vmul.f32 %v748, %v748
        %v1052 = vmul.f32 %v753, %v753
        %v1053 = vmul.f32 %v756, %v756
        %v1054 = vmul.f32 %v761, %v761
        %v1055 = vmul.f32 %v764, %v764
        %v1056 = vmul.f32 %v769, %v769
        %v1057 = vmul.f32 %v772, %v772
        %v1058 = vadd.f32 %v1020, %v1021
        %v1059 = vadd.f32 %v1058, %v1022
        %v1060 = vadd.f32 %v1059, %v1023
        %v1061 = vadd.f32 %v1060, %v1024
        %v1062 = vadd.f32 %v1061, %v1025
        %v1063 = vadd.f32 %v1062, %v1026
        %v1064 = vadd.f32 %v1063, %v1027
        %v1065 = vadd.f32 %v1064, %v1028
        %v1066 = vadd.f32 %v1065, %v1029
        %v1067 = vadd.f32 %v1066, %v1030
        %v1068 = vadd.f32 %v1067, %v1031
        %v1069 = vadd.f32 %v1068, %v1032
        %v1070 = vadd.f32 %v1069, %v1033
        %v1071 = vadd.f32 %v1070, %v1034
        %v1072 = vadd.f32 %v1071, %v1035
        %v1073 = vadd.f32 %v1072, %v1036
        %v1074 = vadd.f32 %v1073, %v1037
        %v1075 = vadd.f32 %v1074, %v1038
        %v1076 = vadd.f32 %v1075, %v1039
        %v1077 = vadd.f32 %v1076, %v1040
        %v1078 = vadd.f32 %v1077, %v1041
        %v1079 = vadd.f32 %v1078, %v1042
        %v1080 = vadd.f32 %v1079, %v1043
        %v1081 = vadd.f32 %v1080, %v1044
        %v1082 = vadd.f32 %v1081, %v1045
        %v1083 = vadd.f32 %v1082, %v1046
        %v1084 = vadd.f32 %v1083, %v1047
        %v1085 = vadd.f32 %v1084, %v1048
        %v1086 = vadd.f32 %v1085, %v1049
        %v1087 = vadd.f32 %v1086, %v1050
        %v1088 = vadd.f32 %v1087, %v1051
        %v1089 = vadd.f32 %v1088, %v1052
        %v1090 = vadd.f32 %v1089, %v1053
        %v1091 = vadd.f32 %v1090, %v1054
        %v1092 = vadd.f32 %v1091, %v1055
        %v1093 = vadd.f32 %v1092, %v1056
        %v1094 = vadd.f32 %v1093, %v1057
        %v1095 = vrot.slane %v1094, 4
        %v1096 = vadd.f32 %v1094, %v1095
        %v1097 = vrot.slane %v1096, 2
        %v1098 = vadd.f32 %v1096, %v1097
        %v1099 = vrot.slane %v1098, 1
        %v1100 = vadd.f32 %v1098, %v1099
        %v1101 = vadd.f32 %v1019, %v1100
        %1102 = vst [vmem:[%s295] sm:$0x1] %v1101
      $region44: #{apply_node_func.4} parent=35 // pred_fallthru
        _
      // Predicated region
      $region45: #{apply_node_func.4} parent=35 // pred_check
        %p1103 = pneg %p968
      $region46: #{apply_node_func.4} parent=35 // pred_check_branch
        %1105 = sbr.rel (%p1103) target = $region48
      $region47: #{apply_node_func.4} parent=35 // pred_region
        %v1106 = vlaneseq
        %v1107 = vshrl.u32 %v1106, 7
        %v1108 = vadd.s32 %v1107, 8
        %v1109 = vadd.s32 %v1107, 16
        %v1110 = vadd.s32 %v1107, 24
        %v1111 = vadd.s32 %v1107, 32
        %v1112 = vadd.s32 %v1107, 40
        %v1113 = vadd.s32 %v1107, 48
        %v1114 = vadd.s32 %v1107, 56
        %v1115 = vadd.s32 %v1107, 64
        %v1116 = vadd.s32 %v1107, 72
        %v1117 = vadd.s32 %v1107, 80
        %v1118 = vadd.s32 %v1107, 88
        %v1119 = vadd.s32 %v1107, 96
        %v1120 = vadd.s32 %v1107, 104
        %v1121 = vadd.s32 %v1107, 112
        %v1122 = vadd.s32 %v1107, 120
        %v1123 = vadd.s32 %v1107, 128
        %v1124 = vadd.s32 %v1107, 136
        %v1125 = vadd.s32 %v1107, 144
        %v1126 = vadd.s32 %v1107, 152
        %v1127 = vadd.s32 %v1107, 160
        %v1128 = vadd.s32 %v1107, 168
        %v1129 = vadd.s32 %v1107, 176
        %v1130 = vadd.s32 %v1107, 184
        %v1131 = vadd.s32 %v1107, 192
        %v1132 = vadd.s32 %v1107, 200
        %v1133 = vadd.s32 %v1107, 208
        %v1134 = vadd.s32 %v1107, 216
        %v1135 = vadd.s32 %v1107, 224
        %v1136 = vadd.s32 %v1107, 232
        %v1137 = vadd.s32 %v1107, 240
        %v1138 = vadd.s32 %v1107, 248
        %v1139 = vadd.s32 %v1107, 256
        %v1140 = vadd.s32 %v1107, 264
        %v1141 = vadd.s32 %v1107, 272
        %v1142 = vadd.s32 %v1107, 280
        %v1143 = vadd.s32 %v1107, 288
        %v1144 = vadd.s32 %v1107, 296
        %v1145 = vstv %s966
        %v1146 = vadd.s32 %v1145, %v1107
        %v1147 = vadd.s32 %v1145, %v1108
        %v1148 = vadd.s32 %v1145, %v1109
        %v1149 = vadd.s32 %v1145, %v1110
        %v1150 = vadd.s32 %v1145, %v1111
        %v1151 = vadd.s32 %v1145, %v1112
        %v1152 = vadd.s32 %v1145, %v1113
        %v1153 = vadd.s32 %v1145, %v1114
        %v1154 = vadd.s32 %v1145, %v1115
        %v1155 = vadd.s32 %v1145, %v1116
        %v1156 = vadd.s32 %v1145, %v1117
        %v1157 = vadd.s32 %v1145, %v1118
        %v1158 = vadd.s32 %v1145, %v1119
        %v1159 = vadd.s32 %v1145, %v1120
        %v1160 = vadd.s32 %v1145, %v1121
        %v1161 = vadd.s32 %v1145, %v1122
        %v1162 = vadd.s32 %v1145, %v1123
        %v1163 = vadd.s32 %v1145, %v1124
        %v1164 = vadd.s32 %v1145, %v1125
        %v1165 = vadd.s32 %v1145, %v1126
        %v1166 = vadd.s32 %v1145, %v1127
        %v1167 = vadd.s32 %v1145, %v1128
        %v1168 = vadd.s32 %v1145, %v1129
        %v1169 = vadd.s32 %v1145, %v1130
        %v1170 = vadd.s32 %v1145, %v1131
        %v1171 = vadd.s32 %v1145, %v1132
        %v1172 = vadd.s32 %v1145, %v1133
        %v1173 = vadd.s32 %v1145, %v1134
        %v1174 = vadd.s32 %v1145, %v1135
        %v1175 = vadd.s32 %v1145, %v1136
        %v1176 = vadd.s32 %v1145, %v1137
        %v1177 = vadd.s32 %v1145, %v1138
        %v1178 = vadd.s32 %v1145, %v1139
        %v1179 = vadd.s32 %v1145, %v1140
        %v1180 = vadd.s32 %v1145, %v1141
        %v1181 = vadd.s32 %v1145, %v1142
        %v1182 = vadd.s32 %v1145, %v1143
        %v1183 = vadd.s32 %v1145, %v1144
        %vm1184 = vcmp.lt.s32.totalorder %v1146, 600
        %vm1185 = vcmp.lt.s32.totalorder %v1147, 600
        %vm1186 = vcmp.lt.s32.totalorder %v1148, 600
        %vm1187 = vcmp.lt.s32.totalorder %v1149, 600
        %vm1188 = vcmp.lt.s32.totalorder %v1150, 600
        %vm1189 = vcmp.lt.s32.totalorder %v1151, 600
        %vm1190 = vcmp.lt.s32.totalorder %v1152, 600
        %vm1191 = vcmp.lt.s32.totalorder %v1153, 600
        %vm1192 = vcmp.lt.s32.totalorder %v1154, 600
        %vm1193 = vcmp.lt.s32.totalorder %v1155, 600
        %vm1194 = vcmp.lt.s32.totalorder %v1156, 600
        %vm1195 = vcmp.lt.s32.totalorder %v1157, 600
        %vm1196 = vcmp.lt.s32.totalorder %v1158, 600
        %vm1197 = vcmp.lt.s32.totalorder %v1159, 600
        %vm1198 = vcmp.lt.s32.totalorder %v1160, 600
        %vm1199 = vcmp.lt.s32.totalorder %v1161, 600
        %vm1200 = vcmp.lt.s32.totalorder %v1162, 600
        %vm1201 = vcmp.lt.s32.totalorder %v1163, 600
        %vm1202 = vcmp.lt.s32.totalorder %v1164, 600
        %vm1203 = vcmp.lt.s32.totalorder %v1165, 600
        %vm1204 = vcmp.lt.s32.totalorder %v1166, 600
        %vm1205 = vcmp.lt.s32.totalorder %v1167, 600
        %vm1206 = vcmp.lt.s32.totalorder %v1168, 600
        %vm1207 = vcmp.lt.s32.totalorder %v1169, 600
        %vm1208 = vcmp.lt.s32.totalorder %v1170, 600
        %vm1209 = vcmp.lt.s32.totalorder %v1171, 600
        %vm1210 = vcmp.lt.s32.totalorder %v1172, 600
        %vm1211 = vcmp.lt.s32.totalorder %v1173, 600
        %vm1212 = vcmp.lt.s32.totalorder %v1174, 600
        %vm1213 = vcmp.lt.s32.totalorder %v1175, 600
        %vm1214 = vcmp.lt.s32.totalorder %v1176, 600
        %vm1215 = vcmp.lt.s32.totalorder %v1177, 600
        %vm1216 = vcmp.lt.s32.totalorder %v1178, 600
        %vm1217 = vcmp.lt.s32.totalorder %v1179, 600
        %vm1218 = vcmp.lt.s32.totalorder %v1180, 600
        %vm1219 = vcmp.lt.s32.totalorder %v1181, 600
        %vm1220 = vcmp.lt.s32.totalorder %v1182, 600
        %vm1221 = vcmp.lt.s32.totalorder %v1183, 600
        %v1222 = vsel %vm1184, 1, 0
        %v1223 = vsel %vm1185, 1, 0
        %v1224 = vsel %vm1186, 1, 0
        %v1225 = vsel %vm1187, 1, 0
        %v1226 = vsel %vm1188, 1, 0
        %v1227 = vsel %vm1189, 1, 0
        %v1228 = vsel %vm1190, 1, 0
        %v1229 = vsel %vm1191, 1, 0
        %v1230 = vsel %vm1192, 1, 0
        %v1231 = vsel %vm1193, 1, 0
        %v1232 = vsel %vm1194, 1, 0
        %v1233 = vsel %vm1195, 1, 0
        %v1234 = vsel %vm1196, 1, 0
        %v1235 = vsel %vm1197, 1, 0
        %v1236 = vsel %vm1198, 1, 0
        %v1237 = vsel %vm1199, 1, 0
        %v1238 = vsel %vm1200, 1, 0
        %v1239 = vsel %vm1201, 1, 0
        %v1240 = vsel %vm1202, 1, 0
        %v1241 = vsel %vm1203, 1, 0
        %v1242 = vsel %vm1204, 1, 0
        %v1243 = vsel %vm1205, 1, 0
        %v1244 = vsel %vm1206, 1, 0
        %v1245 = vsel %vm1207, 1, 0
        %v1246 = vsel %vm1208, 1, 0
        %v1247 = vsel %vm1209, 1, 0
        %v1248 = vsel %vm1210, 1, 0
        %v1249 = vsel %vm1211, 1, 0
        %v1250 = vsel %vm1212, 1, 0
        %v1251 = vsel %vm1213, 1, 0
        %v1252 = vsel %vm1214, 1, 0
        %v1253 = vsel %vm1215, 1, 0
        %v1254 = vsel %vm1216, 1, 0
        %v1255 = vsel %vm1217, 1, 0
        %v1256 = vsel %vm1218, 1, 0
        %v1257 = vsel %vm1219, 1, 0
        %v1258 = vsel %vm1220, 1, 0
        %v1259 = vsel %vm1221, 1, 0
        %vm1260 = vcmp.eq.s32.totalorder %v1222, 1
        %vm1261 = vcmp.eq.s32.totalorder %v1223, 1
        %vm1262 = vcmp.eq.s32.totalorder %v1224, 1
        %vm1263 = vcmp.eq.s32.totalorder %v1225, 1
        %vm1264 = vcmp.eq.s32.totalorder %v1226, 1
        %vm1265 = vcmp.eq.s32.totalorder %v1227, 1
        %vm1266 = vcmp.eq.s32.totalorder %v1228, 1
        %vm1267 = vcmp.eq.s32.totalorder %v1229, 1
        %vm1268 = vcmp.eq.s32.totalorder %v1230, 1
        %vm1269 = vcmp.eq.s32.totalorder %v1231, 1
        %vm1270 = vcmp.eq.s32.totalorder %v1232, 1
        %vm1271 = vcmp.eq.s32.totalorder %v1233, 1
        %vm1272 = vcmp.eq.s32.totalorder %v1234, 1
        %vm1273 = vcmp.eq.s32.totalorder %v1235, 1
        %vm1274 = vcmp.eq.s32.totalorder %v1236, 1
        %vm1275 = vcmp.eq.s32.totalorder %v1237, 1
        %vm1276 = vcmp.eq.s32.totalorder %v1238, 1
        %vm1277 = vcmp.eq.s32.totalorder %v1239, 1
        %vm1278 = vcmp.eq.s32.totalorder %v1240, 1
        %vm1279 = vcmp.eq.s32.totalorder %v1241, 1
        %vm1280 = vcmp.eq.s32.totalorder %v1242, 1
        %vm1281 = vcmp.eq.s32.totalorder %v1243, 1
        %vm1282 = vcmp.eq.s32.totalorder %v1244, 1
        %vm1283 = vcmp.eq.s32.totalorder %v1245, 1
        %vm1284 = vcmp.eq.s32.totalorder %v1246, 1
        %vm1285 = vcmp.eq.s32.totalorder %v1247, 1
        %vm1286 = vcmp.eq.s32.totalorder %v1248, 1
        %vm1287 = vcmp.eq.s32.totalorder %v1249, 1
        %vm1288 = vcmp.eq.s32.totalorder %v1250, 1
        %vm1289 = vcmp.eq.s32.totalorder %v1251, 1
        %vm1290 = vcmp.eq.s32.totalorder %v1252, 1
        %vm1291 = vcmp.eq.s32.totalorder %v1253, 1
        %vm1292 = vcmp.eq.s32.totalorder %v1254, 1
        %vm1293 = vcmp.eq.s32.totalorder %v1255, 1
        %vm1294 = vcmp.eq.s32.totalorder %v1256, 1
        %vm1295 = vcmp.eq.s32.totalorder %v1257, 1
        %vm1296 = vcmp.eq.s32.totalorder %v1258, 1
        %vm1297 = vcmp.eq.s32.totalorder %v1259, 1
        %v1298 = vsel %vm1260, %v625, 0.0
        %v1299 = vsel %vm1261, %v628, 0.0
        %v1300 = vsel %vm1262, %v633, 0.0
        %v1301 = vsel %vm1263, %v636, 0.0
        %v1302 = vsel %vm1264, %v641, 0.0
        %v1303 = vsel %vm1265, %v644, 0.0
        %v1304 = vsel %vm1266, %v649, 0.0
        %v1305 = vsel %vm1267, %v652, 0.0
        %v1306 = vsel %vm1268, %v657, 0.0
        %v1307 = vsel %vm1269, %v660, 0.0
        %v1308 = vsel %vm1270, %v665, 0.0
        %v1309 = vsel %vm1271, %v668, 0.0
        %v1310 = vsel %vm1272, %v673, 0.0
        %v1311 = vsel %vm1273, %v676, 0.0
        %v1312 = vsel %vm1274, %v681, 0.0
        %v1313 = vsel %vm1275, %v684, 0.0
        %v1314 = vsel %vm1276, %v689, 0.0
        %v1315 = vsel %vm1277, %v692, 0.0
        %v1316 = vsel %vm1278, %v697, 0.0
        %v1317 = vsel %vm1279, %v700, 0.0
        %v1318 = vsel %vm1280, %v705, 0.0
        %v1319 = vsel %vm1281, %v708, 0.0
        %v1320 = vsel %vm1282, %v713, 0.0
        %v1321 = vsel %vm1283, %v716, 0.0
        %v1322 = vsel %vm1284, %v721, 0.0
        %v1323 = vsel %vm1285, %v724, 0.0
        %v1324 = vsel %vm1286, %v729, 0.0
        %v1325 = vsel %vm1287, %v732, 0.0
        %v1326 = vsel %vm1288, %v737, 0.0
        %v1327 = vsel %vm1289, %v740, 0.0
        %v1328 = vsel %vm1290, %v745, 0.0
        %v1329 = vsel %vm1291, %v748, 0.0
        %v1330 = vsel %vm1292, %v753, 0.0
        %v1331 = vsel %vm1293, %v756, 0.0
        %v1332 = vsel %vm1294, %v761, 0.0
        %v1333 = vsel %vm1295, %v764, 0.0
        %v1334 = vsel %vm1296, %v769, 0.0
        %v1335 = vsel %vm1297, %v772, 0.0
        %v1336 = vld [vmem:[%s292] sm:$0x1]
        %v1337 = vadd.f32 %v1298, %v1299
        %v1338 = vadd.f32 %v1337, %v1300
        %v1339 = vadd.f32 %v1338, %v1301
        %v1340 = vadd.f32 %v1339, %v1302
        %v1341 = vadd.f32 %v1340, %v1303
        %v1342 = vadd.f32 %v1341, %v1304
        %v1343 = vadd.f32 %v1342, %v1305
        %v1344 = vadd.f32 %v1343, %v1306
        %v1345 = vadd.f32 %v1344, %v1307
        %v1346 = vadd.f32 %v1345, %v1308
        %v1347 = vadd.f32 %v1346, %v1309
        %v1348 = vadd.f32 %v1347, %v1310
        %v1349 = vadd.f32 %v1348, %v1311
        %v1350 = vadd.f32 %v1349, %v1312
        %v1351 = vadd.f32 %v1350, %v1313
        %v1352 = vadd.f32 %v1351, %v1314
        %v1353 = vadd.f32 %v1352, %v1315
        %v1354 = vadd.f32 %v1353, %v1316
        %v1355 = vadd.f32 %v1354, %v1317
        %v1356 = vadd.f32 %v1355, %v1318
        %v1357 = vadd.f32 %v1356, %v1319
        %v1358 = vadd.f32 %v1357, %v1320
        %v1359 = vadd.f32 %v1358, %v1321
        %v1360 = vadd.f32 %v1359, %v1322
        %v1361 = vadd.f32 %v1360, %v1323
        %v1362 = vadd.f32 %v1361, %v1324
        %v1363 = vadd.f32 %v1362, %v1325
        %v1364 = vadd.f32 %v1363, %v1326
        %v1365 = vadd.f32 %v1364, %v1327
        %v1366 = vadd.f32 %v1365, %v1328
        %v1367 = vadd.f32 %v1366, %v1329
        %v1368 = vadd.f32 %v1367, %v1330
        %v1369 = vadd.f32 %v1368, %v1331
        %v1370 = vadd.f32 %v1369, %v1332
        %v1371 = vadd.f32 %v1370, %v1333
        %v1372 = vadd.f32 %v1371, %v1334
        %v1373 = vadd.f32 %v1372, %v1335
        %v1374 = vrot.slane %v1373, 4
        %v1375 = vadd.f32 %v1373, %v1374
        %v1376 = vrot.slane %v1375, 2
        %v1377 = vadd.f32 %v1375, %v1376
        %v1378 = vrot.slane %v1377, 1
        %v1379 = vadd.f32 %v1377, %v1378
        %v1380 = vadd.f32 %v1336, %v1379
        %1381 = vst [vmem:[%s292] sm:$0x1] %v1380
        %v1382 = vld [vmem:[%s295] sm:$0x1]
        %v1383 = vmul.f32 %v1298, %v1298
        %v1384 = vmul.f32 %v1299, %v1299
        %v1385 = vmul.f32 %v1300, %v1300
        %v1386 = vmul.f32 %v1301, %v1301
        %v1387 = vmul.f32 %v1302, %v1302
        %v1388 = vmul.f32 %v1303, %v1303
        %v1389 = vmul.f32 %v1304, %v1304
        %v1390 = vmul.f32 %v1305, %v1305
        %v1391 = vmul.f32 %v1306, %v1306
        %v1392 = vmul.f32 %v1307, %v1307
        %v1393 = vmul.f32 %v1308, %v1308
        %v1394 = vmul.f32 %v1309, %v1309
        %v1395 = vmul.f32 %v1310, %v1310
        %v1396 = vmul.f32 %v1311, %v1311
        %v1397 = vmul.f32 %v1312, %v1312
        %v1398 = vmul.f32 %v1313, %v1313
        %v1399 = vmul.f32 %v1314, %v1314
        %v1400 = vmul.f32 %v1315, %v1315
        %v1401 = vmul.f32 %v1316, %v1316
        %v1402 = vmul.f32 %v1317, %v1317
        %v1403 = vmul.f32 %v1318, %v1318
        %v1404 = vmul.f32 %v1319, %v1319
        %v1405 = vmul.f32 %v1320, %v1320
        %v1406 = vmul.f32 %v1321, %v1321
        %v1407 = vmul.f32 %v1322, %v1322
        %v1408 = vmul.f32 %v1323, %v1323
        %v1409 = vmul.f32 %v1324, %v1324
        %v1410 = vmul.f32 %v1325, %v1325
        %v1411 = vmul.f32 %v1326, %v1326
        %v1412 = vmul.f32 %v1327, %v1327
        %v1413 = vmul.f32 %v1328, %v1328
        %v1414 = vmul.f32 %v1329, %v1329
        %v1415 = vmul.f32 %v1330, %v1330
        %v1416 = vmul.f32 %v1331, %v1331
        %v1417 = vmul.f32 %v1332, %v1332
        %v1418 = vmul.f32 %v1333, %v1333
        %v1419 = vmul.f32 %v1334, %v1334
        %v1420 = vmul.f32 %v1335, %v1335
        %v1421 = vadd.f32 %v1383, %v1384
        %v1422 = vadd.f32 %v1421, %v1385
        %v1423 = vadd.f32 %v1422, %v1386
        %v1424 = vadd.f32 %v1423, %v1387
        %v1425 = vadd.f32 %v1424, %v1388
        %v1426 = vadd.f32 %v1425, %v1389
        %v1427 = vadd.f32 %v1426, %v1390
        %v1428 = vadd.f32 %v1427, %v1391
        %v1429 = vadd.f32 %v1428, %v1392
        %v1430 = vadd.f32 %v1429, %v1393
        %v1431 = vadd.f32 %v1430, %v1394
        %v1432 = vadd.f32 %v1431, %v1395
        %v1433 = vadd.f32 %v1432, %v1396
        %v1434 = vadd.f32 %v1433, %v1397
        %v1435 = vadd.f32 %v1434, %v1398
        %v1436 = vadd.f32 %v1435, %v1399
        %v1437 = vadd.f32 %v1436, %v1400
        %v1438 = vadd.f32 %v1437, %v1401
        %v1439 = vadd.f32 %v1438, %v1402
        %v1440 = vadd.f32 %v1439, %v1403
        %v1441 = vadd.f32 %v1440, %v1404
        %v1442 = vadd.f32 %v1441, %v1405
        %v1443 = vadd.f32 %v1442, %v1406
        %v1444 = vadd.f32 %v1443, %v1407
        %v1445 = vadd.f32 %v1444, %v1408
        %v1446 = vadd.f32 %v1445, %v1409
        %v1447 = vadd.f32 %v1446, %v1410
        %v1448 = vadd.f32 %v1447, %v1411
        %v1449 = vadd.f32 %v1448, %v1412
        %v1450 = vadd.f32 %v1449, %v1413
        %v1451 = vadd.f32 %v1450, %v1414
        %v1452 = vadd.f32 %v1451, %v1415
        %v1453 = vadd.f32 %v1452, %v1416
        %v1454 = vadd.f32 %v1453, %v1417
        %v1455 = vadd.f32 %v1454, %v1418
        %v1456 = vadd.f32 %v1455, %v1419
        %v1457 = vadd.f32 %v1456, %v1420
        %v1458 = vrot.slane %v1457, 4
        %v1459 = vadd.f32 %v1457, %v1458
        %v1460 = vrot.slane %v1459, 2
        %v1461 = vadd.f32 %v1459, %v1460
        %v1462 = vrot.slane %v1461, 1
        %v1463 = vadd.f32 %v1461, %v1462
        %v1464 = vadd.f32 %v1382, %v1463
        %1465 = vst [vmem:[%s295] sm:$0x1] %v1464
      $region48: #{apply_node_func.4} parent=35 // pred_fallthru
        _
      %s1466 = sadd.s32 %s22, %s23
      %s1467 = smul.u32 38, %s1466
      %p1468 = scmp.lt.s32.totalorder %s1467, 75
      %s1469 = scalar_select %p1468, %s1467, 75
      %s1470 = smul.addr %s1469, 4
      %s1471 = scalar_lea.vmem %s4, %s1470
      %p1472 = scmp.lt.s32.totalorder %s22, 1
      %s1473 = scalar_select %p1472, %s22, 1
      %s1474 = scalar_lea.vmem %s5, %s1473
      %p1475 = scmp.lt.s32.totalorder %s22, 1
      %s1476 = scalar_select %p1475, %s22, 1
      %s1477 = scalar_lea.vmem %s6, %s1476
      // Predicated region
      $region49: #{apply_node_func.4} parent=35 // pred_check
        %p1478 = pneg %p141
      $region50: #{apply_node_func.4} parent=35 // pred_check_branch
        %1480 = sbr.rel (%p1478) target = $region52
      $region51: #{apply_node_func.4} parent=35 // pred_region
        %s1481 = sadd.s32 %s22, %s23
        %s1482 = smul.u32 38, %s1481
      $region52: #{apply_node_func.4} parent=35 // pred_fallthru
        _
      // Predicated region
      $region53: #{apply_node_func.4} parent=35 // pred_check
        %p1483 = pneg %p167
      $region54: #{apply_node_func.4} parent=35 // pred_check_branch
        %1485 = sbr.rel (%p1483) target = $region56
      $region55: #{apply_node_func.4} parent=35 // pred_region
        _
      $region56: #{apply_node_func.4} parent=35 // pred_fallthru
        _
      // Predicated region
      $region57: #{apply_node_func.4} parent=35 // pred_check
        %p1486 = pneg %p193
      $region58: #{apply_node_func.4} parent=35 // pred_check_branch
        %1488 = sbr.rel (%p1486) target = $region60
      $region59: #{apply_node_func.4} parent=35 // pred_region
        _
      $region60: #{apply_node_func.4} parent=35 // pred_fallthru
        _
    $region36: #{apply_node_func.4} parent=5 // pred_fallthru
      _
    %p1489 = scmp.le.s32.totalorder 2, %s13
    // Predicated region
    $region61: #{apply_node_func.4} parent=5 // pred_check
      %p1490 = pneg %p1489
    $region62: #{apply_node_func.4} parent=5 // pred_check_branch
      %1492 = sbr.rel (%p1490) target = $region64
    $region63: #{apply_node_func.4} parent=5 // pred_region
      %s1493 = ssub.s32 %s13, 2
      // Predicated region
      $region65: #{apply_node_func.4} parent=63 // pred_check
        %p1494 = pneg %p147
      $region66: #{apply_node_func.4} parent=63 // pred_check_branch
        %1496 = sbr.rel (%p1494) target = $region68
      $region67: #{apply_node_func.4} parent=63 // pred_region
        %s1497 = sadd.s32 %s24, %s25
        %s1498 = smul.u32 38, %s1497
        %p1499 = scmp.lt.s32.totalorder %s1498, 75
        %s1500 = scalar_select %p1499, %s1498, 75
        %s1501 = smul.addr %s1500, 4
        %s1502 = scalar_lea.vmem %s4, %s1501
      $region68: #{apply_node_func.4} parent=63 // pred_fallthru
        _
      // Predicated region
      $region69: #{apply_node_func.4} parent=63 // pred_check
        %p1503 = pneg %p173
      $region70: #{apply_node_func.4} parent=63 // pred_check_branch
        %1505 = sbr.rel (%p1503) target = $region72
      $region71: #{apply_node_func.4} parent=63 // pred_region
        %p1506 = scmp.lt.s32.totalorder %s24, 1
        %s1507 = scalar_select %p1506, %s24, 1
        %s1508 = scalar_lea.vmem %s5, %s1507
      $region72: #{apply_node_func.4} parent=63 // pred_fallthru
        _
      // Predicated region
      $region73: #{apply_node_func.4} parent=63 // pred_check
        %p1509 = pneg %p199
      $region74: #{apply_node_func.4} parent=63 // pred_check_branch
        %1511 = sbr.rel (%p1509) target = $region76
      $region75: #{apply_node_func.4} parent=63 // pred_region
        %p1512 = scmp.lt.s32.totalorder %s24, 1
        %s1513 = scalar_select %p1512, %s24, 1
        %s1514 = scalar_lea.vmem %s6, %s1513
      $region76: #{apply_node_func.4} parent=63 // pred_fallthru
        _
    $region64: #{apply_node_func.4} parent=5 // pred_fallthru
      _
  $region6: #{apply_node_func.4} parent=0 // loop_footer
    %s17 = sadd.s32 1, %s13
  $region7: #{apply_node_func.4} parent=0 // loop_footer_branch
    %12 = sbr.rel target = $region3
  $region8: #{apply_node_func.4} parent=0 // loop_exit
    _

</llo_original>
